<compile_context>
chip_gen: v6e
topology: v6e:2x2x1
jax: 0.10.0
libtpu: 0.0.40
codegen_flags: <defaults>
</compile_context>

<pallas_src>
import jax
import jax.numpy as jnp
from jax.experimental import pallas as pl
from jax.experimental.pallas import tpu as pltpu


def _round_up(v, m):
    return ((v + m - 1) // m) * m


def _make_textcnn_kernel(n_chunks, t_chunk):
    def kernel(x_ref, wconv_ref, bconv_ref, tmask_ref,
               wfc1_ref, bfc1_ref, wfc2_ref, bfc2_ref, o_ref):
        _, TB, E = x_ref.shape                       # (Lx, TB, E) time-major bf16 tile
        k_max = wconv_ref.shape[0]
        NF = wconv_ref.shape[2]                      # n_conv * 128 packed feature lanes
        bias = bconv_ref[...]                        # (1, NF) f32

        # Running max over time.  ReLU outputs are >= 0 and every branch has at least one
        # valid window (t == 0), so 0 is an exact identity for the masked max-pool.
        pooled = jnp.zeros((TB, NF), jnp.float32)

        for c in range(n_chunks):                    # static, small unrolled loop
            t0 = c * t_chunk
            acc = jnp.zeros((t_chunk * TB, NF), jnp.float32)
            for j in range(k_max):                   # Conv1d == k_max shifted-slab matmuls
                slab = x_ref[t0 + j: t0 + j + t_chunk]          # (t_chunk, TB, E), leading-axis slice
                acc += jax.lax.dot_general(
                    slab.reshape(t_chunk * TB, E), wconv_ref[j],
                    (((1,), (0,)), ((), ())),
                    preferred_element_type=jnp.float32)          # MXU, f32 accumulation
            acc = jnp.maximum(acc + bias, 0.0)                   # bias + ReLU (VPU)
            acc = acc.reshape(t_chunk, TB, NF)
            # Zero out each branch's invalid tail windows (they would see zero-padded
            # context).  Exact ONLY because pooling is max over ReLU(>=0) outputs --
            # do not reuse this trick for average pooling or without the ReLU.
            acc = acc * tmask_ref[t0: t0 + t_chunk]              # (t_chunk, 1, NF) broadcast
            pooled = jnp.maximum(pooled, jnp.max(acc, axis=0))   # leading-axis reduce -> VPU only

        # TODO(synk): nn.Dropout has no inference-time effect; treated as identity.
        # fc layers kept in f32 (tiny matmuls) so only the conv stage sees bf16 rounding.
        h = jax.lax.dot_general(pooled, wfc1_ref[...], (((1,), (0,)), ((), ())),
                                preferred_element_type=jnp.float32) + bfc1_ref[...]
        h = jnp.maximum(h, 0.0)
        out = jax.lax.dot_general(h, wfc2_ref[...], (((1,), (0,)), ((), ())),
                                  preferred_element_type=jnp.float32) + bfc2_ref[...]
        o_ref[...] = out.astype(o_ref.dtype)

    return kernel


def textcnn_forward(text, text_lengths, params, *, sent_len, conv_sizes, batch_tile=256):
    """text: int32 (B, seq_len); text_lengths unused (matches the PyTorch forward)."""
    del text_lengths  # TODO(synk): lengths ignored, exactly like the reference forward.
    conv_sizes = tuple(conv_sizes)
    n_conv = len(conv_sizes)
    k_min, k_max = min(conv_sizes), max(conv_sizes)
    assert sent_len >= k_max, "sent_len must cover the widest conv kernel"

    emb = params["embedding"]                         # (V, E)
    E = emb.shape[1]
    F = params["bconv0"].shape[-1]
    H = params["wfc1"].shape[1]                       # 128 in the module
    C = params["wfc2"].shape[1]
    F_PAD = 128                                       # per-branch lane block (padded lanes are zero)
    C_PAD = 128                                       # lane-dense logits, sliced back to C
    NF = n_conv * F_PAD

    B, seq_len = text.shape
    assert seq_len <= sent_len

    # ---- time geometry: Lp output positions processed in chunks of TC; Lx input rows ----
    TC = 16
    L_need = sent_len - k_min + 1                     # longest valid output among branches
    n_chunks = -(-L_need // TC)
    Lp = n_chunks * TC
    Lx = Lp + k_max - 1                               # rows the shifted slabs may touch

    # ---- pack & lane-pad weights (branches concatenated along the lane axis) ----
    wconv = jnp.zeros((k_max, E, NF), jnp.float32)    # shift-major packed conv weights
    bconv = jnp.zeros((1, NF), jnp.float32)
    wfc1 = jnp.zeros((NF, H), jnp.float32)            # fc1 rows realigned to the packed lanes
    for i, k in enumerate(conv_sizes):
        wconv = wconv.at[:k, :, i * F_PAD:i * F_PAD + F].set(params[f"wconv{i}"])
        bconv = bconv.at[:, i * F_PAD:i * F_PAD + F].set(params[f"bconv{i}"].reshape(1, F))
        wfc1 = wfc1.at[i * F_PAD:i * F_PAD + F, :].set(params["wfc1"][i * F:(i + 1) * F, :])
    wconv = wconv.astype(jnp.bfloat16)                # big matmul weights in bf16 (f32 acc)
    bfc1 = params["bfc1"].reshape(1, H).astype(jnp.float32)
    wfc2 = jnp.pad(params["wfc2"], ((0, 0), (0, C_PAD - C))).astype(jnp.float32)
    bfc2 = jnp.pad(params["bfc2"].reshape(1, C), ((0, 0), (0, C_PAD - C))).astype(jnp.float32)

    # per-branch valid-window mask over time (1.0 valid / 0.0 invalid), resident in VMEM
    limits = jnp.concatenate(
        [jnp.full((F_PAD,), sent_len - k + 1, jnp.float32) for k in conv_sizes])
    tmask = (jnp.arange(Lp, dtype=jnp.float32)[:, None] < limits[None, :])
    tmask = tmask.astype(jnp.float32).reshape(Lp, 1, NF)

    # ---- generation-aware sizing: VMEM cap (v7x 64 MiB vs v5e/v6e 128 MiB) & batch tile ----
    try:
        vmem_cap = int(pltpu.get_tpu_info().vmem_capacity_bytes)
    except Exception:
        vmem_cap = 64 * 1024 * 1024
    vmem_limit = min(vmem_cap * 3 // 4, 100 * 1024 * 1024)   # ~48 MiB on v7x, ~96-100 MiB on v5e/v6e

    weight_bytes = (wconv.size * 2 + tmask.size * 4 + bconv.size * 4
                    + wfc1.size * 4 + bfc1.size * 4 + wfc2.size * 4 + bfc2.size * 4)

    def _blk_bytes(tb):
        return (2 * Lx * tb * E * 2           # bf16 x tile, double-buffered
                + TC * tb * NF * 4            # f32 chunk accumulator
                + tb * (NF + H + C_PAD) * 4   # pooled / h / logits
                + 2 * tb * C_PAD * 4)         # f32 out tile, double-buffered

    TB = min(batch_tile, _round_up(B, 16))
    if B >= 32:                               # keep nb >= 2 so dual-core parts split the batch
        TB = min(TB, _round_up(-(-B // 2), 16))
    TB = max(16, _round_up(TB, 16))
    while TB > 16 and weight_bytes + _blk_bytes(TB) > vmem_limit // 2:
        TB = max(16, _round_up(TB // 2, 16))

    B_pad = _round_up(B, TB)
    nb = B_pad // TB

    # ---- glue (plain JAX, bf16, time-major): embedding gather + zero pad ----
    x = jnp.take(emb.astype(jnp.bfloat16), text.T, axis=0)        # (seq, B, E) bf16
    x = jnp.pad(x, ((0, Lx - seq_len), (0, B_pad - B), (0, 0)))    # (Lx, B_pad, E), zeros == F.pad

    # ---- BlockSpecs: x blocked over batch, weights resident & single-buffered ----
    def _resident(arr):
        nd = arr.ndim
        idx = lambda b, _nd=nd: (0,) * _nd
        try:   # constant index map -> no need to double-buffer the weight slabs
            return pl.BlockSpec(arr.shape, idx, pipeline_mode=pl.Buffered(1))
        except (TypeError, AttributeError):
            return pl.BlockSpec(arr.shape, idx)

    weights = (wconv, bconv, tmask, wfc1, bfc1, wfc2, bfc2)
    in_specs = [pl.BlockSpec((Lx, TB, E), lambda b: (0, b, 0))]
    in_specs += [_resident(w) for w in weights]
    out_specs = pl.BlockSpec((TB, C_PAD), lambda b: (b, 0))

    # ---- cost estimate so XLA can schedule the gather/pad around the kernel ----
    flops = (2 * B_pad * Lp * E * NF * k_max
             + 2 * B_pad * NF * H + 2 * B_pad * H * C_PAD)
    bytes_accessed = (int(x.size) * 2
                      + sum(int(w.size) * int(w.dtype.itemsize) for w in weights)
                      + B_pad * C_PAD * 4)

    out = pl.pallas_call(
        _make_textcnn_kernel(n_chunks, TC),
        out_shape=jax.ShapeDtypeStruct((B_pad, C_PAD), jnp.float32),
        grid=(nb,),
        in_specs=in_specs,
        out_specs=out_specs,
        compiler_params=pltpu.CompilerParams(
            dimension_semantics=("parallel",),        # megacore split on v7x, no-op elsewhere
            vmem_limit_bytes=int(vmem_limit)),
        cost_estimate=pl.CostEstimate(
            flops=int(flops), transcendentals=0, bytes_accessed=int(bytes_accessed)),
    )(x, *weights)

    return out[:B, :C]


def textcnn_reference(text, params, *, sent_len, conv_sizes):
    """Pure-JAX f32 reference (mirrors the PyTorch forward in channels-last layout)."""
    x = jnp.take(params["embedding"], text, axis=0)
    x = jnp.pad(x, ((0, 0), (0, sent_len - x.shape[1]), (0, 0))).astype(jnp.float32)
    pooled = []
    for i, k in enumerate(conv_sizes):
        w = params[f"wconv{i}"]                       # (k, E, F)
        b = params[f"bconv{i}"]                       # (1, F)
        L = sent_len - k + 1
        acc = sum(jnp.einsum("ble,ef->blf", x[:, j:j + L, :], w[j]) for j in range(k))
        acc = jnp.maximum(acc + b, 0.0)
        pooled.append(jnp.max(acc, axis=1))
    feat = jnp.concatenate(pooled, axis=1)
    h = jnp.maximum(feat @ params["wfc1"] + params["bfc1"], 0.0)
    return h @ params["wfc2"] + params["bfc2"]


def init_params(key, *, vocab_size, emb_dim, feature_size, num_classes, conv_sizes):
    keys = jax.random.split(key, 3 + 2 * len(conv_sizes) + 4)
    it = iter(keys)
    params = {}
    params["embedding"] = 0.1 * jax.random.normal(next(it), (vocab_size, emb_dim), jnp.float32)
    for i, k in enumerate(conv_sizes):
        params[f"wconv{i}"] = 0.1 * jax.random.normal(next(it), (k, emb_dim, feature_size), jnp.float32)
        params[f"bconv{i}"] = 0.1 * jax.random.normal(next(it), (1, feature_size), jnp.float32)
    in_fc = len(conv_sizes) * feature_size
    params["wfc1"] = 0.1 * jax.random.normal(next(it), (in_fc, 128), jnp.float32)
    params["bfc1"] = 0.1 * jax.random.normal(next(it), (1, 128), jnp.float32)
    params["wfc2"] = 0.1 * jax.random.normal(next(it), (128, num_classes), jnp.float32)
    params["bfc2"] = 0.1 * jax.random.normal(next(it), (1, num_classes), jnp.float32)
    return params


if __name__ == "__main__":
    vocab_size = 50
    emb_dim = 16
    feature_size = 8
    num_classes = 4
    sent_len = 16
    conv_sizes = (3, 4, 5)
    batch = 2
    seq_len = 12   # < sent_len, exercises the F.pad path

    key = jax.random.PRNGKey(0)
    k_param, k_text, k_len = jax.random.split(key, 3)
    params = init_params(k_param, vocab_size=vocab_size, emb_dim=emb_dim,
                         feature_size=feature_size, num_classes=num_classes,
                         conv_sizes=conv_sizes)
    text = jax.random.randint(k_text, (batch, seq_len), 0, vocab_size, dtype=jnp.int32)
    text_lengths = jax.random.randint(k_len, (batch,), 1, seq_len + 1, dtype=jnp.int32)

    out = textcnn_forward(text, text_lengths, params,
                          sent_len=sent_len, conv_sizes=conv_sizes)
    out = jax.block_until_ready(out)

    ref = textcnn_reference(text, params, sent_len=sent_len, conv_sizes=conv_sizes)
    assert out.shape == (batch, num_classes)
    # Conv stage runs with bf16 inputs/weights (f32 accumulation); fc stays in f32.
    assert jnp.allclose(out, ref, atol=1e-2, rtol=1e-2), "mismatch vs JAX reference"

    print("KERNEL_OK")
</pallas_src>

<mosaic_0001>
module attributes {stable_mosaic.version = 11 : i64} {
  func.func @kernel(%arg0: i32, %arg1: memref<20x16x16xbf16, #tpu.memory_space<vmem>>, %arg2: memref<5x16x384xbf16, #tpu.memory_space<vmem>>, %arg3: memref<1x384xf32, #tpu.memory_space<vmem>>, %arg4: memref<16x1x384xf32, #tpu.memory_space<vmem>>, %arg5: memref<384x128xf32, #tpu.memory_space<vmem>>, %arg6: memref<1x128xf32, #tpu.memory_space<vmem>>, %arg7: memref<128x128xf32, #tpu.memory_space<vmem>>, %arg8: memref<1x128xf32, #tpu.memory_space<vmem>>, %arg9: memref<16x128xf32, #tpu.memory_space<vmem>>) attributes {dimension_semantics = [#tpu.dimension_semantics<parallel>], iteration_bounds = array<i64: 1>, scalar_prefetch = 0 : i64, scratch_operands = 0 : i64, tpu.core_type = #tpu.core_type<tc>, window_params = [{transform_indices = @transform_0, window_bounds = array<i64: 20, 16, 16>}, {pipeline_mode = #tpu.pipeline_mode<synchronous>, transform_indices = @transform_1, window_bounds = array<i64: 5, 16, 384>}, {pipeline_mode = #tpu.pipeline_mode<synchronous>, transform_indices = @transform_2, window_bounds = array<i64: 1, 384>}, {pipeline_mode = #tpu.pipeline_mode<synchronous>, transform_indices = @transform_3, window_bounds = array<i64: 16, 1, 384>}, {pipeline_mode = #tpu.pipeline_mode<synchronous>, transform_indices = @transform_4, window_bounds = array<i64: 384, 128>}, {pipeline_mode = #tpu.pipeline_mode<synchronous>, transform_indices = @transform_5, window_bounds = array<i64: 1, 128>}, {pipeline_mode = #tpu.pipeline_mode<synchronous>, transform_indices = @transform_6, window_bounds = array<i64: 128, 128>}, {pipeline_mode = #tpu.pipeline_mode<synchronous>, transform_indices = @transform_7, window_bounds = array<i64: 1, 128>}, {transform_indices = @transform_8, window_bounds = array<i64: 16, 128>}]} {
    %c0 = arith.constant 0 : index
    %c0_0 = arith.constant 0 : index
    %0 = vector.load %arg3[%c0, %c0_0] : memref<1x384xf32, #tpu.memory_space<vmem>>, vector<1x384xf32>
    %cst = arith.constant 0.000000e+00 : f32
    %1 = vector.broadcast %cst : f32 to vector<16x384xf32>
    %cst_1 = arith.constant 0.000000e+00 : f32
    %2 = vector.broadcast %cst_1 : f32 to vector<256x384xf32>
    %c0_2 = arith.constant 0 : index
    %c0_3 = arith.constant 0 : index
    %c0_4 = arith.constant 0 : index
    %3 = vector.load %arg1[%c0_2, %c0_3, %c0_4] : memref<20x16x16xbf16, #tpu.memory_space<vmem>>, vector<16x16x16xbf16>
    %4 = vector.shape_cast %3 : vector<16x16x16xbf16> to vector<256x16xbf16>
    %c0_5 = arith.constant 0 : index
    %c0_6 = arith.constant 0 : index
    %c0_7 = arith.constant 0 : index
    %5 = vector.load %arg2[%c0_5, %c0_6, %c0_7] : memref<5x16x384xbf16, #tpu.memory_space<vmem>>, vector<1x16x384xbf16>
    %6 = vector.shape_cast %5 : vector<1x16x384xbf16> to vector<16x384xbf16>
    %cst_8 = arith.constant dense<0.000000e+00> : vector<256x384xf32>
    %7 = tpu.matmul %4, %6, %cst_8 {dimension_numbers = #tpu.dot_dimension_numbers<[1], [0], [0], [1], [0, 0, 1, 1], [], []>} : vector<256x16xbf16>, vector<16x384xbf16>, vector<256x384xf32> -> vector<256x384xf32>
    %8 = arith.addf %2, %7 : vector<256x384xf32>
    %c1 = arith.constant 1 : index
    %c0_9 = arith.constant 0 : index
    %c0_10 = arith.constant 0 : index
    %9 = vector.load %arg1[%c1, %c0_9, %c0_10] : memref<20x16x16xbf16, #tpu.memory_space<vmem>>, vector<16x16x16xbf16>
    %10 = vector.shape_cast %9 : vector<16x16x16xbf16> to vector<256x16xbf16>
    %c1_11 = arith.constant 1 : index
    %c0_12 = arith.constant 0 : index
    %c0_13 = arith.constant 0 : index
    %11 = vector.load %arg2[%c1_11, %c0_12, %c0_13] : memref<5x16x384xbf16, #tpu.memory_space<vmem>>, vector<1x16x384xbf16>
    %12 = vector.shape_cast %11 : vector<1x16x384xbf16> to vector<16x384xbf16>
    %cst_14 = arith.constant dense<0.000000e+00> : vector<256x384xf32>
    %13 = tpu.matmul %10, %12, %cst_14 {dimension_numbers = #tpu.dot_dimension_numbers<[1], [0], [0], [1], [0, 0, 1, 1], [], []>} : vector<256x16xbf16>, vector<16x384xbf16>, vector<256x384xf32> -> vector<256x384xf32>
    %14 = arith.addf %8, %13 : vector<256x384xf32>
    %c2 = arith.constant 2 : index
    %c0_15 = arith.constant 0 : index
    %c0_16 = arith.constant 0 : index
    %15 = vector.load %arg1[%c2, %c0_15, %c0_16] : memref<20x16x16xbf16, #tpu.memory_space<vmem>>, vector<16x16x16xbf16>
    %16 = vector.shape_cast %15 : vector<16x16x16xbf16> to vector<256x16xbf16>
    %c2_17 = arith.constant 2 : index
    %c0_18 = arith.constant 0 : index
    %c0_19 = arith.constant 0 : index
    %17 = vector.load %arg2[%c2_17, %c0_18, %c0_19] : memref<5x16x384xbf16, #tpu.memory_space<vmem>>, vector<1x16x384xbf16>
    %18 = vector.shape_cast %17 : vector<1x16x384xbf16> to vector<16x384xbf16>
    %cst_20 = arith.constant dense<0.000000e+00> : vector<256x384xf32>
    %19 = tpu.matmul %16, %18, %cst_20 {dimension_numbers = #tpu.dot_dimension_numbers<[1], [0], [0], [1], [0, 0, 1, 1], [], []>} : vector<256x16xbf16>, vector<16x384xbf16>, vector<256x384xf32> -> vector<256x384xf32>
    %20 = arith.addf %14, %19 : vector<256x384xf32>
    %c3 = arith.constant 3 : index
    %c0_21 = arith.constant 0 : index
    %c0_22 = arith.constant 0 : index
    %21 = vector.load %arg1[%c3, %c0_21, %c0_22] : memref<20x16x16xbf16, #tpu.memory_space<vmem>>, vector<16x16x16xbf16>
    %22 = vector.shape_cast %21 : vector<16x16x16xbf16> to vector<256x16xbf16>
    %c3_23 = arith.constant 3 : index
    %c0_24 = arith.constant 0 : index
    %c0_25 = arith.constant 0 : index
    %23 = vector.load %arg2[%c3_23, %c0_24, %c0_25] : memref<5x16x384xbf16, #tpu.memory_space<vmem>>, vector<1x16x384xbf16>
    %24 = vector.shape_cast %23 : vector<1x16x384xbf16> to vector<16x384xbf16>
    %cst_26 = arith.constant dense<0.000000e+00> : vector<256x384xf32>
    %25 = tpu.matmul %22, %24, %cst_26 {dimension_numbers = #tpu.dot_dimension_numbers<[1], [0], [0], [1], [0, 0, 1, 1], [], []>} : vector<256x16xbf16>, vector<16x384xbf16>, vector<256x384xf32> -> vector<256x384xf32>
    %26 = arith.addf %20, %25 : vector<256x384xf32>
    %c4 = arith.constant 4 : index
    %c0_27 = arith.constant 0 : index
    %c0_28 = arith.constant 0 : index
    %27 = vector.load %arg1[%c4, %c0_27, %c0_28] : memref<20x16x16xbf16, #tpu.memory_space<vmem>>, vector<16x16x16xbf16>
    %28 = vector.shape_cast %27 : vector<16x16x16xbf16> to vector<256x16xbf16>
    %c4_29 = arith.constant 4 : index
    %c0_30 = arith.constant 0 : index
    %c0_31 = arith.constant 0 : index
    %29 = vector.load %arg2[%c4_29, %c0_30, %c0_31] : memref<5x16x384xbf16, #tpu.memory_space<vmem>>, vector<1x16x384xbf16>
    %30 = vector.shape_cast %29 : vector<1x16x384xbf16> to vector<16x384xbf16>
    %cst_32 = arith.constant dense<0.000000e+00> : vector<256x384xf32>
    %31 = tpu.matmul %28, %30, %cst_32 {dimension_numbers = #tpu.dot_dimension_numbers<[1], [0], [0], [1], [0, 0, 1, 1], [], []>} : vector<256x16xbf16>, vector<16x384xbf16>, vector<256x384xf32> -> vector<256x384xf32>
    %32 = arith.addf %26, %31 : vector<256x384xf32>
    %33 = vector.broadcast %0 : vector<1x384xf32> to vector<256x384xf32>
    %34 = arith.addf %32, %33 : vector<256x384xf32>
    %cst_33 = arith.constant 0.000000e+00 : f32
    %35 = vector.broadcast %cst_33 : f32 to vector<256x384xf32>
    %36 = arith.maximumf %34, %35 : vector<256x384xf32>
    %37 = vector.shape_cast %36 : vector<256x384xf32> to vector<16x16x384xf32>
    %c0_34 = arith.constant 0 : index
    %c0_35 = arith.constant 0 : index
    %c0_36 = arith.constant 0 : index
    %38 = vector.load %arg4[%c0_34, %c0_35, %c0_36] : memref<16x1x384xf32, #tpu.memory_space<vmem>>, vector<16x1x384xf32>
    %39 = vector.broadcast %38 : vector<16x1x384xf32> to vector<16x16x384xf32>
    %40 = arith.mulf %37, %39 : vector<16x16x384xf32>
    %cst_37 = arith.constant dense<0xFF800000> : vector<16x384xf32>
    %41 = vector.multi_reduction <maximumf>, %40, %cst_37 [0] : vector<16x16x384xf32> to vector<16x384xf32>
    %42 = arith.maximumf %1, %41 : vector<16x384xf32>
    %c0_38 = arith.constant 0 : index
    %c0_39 = arith.constant 0 : index
    %43 = vector.load %arg5[%c0_38, %c0_39] : memref<384x128xf32, #tpu.memory_space<vmem>>, vector<384x128xf32>
    %cst_40 = arith.constant dense<0.000000e+00> : vector<16x128xf32>
    %44 = tpu.matmul %42, %43, %cst_40 {dimension_numbers = #tpu.dot_dimension_numbers<[1], [0], [0], [1], [0, 0, 1, 1], [], []>} : vector<16x384xf32>, vector<384x128xf32>, vector<16x128xf32> -> vector<16x128xf32>
    %c0_41 = arith.constant 0 : index
    %c0_42 = arith.constant 0 : index
    %45 = vector.load %arg6[%c0_41, %c0_42] : memref<1x128xf32, #tpu.memory_space<vmem>>, vector<1x128xf32>
    %46 = vector.broadcast %45 : vector<1x128xf32> to vector<16x128xf32>
    %47 = arith.addf %44, %46 : vector<16x128xf32>
    %cst_43 = arith.constant 0.000000e+00 : f32
    %48 = vector.broadcast %cst_43 : f32 to vector<16x128xf32>
    %49 = arith.maximumf %47, %48 : vector<16x128xf32>
    %c0_44 = arith.constant 0 : index
    %c0_45 = arith.constant 0 : index
    %50 = vector.load %arg7[%c0_44, %c0_45] : memref<128x128xf32, #tpu.memory_space<vmem>>, vector<128x128xf32>
    %cst_46 = arith.constant dense<0.000000e+00> : vector<16x128xf32>
    %51 = tpu.matmul %49, %50, %cst_46 {dimension_numbers = #tpu.dot_dimension_numbers<[1], [0], [0], [1], [0, 0, 1, 1], [], []>} : vector<16x128xf32>, vector<128x128xf32>, vector<16x128xf32> -> vector<16x128xf32>
    %c0_47 = arith.constant 0 : index
    %c0_48 = arith.constant 0 : index
    %52 = vector.load %arg8[%c0_47, %c0_48] : memref<1x128xf32, #tpu.memory_space<vmem>>, vector<1x128xf32>
    %53 = vector.broadcast %52 : vector<1x128xf32> to vector<16x128xf32>
    %54 = arith.addf %51, %53 : vector<16x128xf32>
    %c0_49 = arith.constant 0 : index
    %c0_50 = arith.constant 0 : index
    %55 = vector.load %arg9[%c0_49, %c0_50] : memref<16x128xf32, #tpu.memory_space<vmem>>, vector<16x128xf32>
    tpu.vector_store %arg9[%c0_49, %c0_50], %54 {strides = array<i32>} : memref<16x128xf32, #tpu.memory_space<vmem>>, vector<16x128xf32>,
    return
  }
  func.func @transform_0(%arg0: i32) -> (i32, i32, i32) {
    %c0_i32 = arith.constant 0 : i32
    %c0_i32_0 = arith.constant 0 : i32
    %c0_i32_1 = arith.constant 0 : i32
    return %c0_i32, %arg0, %c0_i32_0 : i32, i32, i32
  }
  func.func @transform_1(%arg0: i32) -> (i32, i32, i32) {
    %c0_i32 = arith.constant 0 : i32
    %c0_i32_0 = arith.constant 0 : i32
    %c0_i32_1 = arith.constant 0 : i32
    %c0_i32_2 = arith.constant 0 : i32
    return %c0_i32, %c0_i32_0, %c0_i32_1 : i32, i32, i32
  }
  func.func @transform_2(%arg0: i32) -> (i32, i32) {
    %c0_i32 = arith.constant 0 : i32
    %c0_i32_0 = arith.constant 0 : i32
    %c0_i32_1 = arith.constant 0 : i32
    return %c0_i32, %c0_i32_0 : i32, i32
  }
  func.func @transform_3(%arg0: i32) -> (i32, i32, i32) {
    %c0_i32 = arith.constant 0 : i32
    %c0_i32_0 = arith.constant 0 : i32
    %c0_i32_1 = arith.constant 0 : i32
    %c0_i32_2 = arith.constant 0 : i32
    return %c0_i32, %c0_i32_0, %c0_i32_1 : i32, i32, i32
  }
  func.func @transform_4(%arg0: i32) -> (i32, i32) {
    %c0_i32 = arith.constant 0 : i32
    %c0_i32_0 = arith.constant 0 : i32
    %c0_i32_1 = arith.constant 0 : i32
    return %c0_i32, %c0_i32_0 : i32, i32
  }
  func.func @transform_5(%arg0: i32) -> (i32, i32) {
    %c0_i32 = arith.constant 0 : i32
    %c0_i32_0 = arith.constant 0 : i32
    %c0_i32_1 = arith.constant 0 : i32
    return %c0_i32, %c0_i32_0 : i32, i32
  }
  func.func @transform_6(%arg0: i32) -> (i32, i32) {
    %c0_i32 = arith.constant 0 : i32
    %c0_i32_0 = arith.constant 0 : i32
    %c0_i32_1 = arith.constant 0 : i32
    return %c0_i32, %c0_i32_0 : i32, i32
  }
  func.func @transform_7(%arg0: i32) -> (i32, i32) {
    %c0_i32 = arith.constant 0 : i32
    %c0_i32_0 = arith.constant 0 : i32
    %c0_i32_1 = arith.constant 0 : i32
    return %c0_i32, %c0_i32_0 : i32, i32
  }
  func.func @transform_8(%arg0: i32) -> (i32, i32) {
    %c0_i32 = arith.constant 0 : i32
    %c0_i32_0 = arith.constant 0 : i32
    return %arg0, %c0_i32 : i32, i32
  }
}

</mosaic_0001>

<llo_original>
// kernel: tpu_custom_call.1
$region0: #{tpu_custom_call.1}
  #allocation0 [shape = 'u32[]', space=smem, size = 0x4, offset = 0x4, fixed_abs, tag = 'smem constant byte address 0x4 - core index']
  #allocation1 [shape = 'u32[144,128]{1,0:T(1,128)}', space=vmem, size = 0x12000, scoped, tag = 'internal scratch']
  %s0 = inlined_call_operand.vmem [shape: bf16[20,16,16], index: 0, kind: input, shape index: {}]
  %s1 = inlined_call_operand.vmem [shape: bf16[5,16,384], index: 1, kind: input, shape index: {}]
  %s2 = inlined_call_operand.vmem [shape: f32[1,384], index: 2, kind: input, shape index: {}]
  %s3 = inlined_call_operand.hbm [shape: f32[16,1,384], index: 3, kind: input, shape index: {}]
  %s4 = inlined_call_operand.hbm [shape: f32[384,128], index: 4, kind: input, shape index: {}]
  %s5 = inlined_call_operand.vmem [shape: f32[1,128], index: 5, kind: input, shape index: {}]
  %s6 = inlined_call_operand.vmem [shape: f32[128,128], index: 6, kind: input, shape index: {}]
  %s7 = inlined_call_operand.vmem [shape: f32[1,128], index: 7, kind: input, shape index: {}]
  %s8 = inlined_call_operand.hbm [shape: f32[16,128], index: 8, kind: output, shape index: {}]
  %s9 = sld [smem:[#allocation0]]
  $region50: #{tpu_custom_call.1} parent=0
    _
  %s11 = ssub.s32 1, %s9
  %s12 = scalar_select 0, %s11, %s9
  $region1: #{tpu_custom_call.1} parent=0
    #allocation2 [shape = 'u8[24576]{0}', space=vmem, size = 0x6000, scoped, tag = 'input window, operand 3, single buffered']
    #allocation3 [shape = 's32[1]{0}', space=sflag, size = 0x4, scoped, tag = 'scoped memory for tpu_custom_call.1']
    #allocation4 [shape = 's32[1]{0}', space=sflag, size = 0x4, scoped, tag = 'scoped memory for tpu_custom_call.1']
    #allocation5 [shape = 'u8[196608]{0}', space=vmem, size = 0x30000, scoped, tag = 'input window, operand 4, single buffered']
    #allocation6 [shape = 's32[1]{0}', space=sflag, size = 0x4, scoped, tag = 'scoped memory for tpu_custom_call.1']
    #allocation7 [shape = 'u8[8192]{0}', space=vmem, size = 0x2000, scoped, tag = 'output window, operand 0, single buffered']
    %13 = vsyncpa [#allocation3], 0
    %14 = vsyncpa [#allocation6], 0
    %15 = vsyncpa [#allocation4], 0
    // Predicated region
    $region2: #{tpu_custom_call.1} parent=1 // pred_check
      _
    $region3: #{tpu_custom_call.1} parent=1 // pred_check_branch
      %17 = sbr.rel (0) target = $region5
    $region4: #{tpu_custom_call.1} parent=1 // pred_region
      _
    $region5: #{tpu_custom_call.1} parent=1 // pred_fallthru
      _
    // Predicated region
    $region6: #{tpu_custom_call.1} parent=1 // pred_check
      _
    $region7: #{tpu_custom_call.1} parent=1 // pred_check_branch
      %19 = sbr.rel (0) target = $region9
    $region8: #{tpu_custom_call.1} parent=1 // pred_region
      _
    $region9: #{tpu_custom_call.1} parent=1 // pred_fallthru
      _
    // Predicated region
    $region10: #{tpu_custom_call.1} parent=1 // pred_check
      _
    $region11: #{tpu_custom_call.1} parent=1 // pred_check_branch
      %21 = sbr.rel (0) target = $region13
    $region12: #{tpu_custom_call.1} parent=1 // pred_region
      _
    $region13: #{tpu_custom_call.1} parent=1 // pred_fallthru
      _
    // Predicated region
    $region14: #{tpu_custom_call.1} parent=1 // pred_check
      _
    $region15: #{tpu_custom_call.1} parent=1 // pred_check_branch
      %23 = sbr.rel (0) target = $region17
    $region16: #{tpu_custom_call.1} parent=1 // pred_region
      %s25 = ssub.s32 768, 768
      %26 = vsyncadd [#allocation3], %s25
      %s27 = sshll.u32 [#allocation2], 4
      %s28 = int_to_ptr.vmem [resolvable:$true] %s27
      %33 = dma.hbm_to_vmem [thread:$0]  %s3, 768, %s28, [#allocation3], 48, 48, 3
    $region17: #{tpu_custom_call.1} parent=1 // pred_fallthru
      _
    // Predicated region
    $region18: #{tpu_custom_call.1} parent=1 // pred_check
      _
    $region19: #{tpu_custom_call.1} parent=1 // pred_check_branch
      %35 = sbr.rel (0) target = $region21
    $region20: #{tpu_custom_call.1} parent=1 // pred_region
      %s37 = ssub.s32 6144, 6144
      %38 = vsyncadd [#allocation6], %s37
      %s39 = sshll.u32 [#allocation5], 4
      %s40 = int_to_ptr.vmem [resolvable:$true] %s39
      %45 = dma.hbm_to_vmem [thread:$0]  %s4, 6144, %s40, [#allocation6], 128, 128, 8
    $region21: #{tpu_custom_call.1} parent=1 // pred_fallthru
      _
    // Predicated region
    $region22: #{tpu_custom_call.1} parent=1 // pred_check
      _
    $region23: #{tpu_custom_call.1} parent=1 // pred_check_branch
      %47 = sbr.rel (0) target = $region25
    $region24: #{tpu_custom_call.1} parent=1 // pred_region
      _
    $region25: #{tpu_custom_call.1} parent=1 // pred_fallthru
      _
    // Predicated region
    $region26: #{tpu_custom_call.1} parent=1 // pred_check
      _
    $region27: #{tpu_custom_call.1} parent=1 // pred_check_branch
      %49 = sbr.rel (0) target = $region29
    $region28: #{tpu_custom_call.1} parent=1 // pred_region
      _
    $region29: #{tpu_custom_call.1} parent=1 // pred_fallthru
      _
    // Predicated region
    $region30: #{tpu_custom_call.1} parent=1 // pred_check
      _
    $region31: #{tpu_custom_call.1} parent=1 // pred_check_branch
      %51 = sbr.rel (0) target = $region33
    $region32: #{tpu_custom_call.1} parent=1 // pred_region
      _
    $region33: #{tpu_custom_call.1} parent=1 // pred_fallthru
      _
    // Predicated region
    $region34: #{tpu_custom_call.1} parent=1 // pred_check
      _
    $region35: #{tpu_custom_call.1} parent=1 // pred_check_branch
      %53 = sbr.rel (0) target = $region37
    $region36: #{tpu_custom_call.1} parent=1 // pred_region
      %54 = dma.done [#allocation3], 768
    $region37: #{tpu_custom_call.1} parent=1 // pred_fallthru
      _
    // Predicated region
    $region38: #{tpu_custom_call.1} parent=1 // pred_check
      _
    $region39: #{tpu_custom_call.1} parent=1 // pred_check_branch
      %56 = sbr.rel (0) target = $region41
    $region40: #{tpu_custom_call.1} parent=1 // pred_region
      %57 = dma.done [#allocation6], 6144
    $region41: #{tpu_custom_call.1} parent=1 // pred_fallthru
      _
    %v59 = vld [vmem:[%s2] sm:$0x7]
    %v60 = vld [vmem:[%s0] sm:$0xf]
    %v61 = vld [vmem:[%s0 + $0x4] sm:$0xf]
    %v62 = vld [vmem:[%s0 + $0x8] sm:$0xf]
    %v63 = vld [vmem:[%s0 + $0xc] sm:$0xf]
    %v64 = vld [vmem:[%s0 + $0x10] sm:$0xf]
    %v65 = vld [vmem:[%s0 + $0x14] sm:$0xf]
    %v66 = vld [vmem:[%s0 + $0x18] sm:$0xf]
    %v67 = vld [vmem:[%s0 + $0x1c] sm:$0xf]
    %v68 = vld [vmem:[%s0 + $0x20] sm:$0xf]
    %v69 = vld [vmem:[%s0 + $0x24] sm:$0xf]
    %v70 = vld [vmem:[%s0 + $0x28] sm:$0xf]
    %v71 = vld [vmem:[%s0 + $0x2c] sm:$0xf]
    %v72 = vld [vmem:[%s0 + $0x30] sm:$0xf]
    %v73 = vld [vmem:[%s0 + $0x34] sm:$0xf]
    %v74 = vld [vmem:[%s0 + $0x38] sm:$0xf]
    %v75 = vld [vmem:[%s0 + $0x3c] sm:$0xf]
    %v76 = vld [vmem:[%s0 + $0x40] sm:$0xf]
    %v77 = vld [vmem:[%s0 + $0x44] sm:$0xf]
    %v78 = vld [vmem:[%s0 + $0x48] sm:$0xf]
    %v79 = vld [vmem:[%s0 + $0x4c] sm:$0xf]
    %v80 = vld [vmem:[%s0 + $0x50] sm:$0xf]
    %v81 = vld [vmem:[%s0 + $0x54] sm:$0xf]
    %v82 = vld [vmem:[%s0 + $0x58] sm:$0xf]
    %v83 = vld [vmem:[%s0 + $0x5c] sm:$0xf]
    %v84 = vld [vmem:[%s0 + $0x60] sm:$0xf]
    %v85 = vld [vmem:[%s0 + $0x64] sm:$0xf]
    %v86 = vld [vmem:[%s0 + $0x68] sm:$0xf]
    %v87 = vld [vmem:[%s0 + $0x6c] sm:$0xf]
    %v88 = vld [vmem:[%s0 + $0x70] sm:$0xf]
    %v89 = vld [vmem:[%s0 + $0x74] sm:$0xf]
    %v90 = vld [vmem:[%s0 + $0x78] sm:$0xf]
    %v91 = vld [vmem:[%s0 + $0x7c] sm:$0xf]
    %v92 = vld [vmem:[%s1] sm:$0xff]
    %v93 = vld [vmem:[%s1 + $0x8] sm:$0xf]
    %v94 = vld [vmem:[%s1 + $0xc] sm:$0xff]
    %v95 = vld [vmem:[%s1 + $0x14] sm:$0xf]
    %s96 = scalar_lea.vmem %s0, 8
    %v97 = vld [vmem:[%s96] sm:$0xf]
    %v98 = vld [vmem:[%s96 + $0x4] sm:$0xf]
    %v99 = vld [vmem:[%s96 + $0x8] sm:$0xf]
    %v100 = vld [vmem:[%s96 + $0xc] sm:$0xf]
    %v101 = vld [vmem:[%s96 + $0x10] sm:$0xf]
    %v102 = vld [vmem:[%s96 + $0x14] sm:$0xf]
    %v103 = vld [vmem:[%s96 + $0x18] sm:$0xf]
    %v104 = vld [vmem:[%s96 + $0x1c] sm:$0xf]
    %v105 = vld [vmem:[%s96 + $0x20] sm:$0xf]
    %v106 = vld [vmem:[%s96 + $0x24] sm:$0xf]
    %v107 = vld [vmem:[%s96 + $0x28] sm:$0xf]
    %v108 = vld [vmem:[%s96 + $0x2c] sm:$0xf]
    %v109 = vld [vmem:[%s96 + $0x30] sm:$0xf]
    %v110 = vld [vmem:[%s96 + $0x34] sm:$0xf]
    %v111 = vld [vmem:[%s96 + $0x38] sm:$0xf]
    %v112 = vld [vmem:[%s96 + $0x3c] sm:$0xf]
    %v113 = vld [vmem:[%s96 + $0x40] sm:$0xf]
    %v114 = vld [vmem:[%s96 + $0x44] sm:$0xf]
    %v115 = vld [vmem:[%s96 + $0x48] sm:$0xf]
    %v116 = vld [vmem:[%s96 + $0x4c] sm:$0xf]
    %v117 = vld [vmem:[%s96 + $0x50] sm:$0xf]
    %v118 = vld [vmem:[%s96 + $0x54] sm:$0xf]
    %v119 = vld [vmem:[%s96 + $0x58] sm:$0xf]
    %v120 = vld [vmem:[%s96 + $0x5c] sm:$0xf]
    %v121 = vld [vmem:[%s96 + $0x60] sm:$0xf]
    %v122 = vld [vmem:[%s96 + $0x64] sm:$0xf]
    %v123 = vld [vmem:[%s96 + $0x68] sm:$0xf]
    %v124 = vld [vmem:[%s96 + $0x6c] sm:$0xf]
    %v125 = vld [vmem:[%s96 + $0x70] sm:$0xf]
    %v126 = vld [vmem:[%s96 + $0x74] sm:$0xf]
    %v127 = vld [vmem:[%s96 + $0x78] sm:$0xf]
    %v128 = vld [vmem:[%s96 + $0x7c] sm:$0xf]
    %s129 = scalar_lea.vmem %s1, 24
    %v130 = vld [vmem:[%s129] sm:$0xff]
    %v131 = vld [vmem:[%s129 + $0x8] sm:$0xf]
    %v132 = vld [vmem:[%s129 + $0xc] sm:$0xff]
    %v133 = vld [vmem:[%s129 + $0x14] sm:$0xf]
    %v166 = vunpack.c.l.b16 %v97
    %v167 = vunpack.c.l.b16 %v98
    %v168 = vunpack.c.l.b16 %v99
    %v169 = vunpack.c.l.b16 %v100
    %v170 = vunpack.c.l.b16 %v101
    %v171 = vunpack.c.l.b16 %v102
    %v172 = vunpack.c.l.b16 %v103
    %v173 = vunpack.c.l.b16 %v104
    %v174 = vunpack.c.l.b16 %v105
    %v175 = vunpack.c.l.b16 %v106
    %v176 = vunpack.c.l.b16 %v107
    %v177 = vunpack.c.l.b16 %v108
    %v178 = vunpack.c.l.b16 %v109
    %v179 = vunpack.c.l.b16 %v110
    %v180 = vunpack.c.l.b16 %v111
    %v181 = vunpack.c.l.b16 %v112
    %v182 = vunpack.c.l.b16 %v113
    %v183 = vunpack.c.l.b16 %v114
    %v184 = vunpack.c.l.b16 %v115
    %v185 = vunpack.c.l.b16 %v116
    %v186 = vunpack.c.l.b16 %v117
    %v187 = vunpack.c.l.b16 %v118
    %v188 = vunpack.c.l.b16 %v119
    %v189 = vunpack.c.l.b16 %v120
    %v190 = vunpack.c.l.b16 %v121
    %v191 = vunpack.c.l.b16 %v122
    %v192 = vunpack.c.l.b16 %v123
    %v193 = vunpack.c.l.b16 %v124
    %v194 = vunpack.c.l.b16 %v125
    %v195 = vunpack.c.l.b16 %v126
    %v196 = vunpack.c.l.b16 %v127
    %v197 = vunpack.c.l.b16 %v128
    %v198 = vpack.c.b16 %v167, %v166
    %v199 = vpack.c.b16 %v169, %v168
    %v200 = vpack.c.b16 %v171, %v170
    %v201 = vpack.c.b16 %v173, %v172
    %v202 = vpack.c.b16 %v175, %v174
    %v203 = vpack.c.b16 %v177, %v176
    %v204 = vpack.c.b16 %v179, %v178
    %v205 = vpack.c.b16 %v181, %v180
    %v206 = vpack.c.b16 %v183, %v182
    %v207 = vpack.c.b16 %v185, %v184
    %v208 = vpack.c.b16 %v187, %v186
    %v209 = vpack.c.b16 %v189, %v188
    %v210 = vpack.c.b16 %v191, %v190
    %v211 = vpack.c.b16 %v193, %v192
    %v212 = vpack.c.b16 %v195, %v194
    %v213 = vpack.c.b16 %v197, %v196
    %v218 = vunpack.c.l.b16 %v130
    %v219 = vunpack.c.h.b16 %v130
    %v220 = vunpack.c.l.b16 %v131
    %v221 = vunpack.c.l.b16 %v132
    %v222 = vunpack.c.h.b16 %v132
    %v223 = vunpack.c.l.b16 %v133
    %v224 = vpack.c.b16 %v221, %v218
    %v225 = vpack.c.b16 %v222, %v219
    %v226 = vpack.c.b16 %v223, %v220
    %vm230 = vcmask 130048
    %v232 = vsel %vm230, %v198, 0
    %v235 = vsel %vm230, %v199, 0
    %v238 = vsel %vm230, %v200, 0
    %v241 = vsel %vm230, %v201, 0
    %v244 = vsel %vm230, %v202, 0
    %v247 = vsel %vm230, %v203, 0
    %v250 = vsel %vm230, %v204, 0
    %v253 = vsel %vm230, %v205, 0
    %v256 = vsel %vm230, %v206, 0
    %v259 = vsel %vm230, %v207, 0
    %v262 = vsel %vm230, %v208, 0
    %v265 = vsel %vm230, %v209, 0
    %v268 = vsel %vm230, %v210, 0
    %v271 = vsel %vm230, %v211, 0
    %v274 = vsel %vm230, %v212, 0
    %v277 = vsel %vm230, %v213, 0
    %279 = vmatprep.subr.bf16.mxu0 0
    %280 = vmatpush1.bf16.msra.mxu0 0
    %281 = vmatprep.subr.bf16.mxu0 0
    %282 = vmatpush1.bf16.msra.mxu0 0
    %283 = vmatprep.subr.bf16.mxu0 0
    %284 = vmatpush1.bf16.msra.mxu0 0
    %285 = vmatprep.subr.bf16.mxu0 0
    %286 = vmatpush1.bf16.msra.mxu0 0
    %287 = vmatprep.subr.bf16.mxu0 0
    %288 = vmatpush1.bf16.msra.mxu0 0
    %289 = vmatprep.subr.bf16.mxu0 0
    %290 = vmatpush1.bf16.msra.mxu0 0
    %291 = vmatprep.subr.bf16.mxu0 0
    %292 = vmatpush1.bf16.msra.mxu0 0
    %293 = vmatprep.subr.bf16.mxu0 %v225
    %294 = vmatpush1.bf16.msra.mxu0 %v224
    %295 = vmatprep.subr.bf16.mxu0 0
    %296 = vmatpush2.bf16.msra.mxu0 0
    %297 = vmatprep.subr.bf16.mxu0 0
    %298 = vmatpush2.bf16.msra.mxu0 0
    %299 = vmatprep.subr.bf16.mxu0 0
    %300 = vmatpush2.bf16.msra.mxu0 0
    %301 = vmatprep.subr.bf16.mxu0 0
    %302 = vmatpush2.bf16.msra.mxu0 0
    %303 = vmatprep.subr.bf16.mxu0 0
    %304 = vmatpush2.bf16.msra.mxu0 0
    %305 = vmatprep.subr.bf16.mxu0 0
    %306 = vmatpush2.bf16.msra.mxu0 0
    %307 = vmatprep.subr.bf16.mxu0 0
    %308 = vmatpush2.bf16.msra.mxu0 0
    %309 = vmatprep.subr.bf16.mxu0 0
    %310 = vmatpush2.bf16.msra.mxu0 0
    %311 = vmatprep.mubr.bf16.mxu0 0
    %312 = vmatmul.mubr.bf16.gmra.mxu0 %v232
    %v313 = vpop.f32.mrf.mxu0
    %v314 = vadd.f32 0.0, %v313
    %v315 = vpop.f32.mrf.mxu0
    %v316 = vadd.f32 0.0, %v315
    %v317 = vpop.f32.mrf.mxu0
    %v318 = vadd.f32 0.0, %v317
    %v319 = vpop.f32.mrf.mxu0
    %v320 = vadd.f32 0.0, %v319
    %321 = vmatprep.mubr.bf16.mxu0 0
    %322 = vmatmul.mubr.bf16.gmra.mxu0 %v235
    %v323 = vpop.f32.mrf.mxu0
    %v324 = vadd.f32 0.0, %v323
    %v325 = vpop.f32.mrf.mxu0
    %v326 = vadd.f32 0.0, %v325
    %v327 = vpop.f32.mrf.mxu0
    %v328 = vadd.f32 0.0, %v327
    %v329 = vpop.f32.mrf.mxu0
    %v330 = vadd.f32 0.0, %v329
    %331 = vmatprep.mubr.bf16.mxu0 0
    %332 = vmatmul.mubr.bf16.gmra.mxu0 %v238
    %v333 = vpop.f32.mrf.mxu0
    %v334 = vadd.f32 0.0, %v333
    %v335 = vpop.f32.mrf.mxu0
    %v336 = vadd.f32 0.0, %v335
    %v337 = vpop.f32.mrf.mxu0
    %v338 = vadd.f32 0.0, %v337
    %v339 = vpop.f32.mrf.mxu0
    %v340 = vadd.f32 0.0, %v339
    %341 = vmatprep.mubr.bf16.mxu0 0
    %342 = vmatmul.mubr.bf16.gmra.mxu0 %v241
    %v343 = vpop.f32.mrf.mxu0
    %v344 = vadd.f32 0.0, %v343
    %v345 = vpop.f32.mrf.mxu0
    %v346 = vadd.f32 0.0, %v345
    %v347 = vpop.f32.mrf.mxu0
    %v348 = vadd.f32 0.0, %v347
    %v349 = vpop.f32.mrf.mxu0
    %v350 = vadd.f32 0.0, %v349
    %351 = vmatprep.mubr.bf16.mxu0 0
    %352 = vmatmul.mubr.bf16.gmra.mxu0 %v244
    %v353 = vpop.f32.mrf.mxu0
    %v354 = vadd.f32 0.0, %v353
    %v355 = vpop.f32.mrf.mxu0
    %v356 = vadd.f32 0.0, %v355
    %v357 = vpop.f32.mrf.mxu0
    %v358 = vadd.f32 0.0, %v357
    %v359 = vpop.f32.mrf.mxu0
    %v360 = vadd.f32 0.0, %v359
    %361 = vmatprep.mubr.bf16.mxu0 0
    %362 = vmatmul.mubr.bf16.gmra.mxu0 %v247
    %v363 = vpop.f32.mrf.mxu0
    %v364 = vadd.f32 0.0, %v363
    %v365 = vpop.f32.mrf.mxu0
    %v366 = vadd.f32 0.0, %v365
    %v367 = vpop.f32.mrf.mxu0
    %v368 = vadd.f32 0.0, %v367
    %v369 = vpop.f32.mrf.mxu0
    %v370 = vadd.f32 0.0, %v369
    %371 = vmatprep.mubr.bf16.mxu0 0
    %372 = vmatmul.mubr.bf16.gmra.mxu0 %v250
    %v373 = vpop.f32.mrf.mxu0
    %v374 = vadd.f32 0.0, %v373
    %v375 = vpop.f32.mrf.mxu0
    %v376 = vadd.f32 0.0, %v375
    %v377 = vpop.f32.mrf.mxu0
    %v378 = vadd.f32 0.0, %v377
    %v379 = vpop.f32.mrf.mxu0
    %v380 = vadd.f32 0.0, %v379
    %381 = vmatprep.mubr.bf16.mxu0 0
    %382 = vmatmul.mubr.bf16.gmra.mxu0 %v253
    %v383 = vpop.f32.mrf.mxu0
    %v384 = vadd.f32 0.0, %v383
    %v385 = vpop.f32.mrf.mxu0
    %v386 = vadd.f32 0.0, %v385
    %v387 = vpop.f32.mrf.mxu0
    %v388 = vadd.f32 0.0, %v387
    %v389 = vpop.f32.mrf.mxu0
    %v390 = vadd.f32 0.0, %v389
    %391 = vmatprep.mubr.bf16.mxu0 0
    %392 = vmatmul.mubr.bf16.gmra.mxu0 %v256
    %v393 = vpop.f32.mrf.mxu0
    %v394 = vadd.f32 0.0, %v393
    %v395 = vpop.f32.mrf.mxu0
    %v396 = vadd.f32 0.0, %v395
    %v397 = vpop.f32.mrf.mxu0
    %v398 = vadd.f32 0.0, %v397
    %v399 = vpop.f32.mrf.mxu0
    %v400 = vadd.f32 0.0, %v399
    %401 = vmatprep.mubr.bf16.mxu0 0
    %402 = vmatmul.mubr.bf16.gmra.mxu0 %v259
    %v403 = vpop.f32.mrf.mxu0
    %v404 = vadd.f32 0.0, %v403
    %v405 = vpop.f32.mrf.mxu0
    %v406 = vadd.f32 0.0, %v405
    %v407 = vpop.f32.mrf.mxu0
    %v408 = vadd.f32 0.0, %v407
    %v409 = vpop.f32.mrf.mxu0
    %v410 = vadd.f32 0.0, %v409
    %411 = vmatprep.mubr.bf16.mxu0 0
    %412 = vmatmul.mubr.bf16.gmra.mxu0 %v262
    %v413 = vpop.f32.mrf.mxu0
    %v414 = vadd.f32 0.0, %v413
    %v415 = vpop.f32.mrf.mxu0
    %v416 = vadd.f32 0.0, %v415
    %v417 = vpop.f32.mrf.mxu0
    %v418 = vadd.f32 0.0, %v417
    %v419 = vpop.f32.mrf.mxu0
    %v420 = vadd.f32 0.0, %v419
    %421 = vmatprep.mubr.bf16.mxu0 0
    %422 = vmatmul.mubr.bf16.gmra.mxu0 %v265
    %v423 = vpop.f32.mrf.mxu0
    %v424 = vadd.f32 0.0, %v423
    %v425 = vpop.f32.mrf.mxu0
    %v426 = vadd.f32 0.0, %v425
    %v427 = vpop.f32.mrf.mxu0
    %v428 = vadd.f32 0.0, %v427
    %v429 = vpop.f32.mrf.mxu0
    %v430 = vadd.f32 0.0, %v429
    %431 = vmatprep.mubr.bf16.mxu0 0
    %432 = vmatmul.mubr.bf16.gmra.mxu0 %v268
    %v433 = vpop.f32.mrf.mxu0
    %v434 = vadd.f32 0.0, %v433
    %v435 = vpop.f32.mrf.mxu0
    %v436 = vadd.f32 0.0, %v435
    %v437 = vpop.f32.mrf.mxu0
    %v438 = vadd.f32 0.0, %v437
    %v439 = vpop.f32.mrf.mxu0
    %v440 = vadd.f32 0.0, %v439
    %441 = vmatprep.mubr.bf16.mxu0 0
    %442 = vmatmul.mubr.bf16.gmra.mxu0 %v271
    %v443 = vpop.f32.mrf.mxu0
    %v444 = vadd.f32 0.0, %v443
    %v445 = vpop.f32.mrf.mxu0
    %v446 = vadd.f32 0.0, %v445
    %v447 = vpop.f32.mrf.mxu0
    %v448 = vadd.f32 0.0, %v447
    %v449 = vpop.f32.mrf.mxu0
    %v450 = vadd.f32 0.0, %v449
    %451 = vmatprep.mubr.bf16.mxu0 0
    %452 = vmatmul.mubr.bf16.gmra.mxu0 %v274
    %v453 = vpop.f32.mrf.mxu0
    %v454 = vadd.f32 0.0, %v453
    %v455 = vpop.f32.mrf.mxu0
    %v456 = vadd.f32 0.0, %v455
    %v457 = vpop.f32.mrf.mxu0
    %v458 = vadd.f32 0.0, %v457
    %v459 = vpop.f32.mrf.mxu0
    %v460 = vadd.f32 0.0, %v459
    %461 = vmatprep.mubr.bf16.mxu0 0
    %462 = vmatmul.mubr.bf16.gmra.mxu0 %v277
    %v463 = vpop.f32.mrf.mxu0
    %v464 = vadd.f32 0.0, %v463
    %v465 = vpop.f32.mrf.mxu0
    %v466 = vadd.f32 0.0, %v465
    %v467 = vpop.f32.mrf.mxu0
    %v468 = vadd.f32 0.0, %v467
    %v469 = vpop.f32.mrf.mxu0
    %v470 = vadd.f32 0.0, %v469
    %471 = vdwg.mxu0
    %472 = vmatprep.subr.bf16.mxu0 0
    %473 = vmatpush1.bf16.msra.mxu0 0
    %474 = vmatprep.subr.bf16.mxu0 0
    %475 = vmatpush1.bf16.msra.mxu0 0
    %476 = vmatprep.subr.bf16.mxu0 0
    %477 = vmatpush1.bf16.msra.mxu0 0
    %478 = vmatprep.subr.bf16.mxu0 0
    %479 = vmatpush1.bf16.msra.mxu0 0
    %480 = vmatprep.subr.bf16.mxu0 0
    %481 = vmatpush1.bf16.msra.mxu0 0
    %482 = vmatprep.subr.bf16.mxu0 0
    %483 = vmatpush1.bf16.msra.mxu0 0
    %484 = vmatprep.subr.bf16.mxu0 0
    %485 = vmatpush1.bf16.msra.mxu0 0
    %486 = vmatprep.subr.bf16.mxu0 0
    %487 = vmatpush1.bf16.msra.mxu0 %v226
    %488 = vmatprep.subr.bf16.mxu0 0
    %489 = vmatpush2.bf16.msra.mxu0 0
    %490 = vmatprep.subr.bf16.mxu0 0
    %491 = vmatpush2.bf16.msra.mxu0 0
    %492 = vmatprep.subr.bf16.mxu0 0
    %493 = vmatpush2.bf16.msra.mxu0 0
    %494 = vmatprep.subr.bf16.mxu0 0
    %495 = vmatpush2.bf16.msra.mxu0 0
    %496 = vmatprep.subr.bf16.mxu0 0
    %497 = vmatpush2.bf16.msra.mxu0 0
    %498 = vmatprep.subr.bf16.mxu0 0
    %499 = vmatpush2.bf16.msra.mxu0 0
    %500 = vmatprep.subr.bf16.mxu0 0
    %501 = vmatpush2.bf16.msra.mxu0 0
    %502 = vmatprep.subr.bf16.mxu0 0
    %503 = vmatpush2.bf16.msra.mxu0 0
    %504 = vmatprep.mubr.bf16.mxu0 0
    %505 = vmatmul.mubr.bf16.gmra.mxu0 %v232
    %v506 = vpop.f32.mrf.mxu0
    %v507 = vadd.f32 0.0, %v506
    %v508 = vpop.f32.mrf.mxu0
    %v509 = vpop.f32.mrf.mxu0
    %v510 = vadd.f32 0.0, %v509
    %v511 = vpop.f32.mrf.mxu0
    %512 = vmatprep.mubr.bf16.mxu0 0
    %513 = vmatmul.mubr.bf16.gmra.mxu0 %v235
    %v514 = vpop.f32.mrf.mxu0
    %v515 = vadd.f32 0.0, %v514
    %v516 = vpop.f32.mrf.mxu0
    %v517 = vpop.f32.mrf.mxu0
    %v518 = vadd.f32 0.0, %v517
    %v519 = vpop.f32.mrf.mxu0
    %520 = vmatprep.mubr.bf16.mxu0 0
    %521 = vmatmul.mubr.bf16.gmra.mxu0 %v238
    %v522 = vpop.f32.mrf.mxu0
    %v523 = vadd.f32 0.0, %v522
    %v524 = vpop.f32.mrf.mxu0
    %v525 = vpop.f32.mrf.mxu0
    %v526 = vadd.f32 0.0, %v525
    %v527 = vpop.f32.mrf.mxu0
    %528 = vmatprep.mubr.bf16.mxu0 0
    %529 = vmatmul.mubr.bf16.gmra.mxu0 %v241
    %v530 = vpop.f32.mrf.mxu0
    %v531 = vadd.f32 0.0, %v530
    %v532 = vpop.f32.mrf.mxu0
    %v533 = vpop.f32.mrf.mxu0
    %v534 = vadd.f32 0.0, %v533
    %v535 = vpop.f32.mrf.mxu0
    %536 = vmatprep.mubr.bf16.mxu0 0
    %537 = vmatmul.mubr.bf16.gmra.mxu0 %v244
    %v538 = vpop.f32.mrf.mxu0
    %v539 = vadd.f32 0.0, %v538
    %v540 = vpop.f32.mrf.mxu0
    %v541 = vpop.f32.mrf.mxu0
    %v542 = vadd.f32 0.0, %v541
    %v543 = vpop.f32.mrf.mxu0
    %544 = vmatprep.mubr.bf16.mxu0 0
    %545 = vmatmul.mubr.bf16.gmra.mxu0 %v247
    %v546 = vpop.f32.mrf.mxu0
    %v547 = vadd.f32 0.0, %v546
    %v548 = vpop.f32.mrf.mxu0
    %v549 = vpop.f32.mrf.mxu0
    %v550 = vadd.f32 0.0, %v549
    %v551 = vpop.f32.mrf.mxu0
    %552 = vmatprep.mubr.bf16.mxu0 0
    %553 = vmatmul.mubr.bf16.gmra.mxu0 %v250
    %v554 = vpop.f32.mrf.mxu0
    %v555 = vadd.f32 0.0, %v554
    %v556 = vpop.f32.mrf.mxu0
    %v557 = vpop.f32.mrf.mxu0
    %v558 = vadd.f32 0.0, %v557
    %v559 = vpop.f32.mrf.mxu0
    %560 = vmatprep.mubr.bf16.mxu0 0
    %561 = vmatmul.mubr.bf16.gmra.mxu0 %v253
    %v562 = vpop.f32.mrf.mxu0
    %v563 = vadd.f32 0.0, %v562
    %v564 = vpop.f32.mrf.mxu0
    %v565 = vpop.f32.mrf.mxu0
    %v566 = vadd.f32 0.0, %v565
    %v567 = vpop.f32.mrf.mxu0
    %568 = vmatprep.mubr.bf16.mxu0 0
    %569 = vmatmul.mubr.bf16.gmra.mxu0 %v256
    %v570 = vpop.f32.mrf.mxu0
    %v571 = vadd.f32 0.0, %v570
    %v572 = vpop.f32.mrf.mxu0
    %v573 = vpop.f32.mrf.mxu0
    %v574 = vadd.f32 0.0, %v573
    %v575 = vpop.f32.mrf.mxu0
    %576 = vmatprep.mubr.bf16.mxu0 0
    %577 = vmatmul.mubr.bf16.gmra.mxu0 %v259
    %v578 = vpop.f32.mrf.mxu0
    %v579 = vadd.f32 0.0, %v578
    %v580 = vpop.f32.mrf.mxu0
    %v581 = vpop.f32.mrf.mxu0
    %v582 = vadd.f32 0.0, %v581
    %v583 = vpop.f32.mrf.mxu0
    %584 = vmatprep.mubr.bf16.mxu0 0
    %585 = vmatmul.mubr.bf16.gmra.mxu0 %v262
    %v586 = vpop.f32.mrf.mxu0
    %v587 = vadd.f32 0.0, %v586
    %v588 = vpop.f32.mrf.mxu0
    %v589 = vpop.f32.mrf.mxu0
    %v590 = vadd.f32 0.0, %v589
    %v591 = vpop.f32.mrf.mxu0
    %592 = vmatprep.mubr.bf16.mxu0 0
    %593 = vmatmul.mubr.bf16.gmra.mxu0 %v265
    %v594 = vpop.f32.mrf.mxu0
    %v595 = vadd.f32 0.0, %v594
    %v596 = vpop.f32.mrf.mxu0
    %v597 = vpop.f32.mrf.mxu0
    %v598 = vadd.f32 0.0, %v597
    %v599 = vpop.f32.mrf.mxu0
    %600 = vmatprep.mubr.bf16.mxu0 0
    %601 = vmatmul.mubr.bf16.gmra.mxu0 %v268
    %v602 = vpop.f32.mrf.mxu0
    %v603 = vadd.f32 0.0, %v602
    %v604 = vpop.f32.mrf.mxu0
    %v605 = vpop.f32.mrf.mxu0
    %v606 = vadd.f32 0.0, %v605
    %v607 = vpop.f32.mrf.mxu0
    %608 = vmatprep.mubr.bf16.mxu0 0
    %609 = vmatmul.mubr.bf16.gmra.mxu0 %v271
    %v610 = vpop.f32.mrf.mxu0
    %v611 = vadd.f32 0.0, %v610
    %v612 = vpop.f32.mrf.mxu0
    %v613 = vpop.f32.mrf.mxu0
    %v614 = vadd.f32 0.0, %v613
    %v615 = vpop.f32.mrf.mxu0
    %616 = vmatprep.mubr.bf16.mxu0 0
    %617 = vmatmul.mubr.bf16.gmra.mxu0 %v274
    %v618 = vpop.f32.mrf.mxu0
    %v619 = vadd.f32 0.0, %v618
    %v620 = vpop.f32.mrf.mxu0
    %v621 = vpop.f32.mrf.mxu0
    %v622 = vadd.f32 0.0, %v621
    %v623 = vpop.f32.mrf.mxu0
    %624 = vmatprep.mubr.bf16.mxu0 0
    %625 = vmatmul.mubr.bf16.gmra.mxu0 %v277
    %v626 = vpop.f32.mrf.mxu0
    %v627 = vadd.f32 0.0, %v626
    %v628 = vpop.f32.mrf.mxu0
    %v629 = vpop.f32.mrf.mxu0
    %v630 = vadd.f32 0.0, %v629
    %v631 = vpop.f32.mrf.mxu0
    %632 = vdwg.mxu0
    %v665 = vunpack.c.l.b16 %v60
    %v666 = vunpack.c.l.b16 %v61
    %v667 = vunpack.c.l.b16 %v62
    %v668 = vunpack.c.l.b16 %v63
    %v669 = vunpack.c.l.b16 %v64
    %v670 = vunpack.c.l.b16 %v65
    %v671 = vunpack.c.l.b16 %v66
    %v672 = vunpack.c.l.b16 %v67
    %v673 = vunpack.c.l.b16 %v68
    %v674 = vunpack.c.l.b16 %v69
    %v675 = vunpack.c.l.b16 %v70
    %v676 = vunpack.c.l.b16 %v71
    %v677 = vunpack.c.l.b16 %v72
    %v678 = vunpack.c.l.b16 %v73
    %v679 = vunpack.c.l.b16 %v74
    %v680 = vunpack.c.l.b16 %v75
    %v681 = vunpack.c.l.b16 %v76
    %v682 = vunpack.c.l.b16 %v77
    %v683 = vunpack.c.l.b16 %v78
    %v684 = vunpack.c.l.b16 %v79
    %v685 = vunpack.c.l.b16 %v80
    %v686 = vunpack.c.l.b16 %v81
    %v687 = vunpack.c.l.b16 %v82
    %v688 = vunpack.c.l.b16 %v83
    %v689 = vunpack.c.l.b16 %v84
    %v690 = vunpack.c.l.b16 %v85
    %v691 = vunpack.c.l.b16 %v86
    %v692 = vunpack.c.l.b16 %v87
    %v693 = vunpack.c.l.b16 %v88
    %v694 = vunpack.c.l.b16 %v89
    %v695 = vunpack.c.l.b16 %v90
    %v696 = vunpack.c.l.b16 %v91
    %v697 = vpack.c.b16 %v666, %v665
    %v698 = vpack.c.b16 %v668, %v667
    %v699 = vpack.c.b16 %v670, %v669
    %v700 = vpack.c.b16 %v672, %v671
    %v701 = vpack.c.b16 %v674, %v673
    %v702 = vpack.c.b16 %v676, %v675
    %v703 = vpack.c.b16 %v678, %v677
    %v704 = vpack.c.b16 %v680, %v679
    %v705 = vpack.c.b16 %v682, %v681
    %v706 = vpack.c.b16 %v684, %v683
    %v707 = vpack.c.b16 %v686, %v685
    %v708 = vpack.c.b16 %v688, %v687
    %v709 = vpack.c.b16 %v690, %v689
    %v710 = vpack.c.b16 %v692, %v691
    %v711 = vpack.c.b16 %v694, %v693
    %v712 = vpack.c.b16 %v696, %v695
    %v717 = vunpack.c.l.b16 %v92
    %v718 = vunpack.c.h.b16 %v92
    %v719 = vunpack.c.l.b16 %v93
    %v720 = vunpack.c.l.b16 %v94
    %v721 = vunpack.c.h.b16 %v94
    %v722 = vunpack.c.l.b16 %v95
    %v723 = vpack.c.b16 %v720, %v717
    %v724 = vpack.c.b16 %v721, %v718
    %v725 = vpack.c.b16 %v722, %v719
    %v730 = vsel %vm230, %v697, 0
    %v733 = vsel %vm230, %v698, 0
    %v736 = vsel %vm230, %v699, 0
    %v739 = vsel %vm230, %v700, 0
    %v742 = vsel %vm230, %v701, 0
    %v745 = vsel %vm230, %v702, 0
    %v748 = vsel %vm230, %v703, 0
    %v751 = vsel %vm230, %v704, 0
    %v754 = vsel %vm230, %v705, 0
    %v757 = vsel %vm230, %v706, 0
    %v760 = vsel %vm230, %v707, 0
    %v763 = vsel %vm230, %v708, 0
    %v766 = vsel %vm230, %v709, 0
    %v769 = vsel %vm230, %v710, 0
    %v772 = vsel %vm230, %v711, 0
    %v775 = vsel %vm230, %v712, 0
    %777 = vmatprep.subr.bf16.mxu0 0
    %778 = vmatpush1.bf16.msra.mxu0 0
    %779 = vmatprep.subr.bf16.mxu0 0
    %780 = vmatpush1.bf16.msra.mxu0 0
    %781 = vmatprep.subr.bf16.mxu0 0
    %782 = vmatpush1.bf16.msra.mxu0 0
    %783 = vmatprep.subr.bf16.mxu0 0
    %784 = vmatpush1.bf16.msra.mxu0 0
    %785 = vmatprep.subr.bf16.mxu0 0
    %786 = vmatpush1.bf16.msra.mxu0 0
    %787 = vmatprep.subr.bf16.mxu0 0
    %788 = vmatpush1.bf16.msra.mxu0 0
    %789 = vmatprep.subr.bf16.mxu0 0
    %790 = vmatpush1.bf16.msra.mxu0 0
    %791 = vmatprep.subr.bf16.mxu0 %v724
    %792 = vmatpush1.bf16.msra.mxu0 %v723
    %793 = vmatprep.subr.bf16.mxu0 0
    %794 = vmatpush2.bf16.msra.mxu0 0
    %795 = vmatprep.subr.bf16.mxu0 0
    %796 = vmatpush2.bf16.msra.mxu0 0
    %797 = vmatprep.subr.bf16.mxu0 0
    %798 = vmatpush2.bf16.msra.mxu0 0
    %799 = vmatprep.subr.bf16.mxu0 0
    %800 = vmatpush2.bf16.msra.mxu0 0
    %801 = vmatprep.subr.bf16.mxu0 0
    %802 = vmatpush2.bf16.msra.mxu0 0
    %803 = vmatprep.subr.bf16.mxu0 0
    %804 = vmatpush2.bf16.msra.mxu0 0
    %805 = vmatprep.subr.bf16.mxu0 0
    %806 = vmatpush2.bf16.msra.mxu0 0
    %807 = vmatprep.subr.bf16.mxu0 0
    %808 = vmatpush2.bf16.msra.mxu0 0
    %809 = vmatprep.mubr.bf16.mxu0 0
    %810 = vmatmul.mubr.bf16.gmra.mxu0 %v730
    %v811 = vpop.f32.mrf.mxu0
    %v812 = vadd.f32 %v314, %v811
    %v813 = vpop.f32.mrf.mxu0
    %v814 = vadd.f32 %v316, %v813
    %v815 = vpop.f32.mrf.mxu0
    %v816 = vadd.f32 %v318, %v815
    %v817 = vpop.f32.mrf.mxu0
    %v818 = vadd.f32 %v320, %v817
    %819 = vmatprep.mubr.bf16.mxu0 0
    %820 = vmatmul.mubr.bf16.gmra.mxu0 %v733
    %v821 = vpop.f32.mrf.mxu0
    %v822 = vadd.f32 %v324, %v821
    %v823 = vpop.f32.mrf.mxu0
    %v824 = vadd.f32 %v326, %v823
    %v825 = vpop.f32.mrf.mxu0
    %v826 = vadd.f32 %v328, %v825
    %v827 = vpop.f32.mrf.mxu0
    %v828 = vadd.f32 %v330, %v827
    %829 = vmatprep.mubr.bf16.mxu0 0
    %830 = vmatmul.mubr.bf16.gmra.mxu0 %v736
    %v831 = vpop.f32.mrf.mxu0
    %v832 = vadd.f32 %v334, %v831
    %v833 = vpop.f32.mrf.mxu0
    %v834 = vadd.f32 %v336, %v833
    %v835 = vpop.f32.mrf.mxu0
    %v836 = vadd.f32 %v338, %v835
    %v837 = vpop.f32.mrf.mxu0
    %v838 = vadd.f32 %v340, %v837
    %839 = vmatprep.mubr.bf16.mxu0 0
    %840 = vmatmul.mubr.bf16.gmra.mxu0 %v739
    %v841 = vpop.f32.mrf.mxu0
    %v842 = vadd.f32 %v344, %v841
    %v843 = vpop.f32.mrf.mxu0
    %v844 = vadd.f32 %v346, %v843
    %v845 = vpop.f32.mrf.mxu0
    %v846 = vadd.f32 %v348, %v845
    %v847 = vpop.f32.mrf.mxu0
    %v848 = vadd.f32 %v350, %v847
    %849 = vmatprep.mubr.bf16.mxu0 0
    %850 = vmatmul.mubr.bf16.gmra.mxu0 %v742
    %v851 = vpop.f32.mrf.mxu0
    %v852 = vadd.f32 %v354, %v851
    %v853 = vpop.f32.mrf.mxu0
    %v854 = vadd.f32 %v356, %v853
    %v855 = vpop.f32.mrf.mxu0
    %v856 = vadd.f32 %v358, %v855
    %v857 = vpop.f32.mrf.mxu0
    %v858 = vadd.f32 %v360, %v857
    %859 = vmatprep.mubr.bf16.mxu0 0
    %860 = vmatmul.mubr.bf16.gmra.mxu0 %v745
    %v861 = vpop.f32.mrf.mxu0
    %v862 = vadd.f32 %v364, %v861
    %v863 = vpop.f32.mrf.mxu0
    %v864 = vadd.f32 %v366, %v863
    %v865 = vpop.f32.mrf.mxu0
    %v866 = vadd.f32 %v368, %v865
    %v867 = vpop.f32.mrf.mxu0
    %v868 = vadd.f32 %v370, %v867
    %869 = vmatprep.mubr.bf16.mxu0 0
    %870 = vmatmul.mubr.bf16.gmra.mxu0 %v748
    %v871 = vpop.f32.mrf.mxu0
    %v872 = vadd.f32 %v374, %v871
    %v873 = vpop.f32.mrf.mxu0
    %v874 = vadd.f32 %v376, %v873
    %v875 = vpop.f32.mrf.mxu0
    %v876 = vadd.f32 %v378, %v875
    %v877 = vpop.f32.mrf.mxu0
    %v878 = vadd.f32 %v380, %v877
    %879 = vmatprep.mubr.bf16.mxu0 0
    %880 = vmatmul.mubr.bf16.gmra.mxu0 %v751
    %v881 = vpop.f32.mrf.mxu0
    %v882 = vadd.f32 %v384, %v881
    %v883 = vpop.f32.mrf.mxu0
    %v884 = vadd.f32 %v386, %v883
    %v885 = vpop.f32.mrf.mxu0
    %v886 = vadd.f32 %v388, %v885
    %v887 = vpop.f32.mrf.mxu0
    %v888 = vadd.f32 %v390, %v887
    %889 = vmatprep.mubr.bf16.mxu0 0
    %890 = vmatmul.mubr.bf16.gmra.mxu0 %v754
    %v891 = vpop.f32.mrf.mxu0
    %v892 = vadd.f32 %v394, %v891
    %v893 = vpop.f32.mrf.mxu0
    %v894 = vadd.f32 %v396, %v893
    %v895 = vpop.f32.mrf.mxu0
    %v896 = vadd.f32 %v398, %v895
    %v897 = vpop.f32.mrf.mxu0
    %v898 = vadd.f32 %v400, %v897
    %899 = vmatprep.mubr.bf16.mxu0 0
    %900 = vmatmul.mubr.bf16.gmra.mxu0 %v757
    %v901 = vpop.f32.mrf.mxu0
    %v902 = vadd.f32 %v404, %v901
    %v903 = vpop.f32.mrf.mxu0
    %v904 = vadd.f32 %v406, %v903
    %v905 = vpop.f32.mrf.mxu0
    %v906 = vadd.f32 %v408, %v905
    %v907 = vpop.f32.mrf.mxu0
    %v908 = vadd.f32 %v410, %v907
    %909 = vmatprep.mubr.bf16.mxu0 0
    %910 = vmatmul.mubr.bf16.gmra.mxu0 %v760
    %v911 = vpop.f32.mrf.mxu0
    %v912 = vadd.f32 %v414, %v911
    %v913 = vpop.f32.mrf.mxu0
    %v914 = vadd.f32 %v416, %v913
    %v915 = vpop.f32.mrf.mxu0
    %v916 = vadd.f32 %v418, %v915
    %v917 = vpop.f32.mrf.mxu0
    %v918 = vadd.f32 %v420, %v917
    %919 = vmatprep.mubr.bf16.mxu0 0
    %920 = vmatmul.mubr.bf16.gmra.mxu0 %v763
    %v921 = vpop.f32.mrf.mxu0
    %v922 = vadd.f32 %v424, %v921
    %v923 = vpop.f32.mrf.mxu0
    %v924 = vadd.f32 %v426, %v923
    %v925 = vpop.f32.mrf.mxu0
    %v926 = vadd.f32 %v428, %v925
    %v927 = vpop.f32.mrf.mxu0
    %v928 = vadd.f32 %v430, %v927
    %929 = vmatprep.mubr.bf16.mxu0 0
    %930 = vmatmul.mubr.bf16.gmra.mxu0 %v766
    %v931 = vpop.f32.mrf.mxu0
    %v932 = vadd.f32 %v434, %v931
    %v933 = vpop.f32.mrf.mxu0
    %v934 = vadd.f32 %v436, %v933
    %v935 = vpop.f32.mrf.mxu0
    %v936 = vadd.f32 %v438, %v935
    %v937 = vpop.f32.mrf.mxu0
    %v938 = vadd.f32 %v440, %v937
    %939 = vmatprep.mubr.bf16.mxu0 0
    %940 = vmatmul.mubr.bf16.gmra.mxu0 %v769
    %v941 = vpop.f32.mrf.mxu0
    %v942 = vadd.f32 %v444, %v941
    %v943 = vpop.f32.mrf.mxu0
    %v944 = vadd.f32 %v446, %v943
    %v945 = vpop.f32.mrf.mxu0
    %v946 = vadd.f32 %v448, %v945
    %v947 = vpop.f32.mrf.mxu0
    %v948 = vadd.f32 %v450, %v947
    %949 = vmatprep.mubr.bf16.mxu0 0
    %950 = vmatmul.mubr.bf16.gmra.mxu0 %v772
    %v951 = vpop.f32.mrf.mxu0
    %v952 = vadd.f32 %v454, %v951
    %v953 = vpop.f32.mrf.mxu0
    %v954 = vadd.f32 %v456, %v953
    %v955 = vpop.f32.mrf.mxu0
    %v956 = vadd.f32 %v458, %v955
    %v957 = vpop.f32.mrf.mxu0
    %v958 = vadd.f32 %v460, %v957
    %959 = vmatprep.mubr.bf16.mxu0 0
    %960 = vmatmul.mubr.bf16.gmra.mxu0 %v775
    %v961 = vpop.f32.mrf.mxu0
    %v962 = vadd.f32 %v464, %v961
    %v963 = vpop.f32.mrf.mxu0
    %v964 = vadd.f32 %v466, %v963
    %v965 = vpop.f32.mrf.mxu0
    %v966 = vadd.f32 %v468, %v965
    %v967 = vpop.f32.mrf.mxu0
    %v968 = vadd.f32 %v470, %v967
    %969 = vdwg.mxu0
    %970 = vmatprep.subr.bf16.mxu0 0
    %971 = vmatpush1.bf16.msra.mxu0 0
    %972 = vmatprep.subr.bf16.mxu0 0
    %973 = vmatpush1.bf16.msra.mxu0 0
    %974 = vmatprep.subr.bf16.mxu0 0
    %975 = vmatpush1.bf16.msra.mxu0 0
    %976 = vmatprep.subr.bf16.mxu0 0
    %977 = vmatpush1.bf16.msra.mxu0 0
    %978 = vmatprep.subr.bf16.mxu0 0
    %979 = vmatpush1.bf16.msra.mxu0 0
    %980 = vmatprep.subr.bf16.mxu0 0
    %981 = vmatpush1.bf16.msra.mxu0 0
    %982 = vmatprep.subr.bf16.mxu0 0
    %983 = vmatpush1.bf16.msra.mxu0 0
    %984 = vmatprep.subr.bf16.mxu0 0
    %985 = vmatpush1.bf16.msra.mxu0 %v725
    %986 = vmatprep.subr.bf16.mxu0 0
    %987 = vmatpush2.bf16.msra.mxu0 0
    %988 = vmatprep.subr.bf16.mxu0 0
    %989 = vmatpush2.bf16.msra.mxu0 0
    %990 = vmatprep.subr.bf16.mxu0 0
    %991 = vmatpush2.bf16.msra.mxu0 0
    %992 = vmatprep.subr.bf16.mxu0 0
    %993 = vmatpush2.bf16.msra.mxu0 0
    %994 = vmatprep.subr.bf16.mxu0 0
    %995 = vmatpush2.bf16.msra.mxu0 0
    %996 = vmatprep.subr.bf16.mxu0 0
    %997 = vmatpush2.bf16.msra.mxu0 0
    %998 = vmatprep.subr.bf16.mxu0 0
    %999 = vmatpush2.bf16.msra.mxu0 0
    %1000 = vmatprep.subr.bf16.mxu0 0
    %1001 = vmatpush2.bf16.msra.mxu0 0
    %1002 = vmatprep.mubr.bf16.mxu0 0
    %1003 = vmatmul.mubr.bf16.gmra.mxu0 %v730
    %v1004 = vpop.f32.mrf.mxu0
    %v1005 = vadd.f32 %v507, %v1004
    %v1006 = vpop.f32.mrf.mxu0
    %v1007 = vpop.f32.mrf.mxu0
    %v1008 = vadd.f32 %v510, %v1007
    %v1009 = vpop.f32.mrf.mxu0
    %1010 = vmatprep.mubr.bf16.mxu0 0
    %1011 = vmatmul.mubr.bf16.gmra.mxu0 %v733
    %v1012 = vpop.f32.mrf.mxu0
    %v1013 = vadd.f32 %v515, %v1012
    %v1014 = vpop.f32.mrf.mxu0
    %v1015 = vpop.f32.mrf.mxu0
    %v1016 = vadd.f32 %v518, %v1015
    %v1017 = vpop.f32.mrf.mxu0
    %1018 = vmatprep.mubr.bf16.mxu0 0
    %1019 = vmatmul.mubr.bf16.gmra.mxu0 %v736
    %v1020 = vpop.f32.mrf.mxu0
    %v1021 = vadd.f32 %v523, %v1020
    %v1022 = vpop.f32.mrf.mxu0
    %v1023 = vpop.f32.mrf.mxu0
    %v1024 = vadd.f32 %v526, %v1023
    %v1025 = vpop.f32.mrf.mxu0
    %1026 = vmatprep.mubr.bf16.mxu0 0
    %1027 = vmatmul.mubr.bf16.gmra.mxu0 %v739
    %v1028 = vpop.f32.mrf.mxu0
    %v1029 = vadd.f32 %v531, %v1028
    %v1030 = vpop.f32.mrf.mxu0
    %v1031 = vpop.f32.mrf.mxu0
    %v1032 = vadd.f32 %v534, %v1031
    %v1033 = vpop.f32.mrf.mxu0
    %1034 = vmatprep.mubr.bf16.mxu0 0
    %1035 = vmatmul.mubr.bf16.gmra.mxu0 %v742
    %v1036 = vpop.f32.mrf.mxu0
    %v1037 = vadd.f32 %v539, %v1036
    %v1038 = vpop.f32.mrf.mxu0
    %v1039 = vpop.f32.mrf.mxu0
    %v1040 = vadd.f32 %v542, %v1039
    %v1041 = vpop.f32.mrf.mxu0
    %1042 = vmatprep.mubr.bf16.mxu0 0
    %1043 = vmatmul.mubr.bf16.gmra.mxu0 %v745
    %v1044 = vpop.f32.mrf.mxu0
    %v1045 = vadd.f32 %v547, %v1044
    %v1046 = vpop.f32.mrf.mxu0
    %v1047 = vpop.f32.mrf.mxu0
    %v1048 = vadd.f32 %v550, %v1047
    %v1049 = vpop.f32.mrf.mxu0
    %1050 = vmatprep.mubr.bf16.mxu0 0
    %1051 = vmatmul.mubr.bf16.gmra.mxu0 %v748
    %v1052 = vpop.f32.mrf.mxu0
    %v1053 = vadd.f32 %v555, %v1052
    %v1054 = vpop.f32.mrf.mxu0
    %v1055 = vpop.f32.mrf.mxu0
    %v1056 = vadd.f32 %v558, %v1055
    %v1057 = vpop.f32.mrf.mxu0
    %1058 = vmatprep.mubr.bf16.mxu0 0
    %1059 = vmatmul.mubr.bf16.gmra.mxu0 %v751
    %v1060 = vpop.f32.mrf.mxu0
    %v1061 = vadd.f32 %v563, %v1060
    %v1062 = vpop.f32.mrf.mxu0
    %v1063 = vpop.f32.mrf.mxu0
    %v1064 = vadd.f32 %v566, %v1063
    %v1065 = vpop.f32.mrf.mxu0
    %1066 = vmatprep.mubr.bf16.mxu0 0
    %1067 = vmatmul.mubr.bf16.gmra.mxu0 %v754
    %v1068 = vpop.f32.mrf.mxu0
    %v1069 = vadd.f32 %v571, %v1068
    %v1070 = vpop.f32.mrf.mxu0
    %v1071 = vpop.f32.mrf.mxu0
    %v1072 = vadd.f32 %v574, %v1071
    %v1073 = vpop.f32.mrf.mxu0
    %1074 = vmatprep.mubr.bf16.mxu0 0
    %1075 = vmatmul.mubr.bf16.gmra.mxu0 %v757
    %v1076 = vpop.f32.mrf.mxu0
    %v1077 = vadd.f32 %v579, %v1076
    %v1078 = vpop.f32.mrf.mxu0
    %v1079 = vpop.f32.mrf.mxu0
    %v1080 = vadd.f32 %v582, %v1079
    %v1081 = vpop.f32.mrf.mxu0
    %1082 = vmatprep.mubr.bf16.mxu0 0
    %1083 = vmatmul.mubr.bf16.gmra.mxu0 %v760
    %v1084 = vpop.f32.mrf.mxu0
    %v1085 = vadd.f32 %v587, %v1084
    %v1086 = vpop.f32.mrf.mxu0
    %v1087 = vpop.f32.mrf.mxu0
    %v1088 = vadd.f32 %v590, %v1087
    %v1089 = vpop.f32.mrf.mxu0
    %1090 = vmatprep.mubr.bf16.mxu0 0
    %1091 = vmatmul.mubr.bf16.gmra.mxu0 %v763
    %v1092 = vpop.f32.mrf.mxu0
    %v1093 = vadd.f32 %v595, %v1092
    %v1094 = vpop.f32.mrf.mxu0
    %v1095 = vpop.f32.mrf.mxu0
    %v1096 = vadd.f32 %v598, %v1095
    %v1097 = vpop.f32.mrf.mxu0
    %1098 = vmatprep.mubr.bf16.mxu0 0
    %1099 = vmatmul.mubr.bf16.gmra.mxu0 %v766
    %v1100 = vpop.f32.mrf.mxu0
    %v1101 = vadd.f32 %v603, %v1100
    %v1102 = vpop.f32.mrf.mxu0
    %v1103 = vpop.f32.mrf.mxu0
    %v1104 = vadd.f32 %v606, %v1103
    %v1105 = vpop.f32.mrf.mxu0
    %1106 = vmatprep.mubr.bf16.mxu0 0
    %1107 = vmatmul.mubr.bf16.gmra.mxu0 %v769
    %v1108 = vpop.f32.mrf.mxu0
    %v1109 = vadd.f32 %v611, %v1108
    %v1110 = vpop.f32.mrf.mxu0
    %v1111 = vpop.f32.mrf.mxu0
    %v1112 = vadd.f32 %v614, %v1111
    %v1113 = vpop.f32.mrf.mxu0
    %1114 = vmatprep.mubr.bf16.mxu0 0
    %1115 = vmatmul.mubr.bf16.gmra.mxu0 %v772
    %v1116 = vpop.f32.mrf.mxu0
    %v1117 = vadd.f32 %v619, %v1116
    %v1118 = vpop.f32.mrf.mxu0
    %v1119 = vpop.f32.mrf.mxu0
    %v1120 = vadd.f32 %v622, %v1119
    %v1121 = vpop.f32.mrf.mxu0
    %1122 = vmatprep.mubr.bf16.mxu0 0
    %1123 = vmatmul.mubr.bf16.gmra.mxu0 %v775
    %v1124 = vpop.f32.mrf.mxu0
    %v1125 = vadd.f32 %v627, %v1124
    %v1126 = vpop.f32.mrf.mxu0
    %v1127 = vpop.f32.mrf.mxu0
    %v1128 = vadd.f32 %v630, %v1127
    %v1129 = vpop.f32.mrf.mxu0
    %1130 = vdwg.mxu0
    %s1131 = scalar_lea.vmem %s0, 16
    %v1132 = vld [vmem:[%s1131] sm:$0xf]
    %v1133 = vld [vmem:[%s1131 + $0x4] sm:$0xf]
    %v1134 = vld [vmem:[%s1131 + $0x8] sm:$0xf]
    %v1135 = vld [vmem:[%s1131 + $0xc] sm:$0xf]
    %v1136 = vld [vmem:[%s1131 + $0x10] sm:$0xf]
    %v1137 = vld [vmem:[%s1131 + $0x14] sm:$0xf]
    %v1138 = vld [vmem:[%s1131 + $0x18] sm:$0xf]
    %v1139 = vld [vmem:[%s1131 + $0x1c] sm:$0xf]
    %v1140 = vld [vmem:[%s1131 + $0x20] sm:$0xf]
    %v1141 = vld [vmem:[%s1131 + $0x24] sm:$0xf]
    %v1142 = vld [vmem:[%s1131 + $0x28] sm:$0xf]
    %v1143 = vld [vmem:[%s1131 + $0x2c] sm:$0xf]
    %v1144 = vld [vmem:[%s1131 + $0x30] sm:$0xf]
    %v1145 = vld [vmem:[%s1131 + $0x34] sm:$0xf]
    %v1146 = vld [vmem:[%s1131 + $0x38] sm:$0xf]
    %v1147 = vld [vmem:[%s1131 + $0x3c] sm:$0xf]
    %v1148 = vld [vmem:[%s1131 + $0x40] sm:$0xf]
    %v1149 = vld [vmem:[%s1131 + $0x44] sm:$0xf]
    %v1150 = vld [vmem:[%s1131 + $0x48] sm:$0xf]
    %v1151 = vld [vmem:[%s1131 + $0x4c] sm:$0xf]
    %v1152 = vld [vmem:[%s1131 + $0x50] sm:$0xf]
    %v1153 = vld [vmem:[%s1131 + $0x54] sm:$0xf]
    %v1154 = vld [vmem:[%s1131 + $0x58] sm:$0xf]
    %v1155 = vld [vmem:[%s1131 + $0x5c] sm:$0xf]
    %v1156 = vld [vmem:[%s1131 + $0x60] sm:$0xf]
    %v1157 = vld [vmem:[%s1131 + $0x64] sm:$0xf]
    %v1158 = vld [vmem:[%s1131 + $0x68] sm:$0xf]
    %v1159 = vld [vmem:[%s1131 + $0x6c] sm:$0xf]
    %v1160 = vld [vmem:[%s1131 + $0x70] sm:$0xf]
    %v1161 = vld [vmem:[%s1131 + $0x74] sm:$0xf]
    %v1162 = vld [vmem:[%s1131 + $0x78] sm:$0xf]
    %v1163 = vld [vmem:[%s1131 + $0x7c] sm:$0xf]
    %s1164 = scalar_lea.vmem %s1, 48
    %v1165 = vld [vmem:[%s1164] sm:$0xff]
    %v1166 = vld [vmem:[%s1164 + $0x8] sm:$0xf]
    %v1167 = vld [vmem:[%s1164 + $0xc] sm:$0xff]
    %v1168 = vld [vmem:[%s1164 + $0x14] sm:$0xf]
    %v1201 = vunpack.c.l.b16 %v1132
    %v1202 = vunpack.c.l.b16 %v1133
    %v1203 = vunpack.c.l.b16 %v1134
    %v1204 = vunpack.c.l.b16 %v1135
    %v1205 = vunpack.c.l.b16 %v1136
    %v1206 = vunpack.c.l.b16 %v1137
    %v1207 = vunpack.c.l.b16 %v1138
    %v1208 = vunpack.c.l.b16 %v1139
    %v1209 = vunpack.c.l.b16 %v1140
    %v1210 = vunpack.c.l.b16 %v1141
    %v1211 = vunpack.c.l.b16 %v1142
    %v1212 = vunpack.c.l.b16 %v1143
    %v1213 = vunpack.c.l.b16 %v1144
    %v1214 = vunpack.c.l.b16 %v1145
    %v1215 = vunpack.c.l.b16 %v1146
    %v1216 = vunpack.c.l.b16 %v1147
    %v1217 = vunpack.c.l.b16 %v1148
    %v1218 = vunpack.c.l.b16 %v1149
    %v1219 = vunpack.c.l.b16 %v1150
    %v1220 = vunpack.c.l.b16 %v1151
    %v1221 = vunpack.c.l.b16 %v1152
    %v1222 = vunpack.c.l.b16 %v1153
    %v1223 = vunpack.c.l.b16 %v1154
    %v1224 = vunpack.c.l.b16 %v1155
    %v1225 = vunpack.c.l.b16 %v1156
    %v1226 = vunpack.c.l.b16 %v1157
    %v1227 = vunpack.c.l.b16 %v1158
    %v1228 = vunpack.c.l.b16 %v1159
    %v1229 = vunpack.c.l.b16 %v1160
    %v1230 = vunpack.c.l.b16 %v1161
    %v1231 = vunpack.c.l.b16 %v1162
    %v1232 = vunpack.c.l.b16 %v1163
    %v1233 = vpack.c.b16 %v1202, %v1201
    %v1234 = vpack.c.b16 %v1204, %v1203
    %v1235 = vpack.c.b16 %v1206, %v1205
    %v1236 = vpack.c.b16 %v1208, %v1207
    %v1237 = vpack.c.b16 %v1210, %v1209
    %v1238 = vpack.c.b16 %v1212, %v1211
    %v1239 = vpack.c.b16 %v1214, %v1213
    %v1240 = vpack.c.b16 %v1216, %v1215
    %v1241 = vpack.c.b16 %v1218, %v1217
    %v1242 = vpack.c.b16 %v1220, %v1219
    %v1243 = vpack.c.b16 %v1222, %v1221
    %v1244 = vpack.c.b16 %v1224, %v1223
    %v1245 = vpack.c.b16 %v1226, %v1225
    %v1246 = vpack.c.b16 %v1228, %v1227
    %v1247 = vpack.c.b16 %v1230, %v1229
    %v1248 = vpack.c.b16 %v1232, %v1231
    %v1253 = vunpack.c.l.b16 %v1165
    %v1254 = vunpack.c.h.b16 %v1165
    %v1255 = vunpack.c.l.b16 %v1166
    %v1256 = vunpack.c.l.b16 %v1167
    %v1257 = vunpack.c.h.b16 %v1167
    %v1258 = vunpack.c.l.b16 %v1168
    %v1259 = vpack.c.b16 %v1256, %v1253
    %v1260 = vpack.c.b16 %v1257, %v1254
    %v1261 = vpack.c.b16 %v1258, %v1255
    %v1266 = vsel %vm230, %v1233, 0
    %v1269 = vsel %vm230, %v1234, 0
    %v1272 = vsel %vm230, %v1235, 0
    %v1275 = vsel %vm230, %v1236, 0
    %v1278 = vsel %vm230, %v1237, 0
    %v1281 = vsel %vm230, %v1238, 0
    %v1284 = vsel %vm230, %v1239, 0
    %v1287 = vsel %vm230, %v1240, 0
    %v1290 = vsel %vm230, %v1241, 0
    %v1293 = vsel %vm230, %v1242, 0
    %v1296 = vsel %vm230, %v1243, 0
    %v1299 = vsel %vm230, %v1244, 0
    %v1302 = vsel %vm230, %v1245, 0
    %v1305 = vsel %vm230, %v1246, 0
    %v1308 = vsel %vm230, %v1247, 0
    %v1311 = vsel %vm230, %v1248, 0
    %1313 = vmatprep.subr.bf16.mxu0 0
    %1314 = vmatpush1.bf16.msra.mxu0 0
    %1315 = vmatprep.subr.bf16.mxu0 0
    %1316 = vmatpush1.bf16.msra.mxu0 0
    %1317 = vmatprep.subr.bf16.mxu0 0
    %1318 = vmatpush1.bf16.msra.mxu0 0
    %1319 = vmatprep.subr.bf16.mxu0 0
    %1320 = vmatpush1.bf16.msra.mxu0 0
    %1321 = vmatprep.subr.bf16.mxu0 0
    %1322 = vmatpush1.bf16.msra.mxu0 0
    %1323 = vmatprep.subr.bf16.mxu0 0
    %1324 = vmatpush1.bf16.msra.mxu0 0
    %1325 = vmatprep.subr.bf16.mxu0 0
    %1326 = vmatpush1.bf16.msra.mxu0 0
    %1327 = vmatprep.subr.bf16.mxu0 %v1260
    %1328 = vmatpush1.bf16.msra.mxu0 %v1259
    %1329 = vmatprep.subr.bf16.mxu0 0
    %1330 = vmatpush2.bf16.msra.mxu0 0
    %1331 = vmatprep.subr.bf16.mxu0 0
    %1332 = vmatpush2.bf16.msra.mxu0 0
    %1333 = vmatprep.subr.bf16.mxu0 0
    %1334 = vmatpush2.bf16.msra.mxu0 0
    %1335 = vmatprep.subr.bf16.mxu0 0
    %1336 = vmatpush2.bf16.msra.mxu0 0
    %1337 = vmatprep.subr.bf16.mxu0 0
    %1338 = vmatpush2.bf16.msra.mxu0 0
    %1339 = vmatprep.subr.bf16.mxu0 0
    %1340 = vmatpush2.bf16.msra.mxu0 0
    %1341 = vmatprep.subr.bf16.mxu0 0
    %1342 = vmatpush2.bf16.msra.mxu0 0
    %1343 = vmatprep.subr.bf16.mxu0 0
    %1344 = vmatpush2.bf16.msra.mxu0 0
    %1345 = vmatprep.mubr.bf16.mxu0 0
    %1346 = vmatmul.mubr.bf16.gmra.mxu0 %v1266
    %v1347 = vpop.f32.mrf.mxu0
    %v1348 = vadd.f32 0.0, %v1347
    %v1349 = vpop.f32.mrf.mxu0
    %v1350 = vadd.f32 0.0, %v1349
    %v1351 = vpop.f32.mrf.mxu0
    %v1352 = vadd.f32 0.0, %v1351
    %v1353 = vpop.f32.mrf.mxu0
    %v1354 = vadd.f32 0.0, %v1353
    %1355 = vmatprep.mubr.bf16.mxu0 0
    %1356 = vmatmul.mubr.bf16.gmra.mxu0 %v1269
    %v1357 = vpop.f32.mrf.mxu0
    %v1358 = vadd.f32 0.0, %v1357
    %v1359 = vpop.f32.mrf.mxu0
    %v1360 = vadd.f32 0.0, %v1359
    %v1361 = vpop.f32.mrf.mxu0
    %v1362 = vadd.f32 0.0, %v1361
    %v1363 = vpop.f32.mrf.mxu0
    %v1364 = vadd.f32 0.0, %v1363
    %1365 = vmatprep.mubr.bf16.mxu0 0
    %1366 = vmatmul.mubr.bf16.gmra.mxu0 %v1272
    %v1367 = vpop.f32.mrf.mxu0
    %v1368 = vadd.f32 0.0, %v1367
    %v1369 = vpop.f32.mrf.mxu0
    %v1370 = vadd.f32 0.0, %v1369
    %v1371 = vpop.f32.mrf.mxu0
    %v1372 = vadd.f32 0.0, %v1371
    %v1373 = vpop.f32.mrf.mxu0
    %v1374 = vadd.f32 0.0, %v1373
    %1375 = vmatprep.mubr.bf16.mxu0 0
    %1376 = vmatmul.mubr.bf16.gmra.mxu0 %v1275
    %v1377 = vpop.f32.mrf.mxu0
    %v1378 = vadd.f32 0.0, %v1377
    %v1379 = vpop.f32.mrf.mxu0
    %v1380 = vadd.f32 0.0, %v1379
    %v1381 = vpop.f32.mrf.mxu0
    %v1382 = vadd.f32 0.0, %v1381
    %v1383 = vpop.f32.mrf.mxu0
    %v1384 = vadd.f32 0.0, %v1383
    %1385 = vmatprep.mubr.bf16.mxu0 0
    %1386 = vmatmul.mubr.bf16.gmra.mxu0 %v1278
    %v1387 = vpop.f32.mrf.mxu0
    %v1388 = vadd.f32 0.0, %v1387
    %v1389 = vpop.f32.mrf.mxu0
    %v1390 = vadd.f32 0.0, %v1389
    %v1391 = vpop.f32.mrf.mxu0
    %v1392 = vadd.f32 0.0, %v1391
    %v1393 = vpop.f32.mrf.mxu0
    %v1394 = vadd.f32 0.0, %v1393
    %1395 = vmatprep.mubr.bf16.mxu0 0
    %1396 = vmatmul.mubr.bf16.gmra.mxu0 %v1281
    %v1397 = vpop.f32.mrf.mxu0
    %v1398 = vadd.f32 0.0, %v1397
    %v1399 = vpop.f32.mrf.mxu0
    %v1400 = vadd.f32 0.0, %v1399
    %v1401 = vpop.f32.mrf.mxu0
    %v1402 = vadd.f32 0.0, %v1401
    %v1403 = vpop.f32.mrf.mxu0
    %v1404 = vadd.f32 0.0, %v1403
    %1405 = vmatprep.mubr.bf16.mxu0 0
    %1406 = vmatmul.mubr.bf16.gmra.mxu0 %v1284
    %v1407 = vpop.f32.mrf.mxu0
    %v1408 = vadd.f32 0.0, %v1407
    %v1409 = vpop.f32.mrf.mxu0
    %v1410 = vadd.f32 0.0, %v1409
    %v1411 = vpop.f32.mrf.mxu0
    %v1412 = vadd.f32 0.0, %v1411
    %v1413 = vpop.f32.mrf.mxu0
    %v1414 = vadd.f32 0.0, %v1413
    %1415 = vmatprep.mubr.bf16.mxu0 0
    %1416 = vmatmul.mubr.bf16.gmra.mxu0 %v1287
    %v1417 = vpop.f32.mrf.mxu0
    %v1418 = vadd.f32 0.0, %v1417
    %v1419 = vpop.f32.mrf.mxu0
    %v1420 = vadd.f32 0.0, %v1419
    %v1421 = vpop.f32.mrf.mxu0
    %v1422 = vadd.f32 0.0, %v1421
    %v1423 = vpop.f32.mrf.mxu0
    %v1424 = vadd.f32 0.0, %v1423
    %1425 = vmatprep.mubr.bf16.mxu0 0
    %1426 = vmatmul.mubr.bf16.gmra.mxu0 %v1290
    %v1427 = vpop.f32.mrf.mxu0
    %v1428 = vadd.f32 0.0, %v1427
    %v1429 = vpop.f32.mrf.mxu0
    %v1430 = vadd.f32 0.0, %v1429
    %v1431 = vpop.f32.mrf.mxu0
    %v1432 = vadd.f32 0.0, %v1431
    %v1433 = vpop.f32.mrf.mxu0
    %v1434 = vadd.f32 0.0, %v1433
    %1435 = vmatprep.mubr.bf16.mxu0 0
    %1436 = vmatmul.mubr.bf16.gmra.mxu0 %v1293
    %v1437 = vpop.f32.mrf.mxu0
    %v1438 = vadd.f32 0.0, %v1437
    %v1439 = vpop.f32.mrf.mxu0
    %v1440 = vadd.f32 0.0, %v1439
    %v1441 = vpop.f32.mrf.mxu0
    %v1442 = vadd.f32 0.0, %v1441
    %v1443 = vpop.f32.mrf.mxu0
    %v1444 = vadd.f32 0.0, %v1443
    %1445 = vmatprep.mubr.bf16.mxu0 0
    %1446 = vmatmul.mubr.bf16.gmra.mxu0 %v1296
    %v1447 = vpop.f32.mrf.mxu0
    %v1448 = vadd.f32 0.0, %v1447
    %v1449 = vpop.f32.mrf.mxu0
    %v1450 = vadd.f32 0.0, %v1449
    %v1451 = vpop.f32.mrf.mxu0
    %v1452 = vadd.f32 0.0, %v1451
    %v1453 = vpop.f32.mrf.mxu0
    %v1454 = vadd.f32 0.0, %v1453
    %1455 = vmatprep.mubr.bf16.mxu0 0
    %1456 = vmatmul.mubr.bf16.gmra.mxu0 %v1299
    %v1457 = vpop.f32.mrf.mxu0
    %v1458 = vadd.f32 0.0, %v1457
    %v1459 = vpop.f32.mrf.mxu0
    %v1460 = vadd.f32 0.0, %v1459
    %v1461 = vpop.f32.mrf.mxu0
    %v1462 = vadd.f32 0.0, %v1461
    %v1463 = vpop.f32.mrf.mxu0
    %v1464 = vadd.f32 0.0, %v1463
    %1465 = vmatprep.mubr.bf16.mxu0 0
    %1466 = vmatmul.mubr.bf16.gmra.mxu0 %v1302
    %v1467 = vpop.f32.mrf.mxu0
    %v1468 = vadd.f32 0.0, %v1467
    %v1469 = vpop.f32.mrf.mxu0
    %v1470 = vadd.f32 0.0, %v1469
    %v1471 = vpop.f32.mrf.mxu0
    %v1472 = vadd.f32 0.0, %v1471
    %v1473 = vpop.f32.mrf.mxu0
    %v1474 = vadd.f32 0.0, %v1473
    %1475 = vmatprep.mubr.bf16.mxu0 0
    %1476 = vmatmul.mubr.bf16.gmra.mxu0 %v1305
    %v1477 = vpop.f32.mrf.mxu0
    %v1478 = vadd.f32 0.0, %v1477
    %v1479 = vpop.f32.mrf.mxu0
    %v1480 = vadd.f32 0.0, %v1479
    %v1481 = vpop.f32.mrf.mxu0
    %v1482 = vadd.f32 0.0, %v1481
    %v1483 = vpop.f32.mrf.mxu0
    %v1484 = vadd.f32 0.0, %v1483
    %1485 = vmatprep.mubr.bf16.mxu0 0
    %1486 = vmatmul.mubr.bf16.gmra.mxu0 %v1308
    %v1487 = vpop.f32.mrf.mxu0
    %v1488 = vadd.f32 0.0, %v1487
    %v1489 = vpop.f32.mrf.mxu0
    %v1490 = vadd.f32 0.0, %v1489
    %v1491 = vpop.f32.mrf.mxu0
    %v1492 = vadd.f32 0.0, %v1491
    %v1493 = vpop.f32.mrf.mxu0
    %v1494 = vadd.f32 0.0, %v1493
    %1495 = vmatprep.mubr.bf16.mxu0 0
    %1496 = vmatmul.mubr.bf16.gmra.mxu0 %v1311
    %v1497 = vpop.f32.mrf.mxu0
    %v1498 = vadd.f32 0.0, %v1497
    %v1499 = vpop.f32.mrf.mxu0
    %v1500 = vadd.f32 0.0, %v1499
    %v1501 = vpop.f32.mrf.mxu0
    %v1502 = vadd.f32 0.0, %v1501
    %v1503 = vpop.f32.mrf.mxu0
    %v1504 = vadd.f32 0.0, %v1503
    %1505 = vdwg.mxu0
    %1506 = vmatprep.subr.bf16.mxu0 0
    %1507 = vmatpush1.bf16.msra.mxu0 0
    %1508 = vmatprep.subr.bf16.mxu0 0
    %1509 = vmatpush1.bf16.msra.mxu0 0
    %1510 = vmatprep.subr.bf16.mxu0 0
    %1511 = vmatpush1.bf16.msra.mxu0 0
    %1512 = vmatprep.subr.bf16.mxu0 0
    %1513 = vmatpush1.bf16.msra.mxu0 0
    %1514 = vmatprep.subr.bf16.mxu0 0
    %1515 = vmatpush1.bf16.msra.mxu0 0
    %1516 = vmatprep.subr.bf16.mxu0 0
    %1517 = vmatpush1.bf16.msra.mxu0 0
    %1518 = vmatprep.subr.bf16.mxu0 0
    %1519 = vmatpush1.bf16.msra.mxu0 0
    %1520 = vmatprep.subr.bf16.mxu0 0
    %1521 = vmatpush1.bf16.msra.mxu0 %v1261
    %1522 = vmatprep.subr.bf16.mxu0 0
    %1523 = vmatpush2.bf16.msra.mxu0 0
    %1524 = vmatprep.subr.bf16.mxu0 0
    %1525 = vmatpush2.bf16.msra.mxu0 0
    %1526 = vmatprep.subr.bf16.mxu0 0
    %1527 = vmatpush2.bf16.msra.mxu0 0
    %1528 = vmatprep.subr.bf16.mxu0 0
    %1529 = vmatpush2.bf16.msra.mxu0 0
    %1530 = vmatprep.subr.bf16.mxu0 0
    %1531 = vmatpush2.bf16.msra.mxu0 0
    %1532 = vmatprep.subr.bf16.mxu0 0
    %1533 = vmatpush2.bf16.msra.mxu0 0
    %1534 = vmatprep.subr.bf16.mxu0 0
    %1535 = vmatpush2.bf16.msra.mxu0 0
    %1536 = vmatprep.subr.bf16.mxu0 0
    %1537 = vmatpush2.bf16.msra.mxu0 0
    %1538 = vmatprep.mubr.bf16.mxu0 0
    %1539 = vmatmul.mubr.bf16.gmra.mxu0 %v1266
    %v1540 = vpop.f32.mrf.mxu0
    %v1541 = vadd.f32 0.0, %v1540
    %v1542 = vpop.f32.mrf.mxu0
    %v1543 = vpop.f32.mrf.mxu0
    %v1544 = vadd.f32 0.0, %v1543
    %v1545 = vpop.f32.mrf.mxu0
    %1546 = vmatprep.mubr.bf16.mxu0 0
    %1547 = vmatmul.mubr.bf16.gmra.mxu0 %v1269
    %v1548 = vpop.f32.mrf.mxu0
    %v1549 = vadd.f32 0.0, %v1548
    %v1550 = vpop.f32.mrf.mxu0
    %v1551 = vpop.f32.mrf.mxu0
    %v1552 = vadd.f32 0.0, %v1551
    %v1553 = vpop.f32.mrf.mxu0
    %1554 = vmatprep.mubr.bf16.mxu0 0
    %1555 = vmatmul.mubr.bf16.gmra.mxu0 %v1272
    %v1556 = vpop.f32.mrf.mxu0
    %v1557 = vadd.f32 0.0, %v1556
    %v1558 = vpop.f32.mrf.mxu0
    %v1559 = vpop.f32.mrf.mxu0
    %v1560 = vadd.f32 0.0, %v1559
    %v1561 = vpop.f32.mrf.mxu0
    %1562 = vmatprep.mubr.bf16.mxu0 0
    %1563 = vmatmul.mubr.bf16.gmra.mxu0 %v1275
    %v1564 = vpop.f32.mrf.mxu0
    %v1565 = vadd.f32 0.0, %v1564
    %v1566 = vpop.f32.mrf.mxu0
    %v1567 = vpop.f32.mrf.mxu0
    %v1568 = vadd.f32 0.0, %v1567
    %v1569 = vpop.f32.mrf.mxu0
    %1570 = vmatprep.mubr.bf16.mxu0 0
    %1571 = vmatmul.mubr.bf16.gmra.mxu0 %v1278
    %v1572 = vpop.f32.mrf.mxu0
    %v1573 = vadd.f32 0.0, %v1572
    %v1574 = vpop.f32.mrf.mxu0
    %v1575 = vpop.f32.mrf.mxu0
    %v1576 = vadd.f32 0.0, %v1575
    %v1577 = vpop.f32.mrf.mxu0
    %1578 = vmatprep.mubr.bf16.mxu0 0
    %1579 = vmatmul.mubr.bf16.gmra.mxu0 %v1281
    %v1580 = vpop.f32.mrf.mxu0
    %v1581 = vadd.f32 0.0, %v1580
    %v1582 = vpop.f32.mrf.mxu0
    %v1583 = vpop.f32.mrf.mxu0
    %v1584 = vadd.f32 0.0, %v1583
    %v1585 = vpop.f32.mrf.mxu0
    %1586 = vmatprep.mubr.bf16.mxu0 0
    %1587 = vmatmul.mubr.bf16.gmra.mxu0 %v1284
    %v1588 = vpop.f32.mrf.mxu0
    %v1589 = vadd.f32 0.0, %v1588
    %v1590 = vpop.f32.mrf.mxu0
    %v1591 = vpop.f32.mrf.mxu0
    %v1592 = vadd.f32 0.0, %v1591
    %v1593 = vpop.f32.mrf.mxu0
    %1594 = vmatprep.mubr.bf16.mxu0 0
    %1595 = vmatmul.mubr.bf16.gmra.mxu0 %v1287
    %v1596 = vpop.f32.mrf.mxu0
    %v1597 = vadd.f32 0.0, %v1596
    %v1598 = vpop.f32.mrf.mxu0
    %v1599 = vpop.f32.mrf.mxu0
    %v1600 = vadd.f32 0.0, %v1599
    %v1601 = vpop.f32.mrf.mxu0
    %1602 = vmatprep.mubr.bf16.mxu0 0
    %1603 = vmatmul.mubr.bf16.gmra.mxu0 %v1290
    %v1604 = vpop.f32.mrf.mxu0
    %v1605 = vadd.f32 0.0, %v1604
    %v1606 = vpop.f32.mrf.mxu0
    %v1607 = vpop.f32.mrf.mxu0
    %v1608 = vadd.f32 0.0, %v1607
    %v1609 = vpop.f32.mrf.mxu0
    %1610 = vmatprep.mubr.bf16.mxu0 0
    %1611 = vmatmul.mubr.bf16.gmra.mxu0 %v1293
    %v1612 = vpop.f32.mrf.mxu0
    %v1613 = vadd.f32 0.0, %v1612
    %v1614 = vpop.f32.mrf.mxu0
    %v1615 = vpop.f32.mrf.mxu0
    %v1616 = vadd.f32 0.0, %v1615
    %v1617 = vpop.f32.mrf.mxu0
    %1618 = vmatprep.mubr.bf16.mxu0 0
    %1619 = vmatmul.mubr.bf16.gmra.mxu0 %v1296
    %v1620 = vpop.f32.mrf.mxu0
    %v1621 = vadd.f32 0.0, %v1620
    %v1622 = vpop.f32.mrf.mxu0
    %v1623 = vpop.f32.mrf.mxu0
    %v1624 = vadd.f32 0.0, %v1623
    %v1625 = vpop.f32.mrf.mxu0
    %1626 = vmatprep.mubr.bf16.mxu0 0
    %1627 = vmatmul.mubr.bf16.gmra.mxu0 %v1299
    %v1628 = vpop.f32.mrf.mxu0
    %v1629 = vadd.f32 0.0, %v1628
    %v1630 = vpop.f32.mrf.mxu0
    %v1631 = vpop.f32.mrf.mxu0
    %v1632 = vadd.f32 0.0, %v1631
    %v1633 = vpop.f32.mrf.mxu0
    %1634 = vmatprep.mubr.bf16.mxu0 0
    %1635 = vmatmul.mubr.bf16.gmra.mxu0 %v1302
    %v1636 = vpop.f32.mrf.mxu0
    %v1637 = vadd.f32 0.0, %v1636
    %v1638 = vpop.f32.mrf.mxu0
    %v1639 = vpop.f32.mrf.mxu0
    %v1640 = vadd.f32 0.0, %v1639
    %v1641 = vpop.f32.mrf.mxu0
    %1642 = vmatprep.mubr.bf16.mxu0 0
    %1643 = vmatmul.mubr.bf16.gmra.mxu0 %v1305
    %v1644 = vpop.f32.mrf.mxu0
    %v1645 = vadd.f32 0.0, %v1644
    %v1646 = vpop.f32.mrf.mxu0
    %v1647 = vpop.f32.mrf.mxu0
    %v1648 = vadd.f32 0.0, %v1647
    %v1649 = vpop.f32.mrf.mxu0
    %1650 = vmatprep.mubr.bf16.mxu0 0
    %1651 = vmatmul.mubr.bf16.gmra.mxu0 %v1308
    %v1652 = vpop.f32.mrf.mxu0
    %v1653 = vadd.f32 0.0, %v1652
    %v1654 = vpop.f32.mrf.mxu0
    %v1655 = vpop.f32.mrf.mxu0
    %v1656 = vadd.f32 0.0, %v1655
    %v1657 = vpop.f32.mrf.mxu0
    %1658 = vmatprep.mubr.bf16.mxu0 0
    %1659 = vmatmul.mubr.bf16.gmra.mxu0 %v1311
    %v1660 = vpop.f32.mrf.mxu0
    %v1661 = vadd.f32 0.0, %v1660
    %v1662 = vpop.f32.mrf.mxu0
    %v1663 = vpop.f32.mrf.mxu0
    %v1664 = vadd.f32 0.0, %v1663
    %v1665 = vpop.f32.mrf.mxu0
    %1666 = vdwg.mxu0
    %v1667 = vadd.f32 %v812, %v1348
    %v1668 = vadd.f32 %v814, %v1350
    %v1669 = vadd.f32 %v1005, %v1541
    %v1670 = vadd.f32 %v816, %v1352
    %v1671 = vadd.f32 %v818, %v1354
    %v1672 = vadd.f32 %v1008, %v1544
    %v1673 = vadd.f32 %v822, %v1358
    %v1674 = vadd.f32 %v824, %v1360
    %v1675 = vadd.f32 %v1013, %v1549
    %v1676 = vadd.f32 %v826, %v1362
    %v1677 = vadd.f32 %v828, %v1364
    %v1678 = vadd.f32 %v1016, %v1552
    %v1679 = vadd.f32 %v832, %v1368
    %v1680 = vadd.f32 %v834, %v1370
    %v1681 = vadd.f32 %v1021, %v1557
    %v1682 = vadd.f32 %v836, %v1372
    %v1683 = vadd.f32 %v838, %v1374
    %v1684 = vadd.f32 %v1024, %v1560
    %v1685 = vadd.f32 %v842, %v1378
    %v1686 = vadd.f32 %v844, %v1380
    %v1687 = vadd.f32 %v1029, %v1565
    %v1688 = vadd.f32 %v846, %v1382
    %v1689 = vadd.f32 %v848, %v1384
    %v1690 = vadd.f32 %v1032, %v1568
    %v1691 = vadd.f32 %v852, %v1388
    %v1692 = vadd.f32 %v854, %v1390
    %v1693 = vadd.f32 %v1037, %v1573
    %v1694 = vadd.f32 %v856, %v1392
    %v1695 = vadd.f32 %v858, %v1394
    %v1696 = vadd.f32 %v1040, %v1576
    %v1697 = vadd.f32 %v862, %v1398
    %v1698 = vadd.f32 %v864, %v1400
    %v1699 = vadd.f32 %v1045, %v1581
    %v1700 = vadd.f32 %v866, %v1402
    %v1701 = vadd.f32 %v868, %v1404
    %v1702 = vadd.f32 %v1048, %v1584
    %v1703 = vadd.f32 %v872, %v1408
    %v1704 = vadd.f32 %v874, %v1410
    %v1705 = vadd.f32 %v1053, %v1589
    %v1706 = vadd.f32 %v876, %v1412
    %v1707 = vadd.f32 %v878, %v1414
    %v1708 = vadd.f32 %v1056, %v1592
    %v1709 = vadd.f32 %v882, %v1418
    %v1710 = vadd.f32 %v884, %v1420
    %v1711 = vadd.f32 %v1061, %v1597
    %v1712 = vadd.f32 %v886, %v1422
    %v1713 = vadd.f32 %v888, %v1424
    %v1714 = vadd.f32 %v1064, %v1600
    %v1715 = vadd.f32 %v892, %v1428
    %v1716 = vadd.f32 %v894, %v1430
    %v1717 = vadd.f32 %v1069, %v1605
    %v1718 = vadd.f32 %v896, %v1432
    %v1719 = vadd.f32 %v898, %v1434
    %v1720 = vadd.f32 %v1072, %v1608
    %v1721 = vadd.f32 %v902, %v1438
    %v1722 = vadd.f32 %v904, %v1440
    %v1723 = vadd.f32 %v1077, %v1613
    %v1724 = vadd.f32 %v906, %v1442
    %v1725 = vadd.f32 %v908, %v1444
    %v1726 = vadd.f32 %v1080, %v1616
    %v1727 = vadd.f32 %v912, %v1448
    %v1728 = vadd.f32 %v914, %v1450
    %v1729 = vadd.f32 %v1085, %v1621
    %v1730 = vadd.f32 %v916, %v1452
    %v1731 = vadd.f32 %v918, %v1454
    %v1732 = vadd.f32 %v1088, %v1624
    %v1733 = vadd.f32 %v922, %v1458
    %v1734 = vadd.f32 %v924, %v1460
    %v1735 = vadd.f32 %v1093, %v1629
    %v1736 = vadd.f32 %v926, %v1462
    %v1737 = vadd.f32 %v928, %v1464
    %v1738 = vadd.f32 %v1096, %v1632
    %v1739 = vadd.f32 %v932, %v1468
    %v1740 = vadd.f32 %v934, %v1470
    %v1741 = vadd.f32 %v1101, %v1637
    %v1742 = vadd.f32 %v936, %v1472
    %v1743 = vadd.f32 %v938, %v1474
    %v1744 = vadd.f32 %v1104, %v1640
    %v1745 = vadd.f32 %v942, %v1478
    %v1746 = vadd.f32 %v944, %v1480
    %v1747 = vadd.f32 %v1109, %v1645
    %v1748 = vadd.f32 %v946, %v1482
    %v1749 = vadd.f32 %v948, %v1484
    %v1750 = vadd.f32 %v1112, %v1648
    %v1751 = vadd.f32 %v952, %v1488
    %v1752 = vadd.f32 %v954, %v1490
    %v1753 = vadd.f32 %v1117, %v1653
    %v1754 = vadd.f32 %v956, %v1492
    %v1755 = vadd.f32 %v958, %v1494
    %v1756 = vadd.f32 %v1120, %v1656
    %v1757 = vadd.f32 %v962, %v1498
    %v1758 = vadd.f32 %v964, %v1500
    %v1759 = vadd.f32 %v1125, %v1661
    %v1760 = vadd.f32 %v966, %v1502
    %v1761 = vadd.f32 %v968, %v1504
    %v1762 = vadd.f32 %v1128, %v1664
    %s1763 = scalar_lea.vmem %s0, 24
    %v1764 = vld [vmem:[%s1763] sm:$0xf]
    %v1765 = vld [vmem:[%s1763 + $0x4] sm:$0xf]
    %v1766 = vld [vmem:[%s1763 + $0x8] sm:$0xf]
    %v1767 = vld [vmem:[%s1763 + $0xc] sm:$0xf]
    %v1768 = vld [vmem:[%s1763 + $0x10] sm:$0xf]
    %v1769 = vld [vmem:[%s1763 + $0x14] sm:$0xf]
    %v1770 = vld [vmem:[%s1763 + $0x18] sm:$0xf]
    %v1771 = vld [vmem:[%s1763 + $0x1c] sm:$0xf]
    %v1772 = vld [vmem:[%s1763 + $0x20] sm:$0xf]
    %v1773 = vld [vmem:[%s1763 + $0x24] sm:$0xf]
    %v1774 = vld [vmem:[%s1763 + $0x28] sm:$0xf]
    %v1775 = vld [vmem:[%s1763 + $0x2c] sm:$0xf]
    %v1776 = vld [vmem:[%s1763 + $0x30] sm:$0xf]
    %v1777 = vld [vmem:[%s1763 + $0x34] sm:$0xf]
    %v1778 = vld [vmem:[%s1763 + $0x38] sm:$0xf]
    %v1779 = vld [vmem:[%s1763 + $0x3c] sm:$0xf]
    %v1780 = vld [vmem:[%s1763 + $0x40] sm:$0xf]
    %v1781 = vld [vmem:[%s1763 + $0x44] sm:$0xf]
    %v1782 = vld [vmem:[%s1763 + $0x48] sm:$0xf]
    %v1783 = vld [vmem:[%s1763 + $0x4c] sm:$0xf]
    %v1784 = vld [vmem:[%s1763 + $0x50] sm:$0xf]
    %v1785 = vld [vmem:[%s1763 + $0x54] sm:$0xf]
    %v1786 = vld [vmem:[%s1763 + $0x58] sm:$0xf]
    %v1787 = vld [vmem:[%s1763 + $0x5c] sm:$0xf]
    %v1788 = vld [vmem:[%s1763 + $0x60] sm:$0xf]
    %v1789 = vld [vmem:[%s1763 + $0x64] sm:$0xf]
    %v1790 = vld [vmem:[%s1763 + $0x68] sm:$0xf]
    %v1791 = vld [vmem:[%s1763 + $0x6c] sm:$0xf]
    %v1792 = vld [vmem:[%s1763 + $0x70] sm:$0xf]
    %v1793 = vld [vmem:[%s1763 + $0x74] sm:$0xf]
    %v1794 = vld [vmem:[%s1763 + $0x78] sm:$0xf]
    %v1795 = vld [vmem:[%s1763 + $0x7c] sm:$0xf]
    %s1796 = scalar_lea.vmem %s1, 72
    %v1797 = vld [vmem:[%s1796] sm:$0xff]
    %v1798 = vld [vmem:[%s1796 + $0x8] sm:$0xf]
    %v1799 = vld [vmem:[%s1796 + $0xc] sm:$0xff]
    %v1800 = vld [vmem:[%s1796 + $0x14] sm:$0xf]
    %v1833 = vunpack.c.l.b16 %v1764
    %v1834 = vunpack.c.l.b16 %v1765
    %v1835 = vunpack.c.l.b16 %v1766
    %v1836 = vunpack.c.l.b16 %v1767
    %v1837 = vunpack.c.l.b16 %v1768
    %v1838 = vunpack.c.l.b16 %v1769
    %v1839 = vunpack.c.l.b16 %v1770
    %v1840 = vunpack.c.l.b16 %v1771
    %v1841 = vunpack.c.l.b16 %v1772
    %v1842 = vunpack.c.l.b16 %v1773
    %v1843 = vunpack.c.l.b16 %v1774
    %v1844 = vunpack.c.l.b16 %v1775
    %v1845 = vunpack.c.l.b16 %v1776
    %v1846 = vunpack.c.l.b16 %v1777
    %v1847 = vunpack.c.l.b16 %v1778
    %v1848 = vunpack.c.l.b16 %v1779
    %v1849 = vunpack.c.l.b16 %v1780
    %v1850 = vunpack.c.l.b16 %v1781
    %v1851 = vunpack.c.l.b16 %v1782
    %v1852 = vunpack.c.l.b16 %v1783
    %v1853 = vunpack.c.l.b16 %v1784
    %v1854 = vunpack.c.l.b16 %v1785
    %v1855 = vunpack.c.l.b16 %v1786
    %v1856 = vunpack.c.l.b16 %v1787
    %v1857 = vunpack.c.l.b16 %v1788
    %v1858 = vunpack.c.l.b16 %v1789
    %v1859 = vunpack.c.l.b16 %v1790
    %v1860 = vunpack.c.l.b16 %v1791
    %v1861 = vunpack.c.l.b16 %v1792
    %v1862 = vunpack.c.l.b16 %v1793
    %v1863 = vunpack.c.l.b16 %v1794
    %v1864 = vunpack.c.l.b16 %v1795
    %v1865 = vpack.c.b16 %v1834, %v1833
    %v1866 = vpack.c.b16 %v1836, %v1835
    %v1867 = vpack.c.b16 %v1838, %v1837
    %v1868 = vpack.c.b16 %v1840, %v1839
    %v1869 = vpack.c.b16 %v1842, %v1841
    %v1870 = vpack.c.b16 %v1844, %v1843
    %v1871 = vpack.c.b16 %v1846, %v1845
    %v1872 = vpack.c.b16 %v1848, %v1847
    %v1873 = vpack.c.b16 %v1850, %v1849
    %v1874 = vpack.c.b16 %v1852, %v1851
    %v1875 = vpack.c.b16 %v1854, %v1853
    %v1876 = vpack.c.b16 %v1856, %v1855
    %v1877 = vpack.c.b16 %v1858, %v1857
    %v1878 = vpack.c.b16 %v1860, %v1859
    %v1879 = vpack.c.b16 %v1862, %v1861
    %v1880 = vpack.c.b16 %v1864, %v1863
    %v1885 = vunpack.c.l.b16 %v1797
    %v1886 = vunpack.c.h.b16 %v1797
    %v1887 = vunpack.c.l.b16 %v1798
    %v1888 = vunpack.c.l.b16 %v1799
    %v1889 = vunpack.c.h.b16 %v1799
    %v1890 = vunpack.c.l.b16 %v1800
    %v1891 = vpack.c.b16 %v1888, %v1885
    %v1892 = vpack.c.b16 %v1889, %v1886
    %v1893 = vpack.c.b16 %v1890, %v1887
    %v1898 = vsel %vm230, %v1865, 0
    %v1901 = vsel %vm230, %v1866, 0
    %v1904 = vsel %vm230, %v1867, 0
    %v1907 = vsel %vm230, %v1868, 0
    %v1910 = vsel %vm230, %v1869, 0
    %v1913 = vsel %vm230, %v1870, 0
    %v1916 = vsel %vm230, %v1871, 0
    %v1919 = vsel %vm230, %v1872, 0
    %v1922 = vsel %vm230, %v1873, 0
    %v1925 = vsel %vm230, %v1874, 0
    %v1928 = vsel %vm230, %v1875, 0
    %v1931 = vsel %vm230, %v1876, 0
    %v1934 = vsel %vm230, %v1877, 0
    %v1937 = vsel %vm230, %v1878, 0
    %v1940 = vsel %vm230, %v1879, 0
    %v1943 = vsel %vm230, %v1880, 0
    %1945 = vmatprep.subr.bf16.mxu0 0
    %1946 = vmatpush1.bf16.msra.mxu0 0
    %1947 = vmatprep.subr.bf16.mxu0 0
    %1948 = vmatpush1.bf16.msra.mxu0 0
    %1949 = vmatprep.subr.bf16.mxu0 0
    %1950 = vmatpush1.bf16.msra.mxu0 0
    %1951 = vmatprep.subr.bf16.mxu0 0
    %1952 = vmatpush1.bf16.msra.mxu0 0
    %1953 = vmatprep.subr.bf16.mxu0 0
    %1954 = vmatpush1.bf16.msra.mxu0 0
    %1955 = vmatprep.subr.bf16.mxu0 0
    %1956 = vmatpush1.bf16.msra.mxu0 0
    %1957 = vmatprep.subr.bf16.mxu0 0
    %1958 = vmatpush1.bf16.msra.mxu0 0
    %1959 = vmatprep.subr.bf16.mxu0 %v1892
    %1960 = vmatpush1.bf16.msra.mxu0 %v1891
    %1961 = vmatprep.subr.bf16.mxu0 0
    %1962 = vmatpush2.bf16.msra.mxu0 0
    %1963 = vmatprep.subr.bf16.mxu0 0
    %1964 = vmatpush2.bf16.msra.mxu0 0
    %1965 = vmatprep.subr.bf16.mxu0 0
    %1966 = vmatpush2.bf16.msra.mxu0 0
    %1967 = vmatprep.subr.bf16.mxu0 0
    %1968 = vmatpush2.bf16.msra.mxu0 0
    %1969 = vmatprep.subr.bf16.mxu0 0
    %1970 = vmatpush2.bf16.msra.mxu0 0
    %1971 = vmatprep.subr.bf16.mxu0 0
    %1972 = vmatpush2.bf16.msra.mxu0 0
    %1973 = vmatprep.subr.bf16.mxu0 0
    %1974 = vmatpush2.bf16.msra.mxu0 0
    %1975 = vmatprep.subr.bf16.mxu0 0
    %1976 = vmatpush2.bf16.msra.mxu0 0
    %1977 = vmatprep.mubr.bf16.mxu0 0
    %1978 = vmatmul.mubr.bf16.gmra.mxu0 %v1898
    %v1979 = vpop.f32.mrf.mxu0
    %v1980 = vadd.f32 0.0, %v1979
    %v1981 = vpop.f32.mrf.mxu0
    %v1982 = vadd.f32 0.0, %v1981
    %v1983 = vpop.f32.mrf.mxu0
    %v1984 = vadd.f32 0.0, %v1983
    %v1985 = vpop.f32.mrf.mxu0
    %v1986 = vadd.f32 0.0, %v1985
    %1987 = vmatprep.mubr.bf16.mxu0 0
    %1988 = vmatmul.mubr.bf16.gmra.mxu0 %v1901
    %v1989 = vpop.f32.mrf.mxu0
    %v1990 = vadd.f32 0.0, %v1989
    %v1991 = vpop.f32.mrf.mxu0
    %v1992 = vadd.f32 0.0, %v1991
    %v1993 = vpop.f32.mrf.mxu0
    %v1994 = vadd.f32 0.0, %v1993
    %v1995 = vpop.f32.mrf.mxu0
    %v1996 = vadd.f32 0.0, %v1995
    %1997 = vmatprep.mubr.bf16.mxu0 0
    %1998 = vmatmul.mubr.bf16.gmra.mxu0 %v1904
    %v1999 = vpop.f32.mrf.mxu0
    %v2000 = vadd.f32 0.0, %v1999
    %v2001 = vpop.f32.mrf.mxu0
    %v2002 = vadd.f32 0.0, %v2001
    %v2003 = vpop.f32.mrf.mxu0
    %v2004 = vadd.f32 0.0, %v2003
    %v2005 = vpop.f32.mrf.mxu0
    %v2006 = vadd.f32 0.0, %v2005
    %2007 = vmatprep.mubr.bf16.mxu0 0
    %2008 = vmatmul.mubr.bf16.gmra.mxu0 %v1907
    %v2009 = vpop.f32.mrf.mxu0
    %v2010 = vadd.f32 0.0, %v2009
    %v2011 = vpop.f32.mrf.mxu0
    %v2012 = vadd.f32 0.0, %v2011
    %v2013 = vpop.f32.mrf.mxu0
    %v2014 = vadd.f32 0.0, %v2013
    %v2015 = vpop.f32.mrf.mxu0
    %v2016 = vadd.f32 0.0, %v2015
    %2017 = vmatprep.mubr.bf16.mxu0 0
    %2018 = vmatmul.mubr.bf16.gmra.mxu0 %v1910
    %v2019 = vpop.f32.mrf.mxu0
    %v2020 = vadd.f32 0.0, %v2019
    %v2021 = vpop.f32.mrf.mxu0
    %v2022 = vadd.f32 0.0, %v2021
    %v2023 = vpop.f32.mrf.mxu0
    %v2024 = vadd.f32 0.0, %v2023
    %v2025 = vpop.f32.mrf.mxu0
    %v2026 = vadd.f32 0.0, %v2025
    %2027 = vmatprep.mubr.bf16.mxu0 0
    %2028 = vmatmul.mubr.bf16.gmra.mxu0 %v1913
    %v2029 = vpop.f32.mrf.mxu0
    %v2030 = vadd.f32 0.0, %v2029
    %v2031 = vpop.f32.mrf.mxu0
    %v2032 = vadd.f32 0.0, %v2031
    %v2033 = vpop.f32.mrf.mxu0
    %v2034 = vadd.f32 0.0, %v2033
    %v2035 = vpop.f32.mrf.mxu0
    %v2036 = vadd.f32 0.0, %v2035
    %2037 = vmatprep.mubr.bf16.mxu0 0
    %2038 = vmatmul.mubr.bf16.gmra.mxu0 %v1916
    %v2039 = vpop.f32.mrf.mxu0
    %v2040 = vadd.f32 0.0, %v2039
    %v2041 = vpop.f32.mrf.mxu0
    %v2042 = vadd.f32 0.0, %v2041
    %v2043 = vpop.f32.mrf.mxu0
    %v2044 = vadd.f32 0.0, %v2043
    %v2045 = vpop.f32.mrf.mxu0
    %v2046 = vadd.f32 0.0, %v2045
    %2047 = vmatprep.mubr.bf16.mxu0 0
    %2048 = vmatmul.mubr.bf16.gmra.mxu0 %v1919
    %v2049 = vpop.f32.mrf.mxu0
    %v2050 = vadd.f32 0.0, %v2049
    %v2051 = vpop.f32.mrf.mxu0
    %v2052 = vadd.f32 0.0, %v2051
    %v2053 = vpop.f32.mrf.mxu0
    %v2054 = vadd.f32 0.0, %v2053
    %v2055 = vpop.f32.mrf.mxu0
    %v2056 = vadd.f32 0.0, %v2055
    %2057 = vmatprep.mubr.bf16.mxu0 0
    %2058 = vmatmul.mubr.bf16.gmra.mxu0 %v1922
    %v2059 = vpop.f32.mrf.mxu0
    %v2060 = vadd.f32 0.0, %v2059
    %v2061 = vpop.f32.mrf.mxu0
    %v2062 = vadd.f32 0.0, %v2061
    %v2063 = vpop.f32.mrf.mxu0
    %v2064 = vadd.f32 0.0, %v2063
    %v2065 = vpop.f32.mrf.mxu0
    %v2066 = vadd.f32 0.0, %v2065
    %2067 = vmatprep.mubr.bf16.mxu0 0
    %2068 = vmatmul.mubr.bf16.gmra.mxu0 %v1925
    %v2069 = vpop.f32.mrf.mxu0
    %v2070 = vadd.f32 0.0, %v2069
    %v2071 = vpop.f32.mrf.mxu0
    %v2072 = vadd.f32 0.0, %v2071
    %v2073 = vpop.f32.mrf.mxu0
    %v2074 = vadd.f32 0.0, %v2073
    %v2075 = vpop.f32.mrf.mxu0
    %v2076 = vadd.f32 0.0, %v2075
    %2077 = vmatprep.mubr.bf16.mxu0 0
    %2078 = vmatmul.mubr.bf16.gmra.mxu0 %v1928
    %v2079 = vpop.f32.mrf.mxu0
    %v2080 = vadd.f32 0.0, %v2079
    %v2081 = vpop.f32.mrf.mxu0
    %v2082 = vadd.f32 0.0, %v2081
    %v2083 = vpop.f32.mrf.mxu0
    %v2084 = vadd.f32 0.0, %v2083
    %v2085 = vpop.f32.mrf.mxu0
    %v2086 = vadd.f32 0.0, %v2085
    %2087 = vmatprep.mubr.bf16.mxu0 0
    %2088 = vmatmul.mubr.bf16.gmra.mxu0 %v1931
    %v2089 = vpop.f32.mrf.mxu0
    %v2090 = vadd.f32 0.0, %v2089
    %v2091 = vpop.f32.mrf.mxu0
    %v2092 = vadd.f32 0.0, %v2091
    %v2093 = vpop.f32.mrf.mxu0
    %v2094 = vadd.f32 0.0, %v2093
    %v2095 = vpop.f32.mrf.mxu0
    %v2096 = vadd.f32 0.0, %v2095
    %2097 = vmatprep.mubr.bf16.mxu0 0
    %2098 = vmatmul.mubr.bf16.gmra.mxu0 %v1934
    %v2099 = vpop.f32.mrf.mxu0
    %v2100 = vadd.f32 0.0, %v2099
    %v2101 = vpop.f32.mrf.mxu0
    %v2102 = vadd.f32 0.0, %v2101
    %v2103 = vpop.f32.mrf.mxu0
    %v2104 = vadd.f32 0.0, %v2103
    %v2105 = vpop.f32.mrf.mxu0
    %v2106 = vadd.f32 0.0, %v2105
    %2107 = vmatprep.mubr.bf16.mxu0 0
    %2108 = vmatmul.mubr.bf16.gmra.mxu0 %v1937
    %v2109 = vpop.f32.mrf.mxu0
    %v2110 = vadd.f32 0.0, %v2109
    %v2111 = vpop.f32.mrf.mxu0
    %v2112 = vadd.f32 0.0, %v2111
    %v2113 = vpop.f32.mrf.mxu0
    %v2114 = vadd.f32 0.0, %v2113
    %v2115 = vpop.f32.mrf.mxu0
    %v2116 = vadd.f32 0.0, %v2115
    %2117 = vmatprep.mubr.bf16.mxu0 0
    %2118 = vmatmul.mubr.bf16.gmra.mxu0 %v1940
    %v2119 = vpop.f32.mrf.mxu0
    %v2120 = vadd.f32 0.0, %v2119
    %v2121 = vpop.f32.mrf.mxu0
    %v2122 = vadd.f32 0.0, %v2121
    %v2123 = vpop.f32.mrf.mxu0
    %v2124 = vadd.f32 0.0, %v2123
    %v2125 = vpop.f32.mrf.mxu0
    %v2126 = vadd.f32 0.0, %v2125
    %2127 = vmatprep.mubr.bf16.mxu0 0
    %2128 = vmatmul.mubr.bf16.gmra.mxu0 %v1943
    %v2129 = vpop.f32.mrf.mxu0
    %v2130 = vadd.f32 0.0, %v2129
    %v2131 = vpop.f32.mrf.mxu0
    %v2132 = vadd.f32 0.0, %v2131
    %v2133 = vpop.f32.mrf.mxu0
    %v2134 = vadd.f32 0.0, %v2133
    %v2135 = vpop.f32.mrf.mxu0
    %v2136 = vadd.f32 0.0, %v2135
    %2137 = vdwg.mxu0
    %2138 = vmatprep.subr.bf16.mxu0 0
    %2139 = vmatpush1.bf16.msra.mxu0 0
    %2140 = vmatprep.subr.bf16.mxu0 0
    %2141 = vmatpush1.bf16.msra.mxu0 0
    %2142 = vmatprep.subr.bf16.mxu0 0
    %2143 = vmatpush1.bf16.msra.mxu0 0
    %2144 = vmatprep.subr.bf16.mxu0 0
    %2145 = vmatpush1.bf16.msra.mxu0 0
    %2146 = vmatprep.subr.bf16.mxu0 0
    %2147 = vmatpush1.bf16.msra.mxu0 0
    %2148 = vmatprep.subr.bf16.mxu0 0
    %2149 = vmatpush1.bf16.msra.mxu0 0
    %2150 = vmatprep.subr.bf16.mxu0 0
    %2151 = vmatpush1.bf16.msra.mxu0 0
    %2152 = vmatprep.subr.bf16.mxu0 0
    %2153 = vmatpush1.bf16.msra.mxu0 %v1893
    %2154 = vmatprep.subr.bf16.mxu0 0
    %2155 = vmatpush2.bf16.msra.mxu0 0
    %2156 = vmatprep.subr.bf16.mxu0 0
    %2157 = vmatpush2.bf16.msra.mxu0 0
    %2158 = vmatprep.subr.bf16.mxu0 0
    %2159 = vmatpush2.bf16.msra.mxu0 0
    %2160 = vmatprep.subr.bf16.mxu0 0
    %2161 = vmatpush2.bf16.msra.mxu0 0
    %2162 = vmatprep.subr.bf16.mxu0 0
    %2163 = vmatpush2.bf16.msra.mxu0 0
    %2164 = vmatprep.subr.bf16.mxu0 0
    %2165 = vmatpush2.bf16.msra.mxu0 0
    %2166 = vmatprep.subr.bf16.mxu0 0
    %2167 = vmatpush2.bf16.msra.mxu0 0
    %2168 = vmatprep.subr.bf16.mxu0 0
    %2169 = vmatpush2.bf16.msra.mxu0 0
    %2170 = vmatprep.mubr.bf16.mxu0 0
    %2171 = vmatmul.mubr.bf16.gmra.mxu0 %v1898
    %v2172 = vpop.f32.mrf.mxu0
    %v2173 = vadd.f32 0.0, %v2172
    %v2174 = vpop.f32.mrf.mxu0
    %v2175 = vpop.f32.mrf.mxu0
    %v2176 = vadd.f32 0.0, %v2175
    %v2177 = vpop.f32.mrf.mxu0
    %2178 = vmatprep.mubr.bf16.mxu0 0
    %2179 = vmatmul.mubr.bf16.gmra.mxu0 %v1901
    %v2180 = vpop.f32.mrf.mxu0
    %v2181 = vadd.f32 0.0, %v2180
    %v2182 = vpop.f32.mrf.mxu0
    %v2183 = vpop.f32.mrf.mxu0
    %v2184 = vadd.f32 0.0, %v2183
    %v2185 = vpop.f32.mrf.mxu0
    %2186 = vmatprep.mubr.bf16.mxu0 0
    %2187 = vmatmul.mubr.bf16.gmra.mxu0 %v1904
    %v2188 = vpop.f32.mrf.mxu0
    %v2189 = vadd.f32 0.0, %v2188
    %v2190 = vpop.f32.mrf.mxu0
    %v2191 = vpop.f32.mrf.mxu0
    %v2192 = vadd.f32 0.0, %v2191
    %v2193 = vpop.f32.mrf.mxu0
    %2194 = vmatprep.mubr.bf16.mxu0 0
    %2195 = vmatmul.mubr.bf16.gmra.mxu0 %v1907
    %v2196 = vpop.f32.mrf.mxu0
    %v2197 = vadd.f32 0.0, %v2196
    %v2198 = vpop.f32.mrf.mxu0
    %v2199 = vpop.f32.mrf.mxu0
    %v2200 = vadd.f32 0.0, %v2199
    %v2201 = vpop.f32.mrf.mxu0
    %2202 = vmatprep.mubr.bf16.mxu0 0
    %2203 = vmatmul.mubr.bf16.gmra.mxu0 %v1910
    %v2204 = vpop.f32.mrf.mxu0
    %v2205 = vadd.f32 0.0, %v2204
    %v2206 = vpop.f32.mrf.mxu0
    %v2207 = vpop.f32.mrf.mxu0
    %v2208 = vadd.f32 0.0, %v2207
    %v2209 = vpop.f32.mrf.mxu0
    %2210 = vmatprep.mubr.bf16.mxu0 0
    %2211 = vmatmul.mubr.bf16.gmra.mxu0 %v1913
    %v2212 = vpop.f32.mrf.mxu0
    %v2213 = vadd.f32 0.0, %v2212
    %v2214 = vpop.f32.mrf.mxu0
    %v2215 = vpop.f32.mrf.mxu0
    %v2216 = vadd.f32 0.0, %v2215
    %v2217 = vpop.f32.mrf.mxu0
    %2218 = vmatprep.mubr.bf16.mxu0 0
    %2219 = vmatmul.mubr.bf16.gmra.mxu0 %v1916
    %v2220 = vpop.f32.mrf.mxu0
    %v2221 = vadd.f32 0.0, %v2220
    %v2222 = vpop.f32.mrf.mxu0
    %v2223 = vpop.f32.mrf.mxu0
    %v2224 = vadd.f32 0.0, %v2223
    %v2225 = vpop.f32.mrf.mxu0
    %2226 = vmatprep.mubr.bf16.mxu0 0
    %2227 = vmatmul.mubr.bf16.gmra.mxu0 %v1919
    %v2228 = vpop.f32.mrf.mxu0
    %v2229 = vadd.f32 0.0, %v2228
    %v2230 = vpop.f32.mrf.mxu0
    %v2231 = vpop.f32.mrf.mxu0
    %v2232 = vadd.f32 0.0, %v2231
    %v2233 = vpop.f32.mrf.mxu0
    %2234 = vmatprep.mubr.bf16.mxu0 0
    %2235 = vmatmul.mubr.bf16.gmra.mxu0 %v1922
    %v2236 = vpop.f32.mrf.mxu0
    %v2237 = vadd.f32 0.0, %v2236
    %v2238 = vpop.f32.mrf.mxu0
    %v2239 = vpop.f32.mrf.mxu0
    %v2240 = vadd.f32 0.0, %v2239
    %v2241 = vpop.f32.mrf.mxu0
    %2242 = vmatprep.mubr.bf16.mxu0 0
    %2243 = vmatmul.mubr.bf16.gmra.mxu0 %v1925
    %v2244 = vpop.f32.mrf.mxu0
    %v2245 = vadd.f32 0.0, %v2244
    %v2246 = vpop.f32.mrf.mxu0
    %v2247 = vpop.f32.mrf.mxu0
    %v2248 = vadd.f32 0.0, %v2247
    %v2249 = vpop.f32.mrf.mxu0
    %2250 = vmatprep.mubr.bf16.mxu0 0
    %2251 = vmatmul.mubr.bf16.gmra.mxu0 %v1928
    %v2252 = vpop.f32.mrf.mxu0
    %v2253 = vadd.f32 0.0, %v2252
    %v2254 = vpop.f32.mrf.mxu0
    %v2255 = vpop.f32.mrf.mxu0
    %v2256 = vadd.f32 0.0, %v2255
    %v2257 = vpop.f32.mrf.mxu0
    %2258 = vmatprep.mubr.bf16.mxu0 0
    %2259 = vmatmul.mubr.bf16.gmra.mxu0 %v1931
    %v2260 = vpop.f32.mrf.mxu0
    %v2261 = vadd.f32 0.0, %v2260
    %v2262 = vpop.f32.mrf.mxu0
    %v2263 = vpop.f32.mrf.mxu0
    %v2264 = vadd.f32 0.0, %v2263
    %v2265 = vpop.f32.mrf.mxu0
    %2266 = vmatprep.mubr.bf16.mxu0 0
    %2267 = vmatmul.mubr.bf16.gmra.mxu0 %v1934
    %v2268 = vpop.f32.mrf.mxu0
    %v2269 = vadd.f32 0.0, %v2268
    %v2270 = vpop.f32.mrf.mxu0
    %v2271 = vpop.f32.mrf.mxu0
    %v2272 = vadd.f32 0.0, %v2271
    %v2273 = vpop.f32.mrf.mxu0
    %2274 = vmatprep.mubr.bf16.mxu0 0
    %2275 = vmatmul.mubr.bf16.gmra.mxu0 %v1937
    %v2276 = vpop.f32.mrf.mxu0
    %v2277 = vadd.f32 0.0, %v2276
    %v2278 = vpop.f32.mrf.mxu0
    %v2279 = vpop.f32.mrf.mxu0
    %v2280 = vadd.f32 0.0, %v2279
    %v2281 = vpop.f32.mrf.mxu0
    %2282 = vmatprep.mubr.bf16.mxu0 0
    %2283 = vmatmul.mubr.bf16.gmra.mxu0 %v1940
    %v2284 = vpop.f32.mrf.mxu0
    %v2285 = vadd.f32 0.0, %v2284
    %v2286 = vpop.f32.mrf.mxu0
    %v2287 = vpop.f32.mrf.mxu0
    %v2288 = vadd.f32 0.0, %v2287
    %v2289 = vpop.f32.mrf.mxu0
    %2290 = vmatprep.mubr.bf16.mxu0 0
    %2291 = vmatmul.mubr.bf16.gmra.mxu0 %v1943
    %v2292 = vpop.f32.mrf.mxu0
    %v2293 = vadd.f32 0.0, %v2292
    %v2294 = vpop.f32.mrf.mxu0
    %v2295 = vpop.f32.mrf.mxu0
    %v2296 = vadd.f32 0.0, %v2295
    %v2297 = vpop.f32.mrf.mxu0
    %2298 = vdwg.mxu0
    %v2299 = vadd.f32 %v1667, %v1980
    %v2300 = vadd.f32 %v1668, %v1982
    %v2301 = vadd.f32 %v1669, %v2173
    %v2302 = vadd.f32 %v1670, %v1984
    %v2303 = vadd.f32 %v1671, %v1986
    %v2304 = vadd.f32 %v1672, %v2176
    %v2305 = vadd.f32 %v1673, %v1990
    %v2306 = vadd.f32 %v1674, %v1992
    %v2307 = vadd.f32 %v1675, %v2181
    %v2308 = vadd.f32 %v1676, %v1994
    %v2309 = vadd.f32 %v1677, %v1996
    %v2310 = vadd.f32 %v1678, %v2184
    %v2311 = vadd.f32 %v1679, %v2000
    %v2312 = vadd.f32 %v1680, %v2002
    %v2313 = vadd.f32 %v1681, %v2189
    %v2314 = vadd.f32 %v1682, %v2004
    %v2315 = vadd.f32 %v1683, %v2006
    %v2316 = vadd.f32 %v1684, %v2192
    %v2317 = vadd.f32 %v1685, %v2010
    %v2318 = vadd.f32 %v1686, %v2012
    %v2319 = vadd.f32 %v1687, %v2197
    %v2320 = vadd.f32 %v1688, %v2014
    %v2321 = vadd.f32 %v1689, %v2016
    %v2322 = vadd.f32 %v1690, %v2200
    %v2323 = vadd.f32 %v1691, %v2020
    %v2324 = vadd.f32 %v1692, %v2022
    %v2325 = vadd.f32 %v1693, %v2205
    %v2326 = vadd.f32 %v1694, %v2024
    %v2327 = vadd.f32 %v1695, %v2026
    %v2328 = vadd.f32 %v1696, %v2208
    %v2329 = vadd.f32 %v1697, %v2030
    %v2330 = vadd.f32 %v1698, %v2032
    %v2331 = vadd.f32 %v1699, %v2213
    %v2332 = vadd.f32 %v1700, %v2034
    %v2333 = vadd.f32 %v1701, %v2036
    %v2334 = vadd.f32 %v1702, %v2216
    %v2335 = vadd.f32 %v1703, %v2040
    %v2336 = vadd.f32 %v1704, %v2042
    %v2337 = vadd.f32 %v1705, %v2221
    %v2338 = vadd.f32 %v1706, %v2044
    %v2339 = vadd.f32 %v1707, %v2046
    %v2340 = vadd.f32 %v1708, %v2224
    %v2341 = vadd.f32 %v1709, %v2050
    %v2342 = vadd.f32 %v1710, %v2052
    %v2343 = vadd.f32 %v1711, %v2229
    %v2344 = vadd.f32 %v1712, %v2054
    %v2345 = vadd.f32 %v1713, %v2056
    %v2346 = vadd.f32 %v1714, %v2232
    %v2347 = vadd.f32 %v1715, %v2060
    %v2348 = vadd.f32 %v1716, %v2062
    %v2349 = vadd.f32 %v1717, %v2237
    %v2350 = vadd.f32 %v1718, %v2064
    %v2351 = vadd.f32 %v1719, %v2066
    %v2352 = vadd.f32 %v1720, %v2240
    %v2353 = vadd.f32 %v1721, %v2070
    %v2354 = vadd.f32 %v1722, %v2072
    %v2355 = vadd.f32 %v1723, %v2245
    %v2356 = vadd.f32 %v1724, %v2074
    %v2357 = vadd.f32 %v1725, %v2076
    %v2358 = vadd.f32 %v1726, %v2248
    %v2359 = vadd.f32 %v1727, %v2080
    %v2360 = vadd.f32 %v1728, %v2082
    %v2361 = vadd.f32 %v1729, %v2253
    %v2362 = vadd.f32 %v1730, %v2084
    %v2363 = vadd.f32 %v1731, %v2086
    %v2364 = vadd.f32 %v1732, %v2256
    %v2365 = vadd.f32 %v1733, %v2090
    %v2366 = vadd.f32 %v1734, %v2092
    %v2367 = vadd.f32 %v1735, %v2261
    %v2368 = vadd.f32 %v1736, %v2094
    %v2369 = vadd.f32 %v1737, %v2096
    %v2370 = vadd.f32 %v1738, %v2264
    %v2371 = vadd.f32 %v1739, %v2100
    %v2372 = vadd.f32 %v1740, %v2102
    %v2373 = vadd.f32 %v1741, %v2269
    %v2374 = vadd.f32 %v1742, %v2104
    %v2375 = vadd.f32 %v1743, %v2106
    %v2376 = vadd.f32 %v1744, %v2272
    %v2377 = vadd.f32 %v1745, %v2110
    %v2378 = vadd.f32 %v1746, %v2112
    %v2379 = vadd.f32 %v1747, %v2277
    %v2380 = vadd.f32 %v1748, %v2114
    %v2381 = vadd.f32 %v1749, %v2116
    %v2382 = vadd.f32 %v1750, %v2280
    %v2383 = vadd.f32 %v1751, %v2120
    %v2384 = vadd.f32 %v1752, %v2122
    %v2385 = vadd.f32 %v1753, %v2285
    %v2386 = vadd.f32 %v1754, %v2124
    %v2387 = vadd.f32 %v1755, %v2126
    %v2388 = vadd.f32 %v1756, %v2288
    %v2389 = vadd.f32 %v1757, %v2130
    %v2390 = vadd.f32 %v1758, %v2132
    %v2391 = vadd.f32 %v1759, %v2293
    %v2392 = vadd.f32 %v1760, %v2134
    %v2393 = vadd.f32 %v1761, %v2136
    %v2394 = vadd.f32 %v1762, %v2296
    %s2395 = scalar_lea.vmem %s0, 32
    %v2396 = vld [vmem:[%s2395] sm:$0xf]
    %v2397 = vld [vmem:[%s2395 + $0x4] sm:$0xf]
    %v2398 = vld [vmem:[%s2395 + $0x8] sm:$0xf]
    %v2399 = vld [vmem:[%s2395 + $0xc] sm:$0xf]
    %v2400 = vld [vmem:[%s2395 + $0x10] sm:$0xf]
    %v2401 = vld [vmem:[%s2395 + $0x14] sm:$0xf]
    %v2402 = vld [vmem:[%s2395 + $0x18] sm:$0xf]
    %v2403 = vld [vmem:[%s2395 + $0x1c] sm:$0xf]
    %v2404 = vld [vmem:[%s2395 + $0x20] sm:$0xf]
    %v2405 = vld [vmem:[%s2395 + $0x24] sm:$0xf]
    %v2406 = vld [vmem:[%s2395 + $0x28] sm:$0xf]
    %v2407 = vld [vmem:[%s2395 + $0x2c] sm:$0xf]
    %v2408 = vld [vmem:[%s2395 + $0x30] sm:$0xf]
    %v2409 = vld [vmem:[%s2395 + $0x34] sm:$0xf]
    %v2410 = vld [vmem:[%s2395 + $0x38] sm:$0xf]
    %v2411 = vld [vmem:[%s2395 + $0x3c] sm:$0xf]
    %v2412 = vld [vmem:[%s2395 + $0x40] sm:$0xf]
    %v2413 = vld [vmem:[%s2395 + $0x44] sm:$0xf]
    %v2414 = vld [vmem:[%s2395 + $0x48] sm:$0xf]
    %v2415 = vld [vmem:[%s2395 + $0x4c] sm:$0xf]
    %v2416 = vld [vmem:[%s2395 + $0x50] sm:$0xf]
    %v2417 = vld [vmem:[%s2395 + $0x54] sm:$0xf]
    %v2418 = vld [vmem:[%s2395 + $0x58] sm:$0xf]
    %v2419 = vld [vmem:[%s2395 + $0x5c] sm:$0xf]
    %v2420 = vld [vmem:[%s2395 + $0x60] sm:$0xf]
    %v2421 = vld [vmem:[%s2395 + $0x64] sm:$0xf]
    %v2422 = vld [vmem:[%s2395 + $0x68] sm:$0xf]
    %v2423 = vld [vmem:[%s2395 + $0x6c] sm:$0xf]
    %v2424 = vld [vmem:[%s2395 + $0x70] sm:$0xf]
    %v2425 = vld [vmem:[%s2395 + $0x74] sm:$0xf]
    %v2426 = vld [vmem:[%s2395 + $0x78] sm:$0xf]
    %v2427 = vld [vmem:[%s2395 + $0x7c] sm:$0xf]
    %s2428 = scalar_lea.vmem %s1, 96
    %v2429 = vld [vmem:[%s2428] sm:$0xff]
    %v2430 = vld [vmem:[%s2428 + $0x8] sm:$0xf]
    %v2431 = vld [vmem:[%s2428 + $0xc] sm:$0xff]
    %v2432 = vld [vmem:[%s2428 + $0x14] sm:$0xf]
    %v2465 = vunpack.c.l.b16 %v2396
    %v2466 = vunpack.c.l.b16 %v2397
    %v2467 = vunpack.c.l.b16 %v2398
    %v2468 = vunpack.c.l.b16 %v2399
    %v2469 = vunpack.c.l.b16 %v2400
    %v2470 = vunpack.c.l.b16 %v2401
    %v2471 = vunpack.c.l.b16 %v2402
    %v2472 = vunpack.c.l.b16 %v2403
    %v2473 = vunpack.c.l.b16 %v2404
    %v2474 = vunpack.c.l.b16 %v2405
    %v2475 = vunpack.c.l.b16 %v2406
    %v2476 = vunpack.c.l.b16 %v2407
    %v2477 = vunpack.c.l.b16 %v2408
    %v2478 = vunpack.c.l.b16 %v2409
    %v2479 = vunpack.c.l.b16 %v2410
    %v2480 = vunpack.c.l.b16 %v2411
    %v2481 = vunpack.c.l.b16 %v2412
    %v2482 = vunpack.c.l.b16 %v2413
    %v2483 = vunpack.c.l.b16 %v2414
    %v2484 = vunpack.c.l.b16 %v2415
    %v2485 = vunpack.c.l.b16 %v2416
    %v2486 = vunpack.c.l.b16 %v2417
    %v2487 = vunpack.c.l.b16 %v2418
    %v2488 = vunpack.c.l.b16 %v2419
    %v2489 = vunpack.c.l.b16 %v2420
    %v2490 = vunpack.c.l.b16 %v2421
    %v2491 = vunpack.c.l.b16 %v2422
    %v2492 = vunpack.c.l.b16 %v2423
    %v2493 = vunpack.c.l.b16 %v2424
    %v2494 = vunpack.c.l.b16 %v2425
    %v2495 = vunpack.c.l.b16 %v2426
    %v2496 = vunpack.c.l.b16 %v2427
    %v2497 = vpack.c.b16 %v2466, %v2465
    %v2498 = vpack.c.b16 %v2468, %v2467
    %v2499 = vpack.c.b16 %v2470, %v2469
    %v2500 = vpack.c.b16 %v2472, %v2471
    %v2501 = vpack.c.b16 %v2474, %v2473
    %v2502 = vpack.c.b16 %v2476, %v2475
    %v2503 = vpack.c.b16 %v2478, %v2477
    %v2504 = vpack.c.b16 %v2480, %v2479
    %v2505 = vpack.c.b16 %v2482, %v2481
    %v2506 = vpack.c.b16 %v2484, %v2483
    %v2507 = vpack.c.b16 %v2486, %v2485
    %v2508 = vpack.c.b16 %v2488, %v2487
    %v2509 = vpack.c.b16 %v2490, %v2489
    %v2510 = vpack.c.b16 %v2492, %v2491
    %v2511 = vpack.c.b16 %v2494, %v2493
    %v2512 = vpack.c.b16 %v2496, %v2495
    %v2517 = vunpack.c.l.b16 %v2429
    %v2518 = vunpack.c.h.b16 %v2429
    %v2519 = vunpack.c.l.b16 %v2430
    %v2520 = vunpack.c.l.b16 %v2431
    %v2521 = vunpack.c.h.b16 %v2431
    %v2522 = vunpack.c.l.b16 %v2432
    %v2523 = vpack.c.b16 %v2520, %v2517
    %v2524 = vpack.c.b16 %v2521, %v2518
    %v2525 = vpack.c.b16 %v2522, %v2519
    %v2530 = vsel %vm230, %v2497, 0
    %v2533 = vsel %vm230, %v2498, 0
    %v2536 = vsel %vm230, %v2499, 0
    %v2539 = vsel %vm230, %v2500, 0
    %v2542 = vsel %vm230, %v2501, 0
    %v2545 = vsel %vm230, %v2502, 0
    %v2548 = vsel %vm230, %v2503, 0
    %v2551 = vsel %vm230, %v2504, 0
    %v2554 = vsel %vm230, %v2505, 0
    %v2557 = vsel %vm230, %v2506, 0
    %v2560 = vsel %vm230, %v2507, 0
    %v2563 = vsel %vm230, %v2508, 0
    %v2566 = vsel %vm230, %v2509, 0
    %v2569 = vsel %vm230, %v2510, 0
    %v2572 = vsel %vm230, %v2511, 0
    %v2575 = vsel %vm230, %v2512, 0
    %2577 = vmatprep.subr.bf16.mxu0 0
    %2578 = vmatpush1.bf16.msra.mxu0 0
    %2579 = vmatprep.subr.bf16.mxu0 0
    %2580 = vmatpush1.bf16.msra.mxu0 0
    %2581 = vmatprep.subr.bf16.mxu0 0
    %2582 = vmatpush1.bf16.msra.mxu0 0
    %2583 = vmatprep.subr.bf16.mxu0 0
    %2584 = vmatpush1.bf16.msra.mxu0 0
    %2585 = vmatprep.subr.bf16.mxu0 0
    %2586 = vmatpush1.bf16.msra.mxu0 0
    %2587 = vmatprep.subr.bf16.mxu0 0
    %2588 = vmatpush1.bf16.msra.mxu0 0
    %2589 = vmatprep.subr.bf16.mxu0 0
    %2590 = vmatpush1.bf16.msra.mxu0 0
    %2591 = vmatprep.subr.bf16.mxu0 %v2524
    %2592 = vmatpush1.bf16.msra.mxu0 %v2523
    %2593 = vmatprep.subr.bf16.mxu0 0
    %2594 = vmatpush2.bf16.msra.mxu0 0
    %2595 = vmatprep.subr.bf16.mxu0 0
    %2596 = vmatpush2.bf16.msra.mxu0 0
    %2597 = vmatprep.subr.bf16.mxu0 0
    %2598 = vmatpush2.bf16.msra.mxu0 0
    %2599 = vmatprep.subr.bf16.mxu0 0
    %2600 = vmatpush2.bf16.msra.mxu0 0
    %2601 = vmatprep.subr.bf16.mxu0 0
    %2602 = vmatpush2.bf16.msra.mxu0 0
    %2603 = vmatprep.subr.bf16.mxu0 0
    %2604 = vmatpush2.bf16.msra.mxu0 0
    %2605 = vmatprep.subr.bf16.mxu0 0
    %2606 = vmatpush2.bf16.msra.mxu0 0
    %2607 = vmatprep.subr.bf16.mxu0 0
    %2608 = vmatpush2.bf16.msra.mxu0 0
    %2609 = vmatprep.mubr.bf16.mxu0 0
    %2610 = vmatmul.mubr.bf16.gmra.mxu0 %v2530
    %v2611 = vpop.f32.mrf.mxu0
    %v2612 = vadd.f32 0.0, %v2611
    %v2613 = vpop.f32.mrf.mxu0
    %v2614 = vadd.f32 0.0, %v2613
    %v2615 = vpop.f32.mrf.mxu0
    %v2616 = vadd.f32 0.0, %v2615
    %v2617 = vpop.f32.mrf.mxu0
    %v2618 = vadd.f32 0.0, %v2617
    %2619 = vmatprep.mubr.bf16.mxu0 0
    %2620 = vmatmul.mubr.bf16.gmra.mxu0 %v2533
    %v2621 = vpop.f32.mrf.mxu0
    %v2622 = vadd.f32 0.0, %v2621
    %v2623 = vpop.f32.mrf.mxu0
    %v2624 = vadd.f32 0.0, %v2623
    %v2625 = vpop.f32.mrf.mxu0
    %v2626 = vadd.f32 0.0, %v2625
    %v2627 = vpop.f32.mrf.mxu0
    %v2628 = vadd.f32 0.0, %v2627
    %2629 = vmatprep.mubr.bf16.mxu0 0
    %2630 = vmatmul.mubr.bf16.gmra.mxu0 %v2536
    %v2631 = vpop.f32.mrf.mxu0
    %v2632 = vadd.f32 0.0, %v2631
    %v2633 = vpop.f32.mrf.mxu0
    %v2634 = vadd.f32 0.0, %v2633
    %v2635 = vpop.f32.mrf.mxu0
    %v2636 = vadd.f32 0.0, %v2635
    %v2637 = vpop.f32.mrf.mxu0
    %v2638 = vadd.f32 0.0, %v2637
    %2639 = vmatprep.mubr.bf16.mxu0 0
    %2640 = vmatmul.mubr.bf16.gmra.mxu0 %v2539
    %v2641 = vpop.f32.mrf.mxu0
    %v2642 = vadd.f32 0.0, %v2641
    %v2643 = vpop.f32.mrf.mxu0
    %v2644 = vadd.f32 0.0, %v2643
    %v2645 = vpop.f32.mrf.mxu0
    %v2646 = vadd.f32 0.0, %v2645
    %v2647 = vpop.f32.mrf.mxu0
    %v2648 = vadd.f32 0.0, %v2647
    %2649 = vmatprep.mubr.bf16.mxu0 0
    %2650 = vmatmul.mubr.bf16.gmra.mxu0 %v2542
    %v2651 = vpop.f32.mrf.mxu0
    %v2652 = vadd.f32 0.0, %v2651
    %v2653 = vpop.f32.mrf.mxu0
    %v2654 = vadd.f32 0.0, %v2653
    %v2655 = vpop.f32.mrf.mxu0
    %v2656 = vadd.f32 0.0, %v2655
    %v2657 = vpop.f32.mrf.mxu0
    %v2658 = vadd.f32 0.0, %v2657
    %2659 = vmatprep.mubr.bf16.mxu0 0
    %2660 = vmatmul.mubr.bf16.gmra.mxu0 %v2545
    %v2661 = vpop.f32.mrf.mxu0
    %v2662 = vadd.f32 0.0, %v2661
    %v2663 = vpop.f32.mrf.mxu0
    %v2664 = vadd.f32 0.0, %v2663
    %v2665 = vpop.f32.mrf.mxu0
    %v2666 = vadd.f32 0.0, %v2665
    %v2667 = vpop.f32.mrf.mxu0
    %v2668 = vadd.f32 0.0, %v2667
    %2669 = vmatprep.mubr.bf16.mxu0 0
    %2670 = vmatmul.mubr.bf16.gmra.mxu0 %v2548
    %v2671 = vpop.f32.mrf.mxu0
    %v2672 = vadd.f32 0.0, %v2671
    %v2673 = vpop.f32.mrf.mxu0
    %v2674 = vadd.f32 0.0, %v2673
    %v2675 = vpop.f32.mrf.mxu0
    %v2676 = vadd.f32 0.0, %v2675
    %v2677 = vpop.f32.mrf.mxu0
    %v2678 = vadd.f32 0.0, %v2677
    %2679 = vmatprep.mubr.bf16.mxu0 0
    %2680 = vmatmul.mubr.bf16.gmra.mxu0 %v2551
    %v2681 = vpop.f32.mrf.mxu0
    %v2682 = vadd.f32 0.0, %v2681
    %v2683 = vpop.f32.mrf.mxu0
    %v2684 = vadd.f32 0.0, %v2683
    %v2685 = vpop.f32.mrf.mxu0
    %v2686 = vadd.f32 0.0, %v2685
    %v2687 = vpop.f32.mrf.mxu0
    %v2688 = vadd.f32 0.0, %v2687
    %2689 = vmatprep.mubr.bf16.mxu0 0
    %2690 = vmatmul.mubr.bf16.gmra.mxu0 %v2554
    %v2691 = vpop.f32.mrf.mxu0
    %v2692 = vadd.f32 0.0, %v2691
    %v2693 = vpop.f32.mrf.mxu0
    %v2694 = vadd.f32 0.0, %v2693
    %v2695 = vpop.f32.mrf.mxu0
    %v2696 = vadd.f32 0.0, %v2695
    %v2697 = vpop.f32.mrf.mxu0
    %v2698 = vadd.f32 0.0, %v2697
    %2699 = vmatprep.mubr.bf16.mxu0 0
    %2700 = vmatmul.mubr.bf16.gmra.mxu0 %v2557
    %v2701 = vpop.f32.mrf.mxu0
    %v2702 = vadd.f32 0.0, %v2701
    %v2703 = vpop.f32.mrf.mxu0
    %v2704 = vadd.f32 0.0, %v2703
    %v2705 = vpop.f32.mrf.mxu0
    %v2706 = vadd.f32 0.0, %v2705
    %v2707 = vpop.f32.mrf.mxu0
    %v2708 = vadd.f32 0.0, %v2707
    %2709 = vmatprep.mubr.bf16.mxu0 0
    %2710 = vmatmul.mubr.bf16.gmra.mxu0 %v2560
    %v2711 = vpop.f32.mrf.mxu0
    %v2712 = vadd.f32 0.0, %v2711
    %v2713 = vpop.f32.mrf.mxu0
    %v2714 = vadd.f32 0.0, %v2713
    %v2715 = vpop.f32.mrf.mxu0
    %v2716 = vadd.f32 0.0, %v2715
    %v2717 = vpop.f32.mrf.mxu0
    %v2718 = vadd.f32 0.0, %v2717
    %2719 = vmatprep.mubr.bf16.mxu0 0
    %2720 = vmatmul.mubr.bf16.gmra.mxu0 %v2563
    %v2721 = vpop.f32.mrf.mxu0
    %v2722 = vadd.f32 0.0, %v2721
    %v2723 = vpop.f32.mrf.mxu0
    %v2724 = vadd.f32 0.0, %v2723
    %v2725 = vpop.f32.mrf.mxu0
    %v2726 = vadd.f32 0.0, %v2725
    %v2727 = vpop.f32.mrf.mxu0
    %v2728 = vadd.f32 0.0, %v2727
    %2729 = vmatprep.mubr.bf16.mxu0 0
    %2730 = vmatmul.mubr.bf16.gmra.mxu0 %v2566
    %v2731 = vpop.f32.mrf.mxu0
    %v2732 = vadd.f32 0.0, %v2731
    %v2733 = vpop.f32.mrf.mxu0
    %v2734 = vadd.f32 0.0, %v2733
    %v2735 = vpop.f32.mrf.mxu0
    %v2736 = vadd.f32 0.0, %v2735
    %v2737 = vpop.f32.mrf.mxu0
    %v2738 = vadd.f32 0.0, %v2737
    %2739 = vmatprep.mubr.bf16.mxu0 0
    %2740 = vmatmul.mubr.bf16.gmra.mxu0 %v2569
    %v2741 = vpop.f32.mrf.mxu0
    %v2742 = vadd.f32 0.0, %v2741
    %v2743 = vpop.f32.mrf.mxu0
    %v2744 = vadd.f32 0.0, %v2743
    %v2745 = vpop.f32.mrf.mxu0
    %v2746 = vadd.f32 0.0, %v2745
    %v2747 = vpop.f32.mrf.mxu0
    %v2748 = vadd.f32 0.0, %v2747
    %2749 = vmatprep.mubr.bf16.mxu0 0
    %2750 = vmatmul.mubr.bf16.gmra.mxu0 %v2572
    %v2751 = vpop.f32.mrf.mxu0
    %v2752 = vadd.f32 0.0, %v2751
    %v2753 = vpop.f32.mrf.mxu0
    %v2754 = vadd.f32 0.0, %v2753
    %v2755 = vpop.f32.mrf.mxu0
    %v2756 = vadd.f32 0.0, %v2755
    %v2757 = vpop.f32.mrf.mxu0
    %v2758 = vadd.f32 0.0, %v2757
    %2759 = vmatprep.mubr.bf16.mxu0 0
    %2760 = vmatmul.mubr.bf16.gmra.mxu0 %v2575
    %v2761 = vpop.f32.mrf.mxu0
    %v2762 = vadd.f32 0.0, %v2761
    %v2763 = vpop.f32.mrf.mxu0
    %v2764 = vadd.f32 0.0, %v2763
    %v2765 = vpop.f32.mrf.mxu0
    %v2766 = vadd.f32 0.0, %v2765
    %v2767 = vpop.f32.mrf.mxu0
    %v2768 = vadd.f32 0.0, %v2767
    %2769 = vdwg.mxu0
    %2770 = vmatprep.subr.bf16.mxu0 0
    %2771 = vmatpush1.bf16.msra.mxu0 0
    %2772 = vmatprep.subr.bf16.mxu0 0
    %2773 = vmatpush1.bf16.msra.mxu0 0
    %2774 = vmatprep.subr.bf16.mxu0 0
    %2775 = vmatpush1.bf16.msra.mxu0 0
    %2776 = vmatprep.subr.bf16.mxu0 0
    %2777 = vmatpush1.bf16.msra.mxu0 0
    %2778 = vmatprep.subr.bf16.mxu0 0
    %2779 = vmatpush1.bf16.msra.mxu0 0
    %2780 = vmatprep.subr.bf16.mxu0 0
    %2781 = vmatpush1.bf16.msra.mxu0 0
    %2782 = vmatprep.subr.bf16.mxu0 0
    %2783 = vmatpush1.bf16.msra.mxu0 0
    %2784 = vmatprep.subr.bf16.mxu0 0
    %2785 = vmatpush1.bf16.msra.mxu0 %v2525
    %2786 = vmatprep.subr.bf16.mxu0 0
    %2787 = vmatpush2.bf16.msra.mxu0 0
    %2788 = vmatprep.subr.bf16.mxu0 0
    %2789 = vmatpush2.bf16.msra.mxu0 0
    %2790 = vmatprep.subr.bf16.mxu0 0
    %2791 = vmatpush2.bf16.msra.mxu0 0
    %2792 = vmatprep.subr.bf16.mxu0 0
    %2793 = vmatpush2.bf16.msra.mxu0 0
    %2794 = vmatprep.subr.bf16.mxu0 0
    %2795 = vmatpush2.bf16.msra.mxu0 0
    %2796 = vmatprep.subr.bf16.mxu0 0
    %2797 = vmatpush2.bf16.msra.mxu0 0
    %2798 = vmatprep.subr.bf16.mxu0 0
    %2799 = vmatpush2.bf16.msra.mxu0 0
    %2800 = vmatprep.subr.bf16.mxu0 0
    %2801 = vmatpush2.bf16.msra.mxu0 0
    %2802 = vmatprep.mubr.bf16.mxu0 0
    %2803 = vmatmul.mubr.bf16.gmra.mxu0 %v2530
    %v2804 = vpop.f32.mrf.mxu0
    %v2805 = vadd.f32 0.0, %v2804
    %v2806 = vpop.f32.mrf.mxu0
    %v2807 = vpop.f32.mrf.mxu0
    %v2808 = vadd.f32 0.0, %v2807
    %v2809 = vpop.f32.mrf.mxu0
    %2810 = vmatprep.mubr.bf16.mxu0 0
    %2811 = vmatmul.mubr.bf16.gmra.mxu0 %v2533
    %v2812 = vpop.f32.mrf.mxu0
    %v2813 = vadd.f32 0.0, %v2812
    %v2814 = vpop.f32.mrf.mxu0
    %v2815 = vpop.f32.mrf.mxu0
    %v2816 = vadd.f32 0.0, %v2815
    %v2817 = vpop.f32.mrf.mxu0
    %2818 = vmatprep.mubr.bf16.mxu0 0
    %2819 = vmatmul.mubr.bf16.gmra.mxu0 %v2536
    %v2820 = vpop.f32.mrf.mxu0
    %v2821 = vadd.f32 0.0, %v2820
    %v2822 = vpop.f32.mrf.mxu0
    %v2823 = vpop.f32.mrf.mxu0
    %v2824 = vadd.f32 0.0, %v2823
    %v2825 = vpop.f32.mrf.mxu0
    %2826 = vmatprep.mubr.bf16.mxu0 0
    %2827 = vmatmul.mubr.bf16.gmra.mxu0 %v2539
    %v2828 = vpop.f32.mrf.mxu0
    %v2829 = vadd.f32 0.0, %v2828
    %v2830 = vpop.f32.mrf.mxu0
    %v2831 = vpop.f32.mrf.mxu0
    %v2832 = vadd.f32 0.0, %v2831
    %v2833 = vpop.f32.mrf.mxu0
    %2834 = vmatprep.mubr.bf16.mxu0 0
    %2835 = vmatmul.mubr.bf16.gmra.mxu0 %v2542
    %v2836 = vpop.f32.mrf.mxu0
    %v2837 = vadd.f32 0.0, %v2836
    %v2838 = vpop.f32.mrf.mxu0
    %v2839 = vpop.f32.mrf.mxu0
    %v2840 = vadd.f32 0.0, %v2839
    %v2841 = vpop.f32.mrf.mxu0
    %2842 = vmatprep.mubr.bf16.mxu0 0
    %2843 = vmatmul.mubr.bf16.gmra.mxu0 %v2545
    %v2844 = vpop.f32.mrf.mxu0
    %v2845 = vadd.f32 0.0, %v2844
    %v2846 = vpop.f32.mrf.mxu0
    %v2847 = vpop.f32.mrf.mxu0
    %v2848 = vadd.f32 0.0, %v2847
    %v2849 = vpop.f32.mrf.mxu0
    %2850 = vmatprep.mubr.bf16.mxu0 0
    %2851 = vmatmul.mubr.bf16.gmra.mxu0 %v2548
    %v2852 = vpop.f32.mrf.mxu0
    %v2853 = vadd.f32 0.0, %v2852
    %v2854 = vpop.f32.mrf.mxu0
    %v2855 = vpop.f32.mrf.mxu0
    %v2856 = vadd.f32 0.0, %v2855
    %v2857 = vpop.f32.mrf.mxu0
    %2858 = vmatprep.mubr.bf16.mxu0 0
    %2859 = vmatmul.mubr.bf16.gmra.mxu0 %v2551
    %v2860 = vpop.f32.mrf.mxu0
    %v2861 = vadd.f32 0.0, %v2860
    %v2862 = vpop.f32.mrf.mxu0
    %v2863 = vpop.f32.mrf.mxu0
    %v2864 = vadd.f32 0.0, %v2863
    %v2865 = vpop.f32.mrf.mxu0
    %2866 = vmatprep.mubr.bf16.mxu0 0
    %2867 = vmatmul.mubr.bf16.gmra.mxu0 %v2554
    %v2868 = vpop.f32.mrf.mxu0
    %v2869 = vadd.f32 0.0, %v2868
    %v2870 = vpop.f32.mrf.mxu0
    %v2871 = vpop.f32.mrf.mxu0
    %v2872 = vadd.f32 0.0, %v2871
    %v2873 = vpop.f32.mrf.mxu0
    %2874 = vmatprep.mubr.bf16.mxu0 0
    %2875 = vmatmul.mubr.bf16.gmra.mxu0 %v2557
    %v2876 = vpop.f32.mrf.mxu0
    %v2877 = vadd.f32 0.0, %v2876
    %v2878 = vpop.f32.mrf.mxu0
    %v2879 = vpop.f32.mrf.mxu0
    %v2880 = vadd.f32 0.0, %v2879
    %v2881 = vpop.f32.mrf.mxu0
    %2882 = vmatprep.mubr.bf16.mxu0 0
    %2883 = vmatmul.mubr.bf16.gmra.mxu0 %v2560
    %v2884 = vpop.f32.mrf.mxu0
    %v2885 = vadd.f32 0.0, %v2884
    %v2886 = vpop.f32.mrf.mxu0
    %v2887 = vpop.f32.mrf.mxu0
    %v2888 = vadd.f32 0.0, %v2887
    %v2889 = vpop.f32.mrf.mxu0
    %2890 = vmatprep.mubr.bf16.mxu0 0
    %2891 = vmatmul.mubr.bf16.gmra.mxu0 %v2563
    %v2892 = vpop.f32.mrf.mxu0
    %v2893 = vadd.f32 0.0, %v2892
    %v2894 = vpop.f32.mrf.mxu0
    %v2895 = vpop.f32.mrf.mxu0
    %v2896 = vadd.f32 0.0, %v2895
    %v2897 = vpop.f32.mrf.mxu0
    %2898 = vmatprep.mubr.bf16.mxu0 0
    %2899 = vmatmul.mubr.bf16.gmra.mxu0 %v2566
    %v2900 = vpop.f32.mrf.mxu0
    %v2901 = vadd.f32 0.0, %v2900
    %v2902 = vpop.f32.mrf.mxu0
    %v2903 = vpop.f32.mrf.mxu0
    %v2904 = vadd.f32 0.0, %v2903
    %v2905 = vpop.f32.mrf.mxu0
    %2906 = vmatprep.mubr.bf16.mxu0 0
    %2907 = vmatmul.mubr.bf16.gmra.mxu0 %v2569
    %v2908 = vpop.f32.mrf.mxu0
    %v2909 = vadd.f32 0.0, %v2908
    %v2910 = vpop.f32.mrf.mxu0
    %v2911 = vpop.f32.mrf.mxu0
    %v2912 = vadd.f32 0.0, %v2911
    %v2913 = vpop.f32.mrf.mxu0
    %2914 = vmatprep.mubr.bf16.mxu0 0
    %2915 = vmatmul.mubr.bf16.gmra.mxu0 %v2572
    %v2916 = vpop.f32.mrf.mxu0
    %v2917 = vadd.f32 0.0, %v2916
    %v2918 = vpop.f32.mrf.mxu0
    %v2919 = vpop.f32.mrf.mxu0
    %v2920 = vadd.f32 0.0, %v2919
    %v2921 = vpop.f32.mrf.mxu0
    %2922 = vmatprep.mubr.bf16.mxu0 0
    %2923 = vmatmul.mubr.bf16.gmra.mxu0 %v2575
    %v2924 = vpop.f32.mrf.mxu0
    %v2925 = vadd.f32 0.0, %v2924
    %v2926 = vpop.f32.mrf.mxu0
    %v2927 = vpop.f32.mrf.mxu0
    %v2928 = vadd.f32 0.0, %v2927
    %v2929 = vpop.f32.mrf.mxu0
    %2930 = vdwg.mxu0
    %v2931 = vadd.f32 %v2299, %v2612
    %v2932 = vadd.f32 %v2300, %v2614
    %v2933 = vadd.f32 %v2301, %v2805
    %v2934 = vadd.f32 %v2302, %v2616
    %v2935 = vadd.f32 %v2303, %v2618
    %v2936 = vadd.f32 %v2304, %v2808
    %v2937 = vadd.f32 %v2305, %v2622
    %v2938 = vadd.f32 %v2306, %v2624
    %v2939 = vadd.f32 %v2307, %v2813
    %v2940 = vadd.f32 %v2308, %v2626
    %v2941 = vadd.f32 %v2309, %v2628
    %v2942 = vadd.f32 %v2310, %v2816
    %v2943 = vadd.f32 %v2311, %v2632
    %v2944 = vadd.f32 %v2312, %v2634
    %v2945 = vadd.f32 %v2313, %v2821
    %v2946 = vadd.f32 %v2314, %v2636
    %v2947 = vadd.f32 %v2315, %v2638
    %v2948 = vadd.f32 %v2316, %v2824
    %v2949 = vadd.f32 %v2317, %v2642
    %v2950 = vadd.f32 %v2318, %v2644
    %v2951 = vadd.f32 %v2319, %v2829
    %v2952 = vadd.f32 %v2320, %v2646
    %v2953 = vadd.f32 %v2321, %v2648
    %v2954 = vadd.f32 %v2322, %v2832
    %v2955 = vadd.f32 %v2323, %v2652
    %v2956 = vadd.f32 %v2324, %v2654
    %v2957 = vadd.f32 %v2325, %v2837
    %v2958 = vadd.f32 %v2326, %v2656
    %v2959 = vadd.f32 %v2327, %v2658
    %v2960 = vadd.f32 %v2328, %v2840
    %v2961 = vadd.f32 %v2329, %v2662
    %v2962 = vadd.f32 %v2330, %v2664
    %v2963 = vadd.f32 %v2331, %v2845
    %v2964 = vadd.f32 %v2332, %v2666
    %v2965 = vadd.f32 %v2333, %v2668
    %v2966 = vadd.f32 %v2334, %v2848
    %v2967 = vadd.f32 %v2335, %v2672
    %v2968 = vadd.f32 %v2336, %v2674
    %v2969 = vadd.f32 %v2337, %v2853
    %v2970 = vadd.f32 %v2338, %v2676
    %v2971 = vadd.f32 %v2339, %v2678
    %v2972 = vadd.f32 %v2340, %v2856
    %v2973 = vadd.f32 %v2341, %v2682
    %v2974 = vadd.f32 %v2342, %v2684
    %v2975 = vadd.f32 %v2343, %v2861
    %v2976 = vadd.f32 %v2344, %v2686
    %v2977 = vadd.f32 %v2345, %v2688
    %v2978 = vadd.f32 %v2346, %v2864
    %v2979 = vadd.f32 %v2347, %v2692
    %v2980 = vadd.f32 %v2348, %v2694
    %v2981 = vadd.f32 %v2349, %v2869
    %v2982 = vadd.f32 %v2350, %v2696
    %v2983 = vadd.f32 %v2351, %v2698
    %v2984 = vadd.f32 %v2352, %v2872
    %v2985 = vadd.f32 %v2353, %v2702
    %v2986 = vadd.f32 %v2354, %v2704
    %v2987 = vadd.f32 %v2355, %v2877
    %v2988 = vadd.f32 %v2356, %v2706
    %v2989 = vadd.f32 %v2357, %v2708
    %v2990 = vadd.f32 %v2358, %v2880
    %v2991 = vadd.f32 %v2359, %v2712
    %v2992 = vadd.f32 %v2360, %v2714
    %v2993 = vadd.f32 %v2361, %v2885
    %v2994 = vadd.f32 %v2362, %v2716
    %v2995 = vadd.f32 %v2363, %v2718
    %v2996 = vadd.f32 %v2364, %v2888
    %v2997 = vadd.f32 %v2365, %v2722
    %v2998 = vadd.f32 %v2366, %v2724
    %v2999 = vadd.f32 %v2367, %v2893
    %v3000 = vadd.f32 %v2368, %v2726
    %v3001 = vadd.f32 %v2369, %v2728
    %v3002 = vadd.f32 %v2370, %v2896
    %v3003 = vadd.f32 %v2371, %v2732
    %v3004 = vadd.f32 %v2372, %v2734
    %v3005 = vadd.f32 %v2373, %v2901
    %v3006 = vadd.f32 %v2374, %v2736
    %v3007 = vadd.f32 %v2375, %v2738
    %v3008 = vadd.f32 %v2376, %v2904
    %v3009 = vadd.f32 %v2377, %v2742
    %v3010 = vadd.f32 %v2378, %v2744
    %v3011 = vadd.f32 %v2379, %v2909
    %v3012 = vadd.f32 %v2380, %v2746
    %v3013 = vadd.f32 %v2381, %v2748
    %v3014 = vadd.f32 %v2382, %v2912
    %v3015 = vadd.f32 %v2383, %v2752
    %v3016 = vadd.f32 %v2384, %v2754
    %v3017 = vadd.f32 %v2385, %v2917
    %v3018 = vadd.f32 %v2386, %v2756
    %v3019 = vadd.f32 %v2387, %v2758
    %v3020 = vadd.f32 %v2388, %v2920
    %v3021 = vadd.f32 %v2389, %v2762
    %v3022 = vadd.f32 %v2390, %v2764
    %v3023 = vadd.f32 %v2391, %v2925
    %v3024 = vadd.f32 %v2392, %v2766
    %v3025 = vadd.f32 %v2393, %v2768
    %v3026 = vadd.f32 %v2394, %v2928
    %v3028 = vlaneseq
    %v3029 = vshrl.u32 %v3028, 7
    %v3030 = vsub.s32 0, %v3029
    %v3031 = vrot.slane %v59, %v3030
    %v3032 = vlaneseq
    %v3033 = vshrl.u32 %v3032, 7
    %v3034 = vsub.s32 1, %v3033
    %v3035 = vrot.slane %v59, %v3034
    %v3036 = vlaneseq
    %v3037 = vshrl.u32 %v3036, 7
    %v3038 = vsub.s32 2, %v3037
    %v3039 = vrot.slane %v59, %v3038
    %v3043 = vadd.f32 %v2931, %v3031
    %v3044 = vadd.f32 %v2932, %v3035
    %v3045 = vadd.f32 %v2933, %v3039
    %v3046 = vadd.f32 %v2934, %v3031
    %v3047 = vadd.f32 %v2935, %v3035
    %v3048 = vadd.f32 %v2936, %v3039
    %v3049 = vadd.f32 %v2937, %v3031
    %v3050 = vadd.f32 %v2938, %v3035
    %v3051 = vadd.f32 %v2939, %v3039
    %v3052 = vadd.f32 %v2940, %v3031
    %v3053 = vadd.f32 %v2941, %v3035
    %v3054 = vadd.f32 %v2942, %v3039
    %v3055 = vadd.f32 %v2943, %v3031
    %v3056 = vadd.f32 %v2944, %v3035
    %v3057 = vadd.f32 %v2945, %v3039
    %v3058 = vadd.f32 %v2946, %v3031
    %v3059 = vadd.f32 %v2947, %v3035
    %v3060 = vadd.f32 %v2948, %v3039
    %v3061 = vadd.f32 %v2949, %v3031
    %v3062 = vadd.f32 %v2950, %v3035
    %v3063 = vadd.f32 %v2951, %v3039
    %v3064 = vadd.f32 %v2952, %v3031
    %v3065 = vadd.f32 %v2953, %v3035
    %v3066 = vadd.f32 %v2954, %v3039
    %v3067 = vadd.f32 %v2955, %v3031
    %v3068 = vadd.f32 %v2956, %v3035
    %v3069 = vadd.f32 %v2957, %v3039
    %v3070 = vadd.f32 %v2958, %v3031
    %v3071 = vadd.f32 %v2959, %v3035
    %v3072 = vadd.f32 %v2960, %v3039
    %v3073 = vadd.f32 %v2961, %v3031
    %v3074 = vadd.f32 %v2962, %v3035
    %v3075 = vadd.f32 %v2963, %v3039
    %v3076 = vadd.f32 %v2964, %v3031
    %v3077 = vadd.f32 %v2965, %v3035
    %v3078 = vadd.f32 %v2966, %v3039
    %v3079 = vadd.f32 %v2967, %v3031
    %v3080 = vadd.f32 %v2968, %v3035
    %v3081 = vadd.f32 %v2969, %v3039
    %v3082 = vadd.f32 %v2970, %v3031
    %v3083 = vadd.f32 %v2971, %v3035
    %v3084 = vadd.f32 %v2972, %v3039
    %v3085 = vadd.f32 %v2973, %v3031
    %v3086 = vadd.f32 %v2974, %v3035
    %v3087 = vadd.f32 %v2975, %v3039
    %v3088 = vadd.f32 %v2976, %v3031
    %v3089 = vadd.f32 %v2977, %v3035
    %v3090 = vadd.f32 %v2978, %v3039
    %v3091 = vadd.f32 %v2979, %v3031
    %v3092 = vadd.f32 %v2980, %v3035
    %v3093 = vadd.f32 %v2981, %v3039
    %v3094 = vadd.f32 %v2982, %v3031
    %v3095 = vadd.f32 %v2983, %v3035
    %v3096 = vadd.f32 %v2984, %v3039
    %v3097 = vadd.f32 %v2985, %v3031
    %v3098 = vadd.f32 %v2986, %v3035
    %v3099 = vadd.f32 %v2987, %v3039
    %v3100 = vadd.f32 %v2988, %v3031
    %v3101 = vadd.f32 %v2989, %v3035
    %v3102 = vadd.f32 %v2990, %v3039
    %v3103 = vadd.f32 %v2991, %v3031
    %v3104 = vadd.f32 %v2992, %v3035
    %v3105 = vadd.f32 %v2993, %v3039
    %v3106 = vadd.f32 %v2994, %v3031
    %v3107 = vadd.f32 %v2995, %v3035
    %v3108 = vadd.f32 %v2996, %v3039
    %v3109 = vadd.f32 %v2997, %v3031
    %v3110 = vadd.f32 %v2998, %v3035
    %v3111 = vadd.f32 %v2999, %v3039
    %v3112 = vadd.f32 %v3000, %v3031
    %v3113 = vadd.f32 %v3001, %v3035
    %v3114 = vadd.f32 %v3002, %v3039
    %v3115 = vadd.f32 %v3003, %v3031
    %v3116 = vadd.f32 %v3004, %v3035
    %v3117 = vadd.f32 %v3005, %v3039
    %v3118 = vadd.f32 %v3006, %v3031
    %v3119 = vadd.f32 %v3007, %v3035
    %v3120 = vadd.f32 %v3008, %v3039
    %v3121 = vadd.f32 %v3009, %v3031
    %v3122 = vadd.f32 %v3010, %v3035
    %v3123 = vadd.f32 %v3011, %v3039
    %v3124 = vadd.f32 %v3012, %v3031
    %v3125 = vadd.f32 %v3013, %v3035
    %v3126 = vadd.f32 %v3014, %v3039
    %v3127 = vadd.f32 %v3015, %v3031
    %v3128 = vadd.f32 %v3016, %v3035
    %v3129 = vadd.f32 %v3017, %v3039
    %v3130 = vadd.f32 %v3018, %v3031
    %v3131 = vadd.f32 %v3019, %v3035
    %v3132 = vadd.f32 %v3020, %v3039
    %v3133 = vadd.f32 %v3021, %v3031
    %v3134 = vadd.f32 %v3022, %v3035
    %v3135 = vadd.f32 %v3023, %v3039
    %v3136 = vadd.f32 %v3024, %v3031
    %v3137 = vadd.f32 %v3025, %v3035
    %v3138 = vadd.f32 %v3026, %v3039
    %v3139 = vmax.f32 %v3043, 0.0
    %v3140 = vmax.f32 %v3044, 0.0
    %v3141 = vmax.f32 %v3045, 0.0
    %v3142 = vmax.f32 %v3046, 0.0
    %v3143 = vmax.f32 %v3047, 0.0
    %v3144 = vmax.f32 %v3048, 0.0
    %v3145 = vmax.f32 %v3049, 0.0
    %v3146 = vmax.f32 %v3050, 0.0
    %v3147 = vmax.f32 %v3051, 0.0
    %v3148 = vmax.f32 %v3052, 0.0
    %v3149 = vmax.f32 %v3053, 0.0
    %v3150 = vmax.f32 %v3054, 0.0
    %v3151 = vmax.f32 %v3055, 0.0
    %v3152 = vmax.f32 %v3056, 0.0
    %v3153 = vmax.f32 %v3057, 0.0
    %v3154 = vmax.f32 %v3058, 0.0
    %v3155 = vmax.f32 %v3059, 0.0
    %v3156 = vmax.f32 %v3060, 0.0
    %v3157 = vmax.f32 %v3061, 0.0
    %v3158 = vmax.f32 %v3062, 0.0
    %v3159 = vmax.f32 %v3063, 0.0
    %v3160 = vmax.f32 %v3064, 0.0
    %v3161 = vmax.f32 %v3065, 0.0
    %v3162 = vmax.f32 %v3066, 0.0
    %v3163 = vmax.f32 %v3067, 0.0
    %v3164 = vmax.f32 %v3068, 0.0
    %v3165 = vmax.f32 %v3069, 0.0
    %v3166 = vmax.f32 %v3070, 0.0
    %v3167 = vmax.f32 %v3071, 0.0
    %v3168 = vmax.f32 %v3072, 0.0
    %v3169 = vmax.f32 %v3073, 0.0
    %v3170 = vmax.f32 %v3074, 0.0
    %v3171 = vmax.f32 %v3075, 0.0
    %v3172 = vmax.f32 %v3076, 0.0
    %v3173 = vmax.f32 %v3077, 0.0
    %v3174 = vmax.f32 %v3078, 0.0
    %v3175 = vmax.f32 %v3079, 0.0
    %v3176 = vmax.f32 %v3080, 0.0
    %v3177 = vmax.f32 %v3081, 0.0
    %v3178 = vmax.f32 %v3082, 0.0
    %v3179 = vmax.f32 %v3083, 0.0
    %v3180 = vmax.f32 %v3084, 0.0
    %v3181 = vmax.f32 %v3085, 0.0
    %v3182 = vmax.f32 %v3086, 0.0
    %v3183 = vmax.f32 %v3087, 0.0
    %v3184 = vmax.f32 %v3088, 0.0
    %v3185 = vmax.f32 %v3089, 0.0
    %v3186 = vmax.f32 %v3090, 0.0
    %v3187 = vmax.f32 %v3091, 0.0
    %v3188 = vmax.f32 %v3092, 0.0
    %v3189 = vmax.f32 %v3093, 0.0
    %v3190 = vmax.f32 %v3094, 0.0
    %v3191 = vmax.f32 %v3095, 0.0
    %v3192 = vmax.f32 %v3096, 0.0
    %v3193 = vmax.f32 %v3097, 0.0
    %v3194 = vmax.f32 %v3098, 0.0
    %v3195 = vmax.f32 %v3099, 0.0
    %v3196 = vmax.f32 %v3100, 0.0
    %v3197 = vmax.f32 %v3101, 0.0
    %v3198 = vmax.f32 %v3102, 0.0
    %v3199 = vmax.f32 %v3103, 0.0
    %v3200 = vmax.f32 %v3104, 0.0
    %v3201 = vmax.f32 %v3105, 0.0
    %v3202 = vmax.f32 %v3106, 0.0
    %v3203 = vmax.f32 %v3107, 0.0
    %v3204 = vmax.f32 %v3108, 0.0
    %v3205 = vmax.f32 %v3109, 0.0
    %v3206 = vmax.f32 %v3110, 0.0
    %v3207 = vmax.f32 %v3111, 0.0
    %v3208 = vmax.f32 %v3112, 0.0
    %v3209 = vmax.f32 %v3113, 0.0
    %v3210 = vmax.f32 %v3114, 0.0
    %v3211 = vmax.f32 %v3115, 0.0
    %v3212 = vmax.f32 %v3116, 0.0
    %v3213 = vmax.f32 %v3117, 0.0
    %v3214 = vmax.f32 %v3118, 0.0
    %v3215 = vmax.f32 %v3119, 0.0
    %v3216 = vmax.f32 %v3120, 0.0
    %v3217 = vmax.f32 %v3121, 0.0
    %v3218 = vmax.f32 %v3122, 0.0
    %v3219 = vmax.f32 %v3123, 0.0
    %v3220 = vmax.f32 %v3124, 0.0
    %v3221 = vmax.f32 %v3125, 0.0
    %v3222 = vmax.f32 %v3126, 0.0
    %v3223 = vmax.f32 %v3127, 0.0
    %v3224 = vmax.f32 %v3128, 0.0
    %v3225 = vmax.f32 %v3129, 0.0
    %v3226 = vmax.f32 %v3130, 0.0
    %v3227 = vmax.f32 %v3131, 0.0
    %v3228 = vmax.f32 %v3132, 0.0
    %v3229 = vmax.f32 %v3133, 0.0
    %v3230 = vmax.f32 %v3134, 0.0
    %v3231 = vmax.f32 %v3135, 0.0
    %v3232 = vmax.f32 %v3136, 0.0
    %v3233 = vmax.f32 %v3137, 0.0
    %v3234 = vmax.f32 %v3138, 0.0
    %v3235 = vld [vmem:[#allocation2] sm:$0x7]
    %v3236 = vld [vmem:[#allocation2 + $0x3] sm:$0x7]
    %v3237 = vld [vmem:[#allocation2 + $0x6] sm:$0x7]
    %v3238 = vld [vmem:[#allocation2 + $0x9] sm:$0x7]
    %v3239 = vld [vmem:[#allocation2 + $0xc] sm:$0x7]
    %v3240 = vld [vmem:[#allocation2 + $0xf] sm:$0x7]
    %v3241 = vld [vmem:[#allocation2 + $0x12] sm:$0x7]
    %v3242 = vld [vmem:[#allocation2 + $0x15] sm:$0x7]
    %v3243 = vld [vmem:[#allocation2 + $0x18] sm:$0x7]
    %v3244 = vld [vmem:[#allocation2 + $0x1b] sm:$0x7]
    %v3245 = vld [vmem:[#allocation2 + $0x1e] sm:$0x7]
    %v3246 = vld [vmem:[#allocation2 + $0x21] sm:$0x7]
    %v3247 = vld [vmem:[#allocation2 + $0x24] sm:$0x7]
    %v3248 = vld [vmem:[#allocation2 + $0x27] sm:$0x7]
    %v3249 = vld [vmem:[#allocation2 + $0x2a] sm:$0x7]
    %v3250 = vld [vmem:[#allocation2 + $0x2d] sm:$0x7]
    %v3267 = vlaneseq
    %v3268 = vshrl.u32 %v3267, 7
    %v3269 = vsub.s32 0, %v3268
    %v3270 = vrot.slane %v3235, %v3269
    %v3271 = vlaneseq
    %v3272 = vshrl.u32 %v3271, 7
    %v3273 = vsub.s32 1, %v3272
    %v3274 = vrot.slane %v3235, %v3273
    %v3275 = vlaneseq
    %v3276 = vshrl.u32 %v3275, 7
    %v3277 = vsub.s32 2, %v3276
    %v3278 = vrot.slane %v3235, %v3277
    %v3279 = vlaneseq
    %v3280 = vshrl.u32 %v3279, 7
    %v3281 = vsub.s32 0, %v3280
    %v3282 = vrot.slane %v3236, %v3281
    %v3283 = vlaneseq
    %v3284 = vshrl.u32 %v3283, 7
    %v3285 = vsub.s32 1, %v3284
    %v3286 = vrot.slane %v3236, %v3285
    %v3287 = vlaneseq
    %v3288 = vshrl.u32 %v3287, 7
    %v3289 = vsub.s32 2, %v3288
    %v3290 = vrot.slane %v3236, %v3289
    %v3291 = vlaneseq
    %v3292 = vshrl.u32 %v3291, 7
    %v3293 = vsub.s32 0, %v3292
    %v3294 = vrot.slane %v3237, %v3293
    %v3295 = vlaneseq
    %v3296 = vshrl.u32 %v3295, 7
    %v3297 = vsub.s32 1, %v3296
    %v3298 = vrot.slane %v3237, %v3297
    %v3299 = vlaneseq
    %v3300 = vshrl.u32 %v3299, 7
    %v3301 = vsub.s32 2, %v3300
    %v3302 = vrot.slane %v3237, %v3301
    %v3303 = vlaneseq
    %v3304 = vshrl.u32 %v3303, 7
    %v3305 = vsub.s32 0, %v3304
    %v3306 = vrot.slane %v3238, %v3305
    %v3307 = vlaneseq
    %v3308 = vshrl.u32 %v3307, 7
    %v3309 = vsub.s32 1, %v3308
    %v3310 = vrot.slane %v3238, %v3309
    %v3311 = vlaneseq
    %v3312 = vshrl.u32 %v3311, 7
    %v3313 = vsub.s32 2, %v3312
    %v3314 = vrot.slane %v3238, %v3313
    %v3315 = vlaneseq
    %v3316 = vshrl.u32 %v3315, 7
    %v3317 = vsub.s32 0, %v3316
    %v3318 = vrot.slane %v3239, %v3317
    %v3319 = vlaneseq
    %v3320 = vshrl.u32 %v3319, 7
    %v3321 = vsub.s32 1, %v3320
    %v3322 = vrot.slane %v3239, %v3321
    %v3323 = vlaneseq
    %v3324 = vshrl.u32 %v3323, 7
    %v3325 = vsub.s32 2, %v3324
    %v3326 = vrot.slane %v3239, %v3325
    %v3327 = vlaneseq
    %v3328 = vshrl.u32 %v3327, 7
    %v3329 = vsub.s32 0, %v3328
    %v3330 = vrot.slane %v3240, %v3329
    %v3331 = vlaneseq
    %v3332 = vshrl.u32 %v3331, 7
    %v3333 = vsub.s32 1, %v3332
    %v3334 = vrot.slane %v3240, %v3333
    %v3335 = vlaneseq
    %v3336 = vshrl.u32 %v3335, 7
    %v3337 = vsub.s32 2, %v3336
    %v3338 = vrot.slane %v3240, %v3337
    %v3339 = vlaneseq
    %v3340 = vshrl.u32 %v3339, 7
    %v3341 = vsub.s32 0, %v3340
    %v3342 = vrot.slane %v3241, %v3341
    %v3343 = vlaneseq
    %v3344 = vshrl.u32 %v3343, 7
    %v3345 = vsub.s32 1, %v3344
    %v3346 = vrot.slane %v3241, %v3345
    %v3347 = vlaneseq
    %v3348 = vshrl.u32 %v3347, 7
    %v3349 = vsub.s32 2, %v3348
    %v3350 = vrot.slane %v3241, %v3349
    %v3351 = vlaneseq
    %v3352 = vshrl.u32 %v3351, 7
    %v3353 = vsub.s32 0, %v3352
    %v3354 = vrot.slane %v3242, %v3353
    %v3355 = vlaneseq
    %v3356 = vshrl.u32 %v3355, 7
    %v3357 = vsub.s32 1, %v3356
    %v3358 = vrot.slane %v3242, %v3357
    %v3359 = vlaneseq
    %v3360 = vshrl.u32 %v3359, 7
    %v3361 = vsub.s32 2, %v3360
    %v3362 = vrot.slane %v3242, %v3361
    %v3363 = vlaneseq
    %v3364 = vshrl.u32 %v3363, 7
    %v3365 = vsub.s32 0, %v3364
    %v3366 = vrot.slane %v3243, %v3365
    %v3367 = vlaneseq
    %v3368 = vshrl.u32 %v3367, 7
    %v3369 = vsub.s32 1, %v3368
    %v3370 = vrot.slane %v3243, %v3369
    %v3371 = vlaneseq
    %v3372 = vshrl.u32 %v3371, 7
    %v3373 = vsub.s32 2, %v3372
    %v3374 = vrot.slane %v3243, %v3373
    %v3375 = vlaneseq
    %v3376 = vshrl.u32 %v3375, 7
    %v3377 = vsub.s32 0, %v3376
    %v3378 = vrot.slane %v3244, %v3377
    %v3379 = vlaneseq
    %v3380 = vshrl.u32 %v3379, 7
    %v3381 = vsub.s32 1, %v3380
    %v3382 = vrot.slane %v3244, %v3381
    %v3383 = vlaneseq
    %v3384 = vshrl.u32 %v3383, 7
    %v3385 = vsub.s32 2, %v3384
    %v3386 = vrot.slane %v3244, %v3385
    %v3387 = vlaneseq
    %v3388 = vshrl.u32 %v3387, 7
    %v3389 = vsub.s32 0, %v3388
    %v3390 = vrot.slane %v3245, %v3389
    %v3391 = vlaneseq
    %v3392 = vshrl.u32 %v3391, 7
    %v3393 = vsub.s32 1, %v3392
    %v3394 = vrot.slane %v3245, %v3393
    %v3395 = vlaneseq
    %v3396 = vshrl.u32 %v3395, 7
    %v3397 = vsub.s32 2, %v3396
    %v3398 = vrot.slane %v3245, %v3397
    %v3399 = vlaneseq
    %v3400 = vshrl.u32 %v3399, 7
    %v3401 = vsub.s32 0, %v3400
    %v3402 = vrot.slane %v3246, %v3401
    %v3403 = vlaneseq
    %v3404 = vshrl.u32 %v3403, 7
    %v3405 = vsub.s32 1, %v3404
    %v3406 = vrot.slane %v3246, %v3405
    %v3407 = vlaneseq
    %v3408 = vshrl.u32 %v3407, 7
    %v3409 = vsub.s32 2, %v3408
    %v3410 = vrot.slane %v3246, %v3409
    %v3411 = vlaneseq
    %v3412 = vshrl.u32 %v3411, 7
    %v3413 = vsub.s32 0, %v3412
    %v3414 = vrot.slane %v3247, %v3413
    %v3415 = vlaneseq
    %v3416 = vshrl.u32 %v3415, 7
    %v3417 = vsub.s32 1, %v3416
    %v3418 = vrot.slane %v3247, %v3417
    %v3419 = vlaneseq
    %v3420 = vshrl.u32 %v3419, 7
    %v3421 = vsub.s32 2, %v3420
    %v3422 = vrot.slane %v3247, %v3421
    %v3423 = vlaneseq
    %v3424 = vshrl.u32 %v3423, 7
    %v3425 = vsub.s32 0, %v3424
    %v3426 = vrot.slane %v3248, %v3425
    %v3427 = vlaneseq
    %v3428 = vshrl.u32 %v3427, 7
    %v3429 = vsub.s32 1, %v3428
    %v3430 = vrot.slane %v3248, %v3429
    %v3431 = vlaneseq
    %v3432 = vshrl.u32 %v3431, 7
    %v3433 = vsub.s32 2, %v3432
    %v3434 = vrot.slane %v3248, %v3433
    %v3435 = vlaneseq
    %v3436 = vshrl.u32 %v3435, 7
    %v3437 = vsub.s32 0, %v3436
    %v3438 = vrot.slane %v3249, %v3437
    %v3439 = vlaneseq
    %v3440 = vshrl.u32 %v3439, 7
    %v3441 = vsub.s32 1, %v3440
    %v3442 = vrot.slane %v3249, %v3441
    %v3443 = vlaneseq
    %v3444 = vshrl.u32 %v3443, 7
    %v3445 = vsub.s32 2, %v3444
    %v3446 = vrot.slane %v3249, %v3445
    %v3447 = vlaneseq
    %v3448 = vshrl.u32 %v3447, 7
    %v3449 = vsub.s32 0, %v3448
    %v3450 = vrot.slane %v3250, %v3449
    %v3451 = vlaneseq
    %v3452 = vshrl.u32 %v3451, 7
    %v3453 = vsub.s32 1, %v3452
    %v3454 = vrot.slane %v3250, %v3453
    %v3455 = vlaneseq
    %v3456 = vshrl.u32 %v3455, 7
    %v3457 = vsub.s32 2, %v3456
    %v3458 = vrot.slane %v3250, %v3457
    %v3507 = vmul.f32 %v3139, %v3270
    %v3508 = vmul.f32 %v3140, %v3274
    %v3509 = vmul.f32 %v3141, %v3278
    %v3510 = vmul.f32 %v3142, %v3270
    %v3511 = vmul.f32 %v3143, %v3274
    %v3512 = vmul.f32 %v3144, %v3278
    %v3513 = vmul.f32 %v3145, %v3282
    %v3514 = vmul.f32 %v3146, %v3286
    %v3515 = vmul.f32 %v3147, %v3290
    %v3516 = vmul.f32 %v3148, %v3282
    %v3517 = vmul.f32 %v3149, %v3286
    %v3518 = vmul.f32 %v3150, %v3290
    %v3519 = vmul.f32 %v3151, %v3294
    %v3520 = vmul.f32 %v3152, %v3298
    %v3521 = vmul.f32 %v3153, %v3302
    %v3522 = vmul.f32 %v3154, %v3294
    %v3523 = vmul.f32 %v3155, %v3298
    %v3524 = vmul.f32 %v3156, %v3302
    %v3525 = vmul.f32 %v3157, %v3306
    %v3526 = vmul.f32 %v3158, %v3310
    %v3527 = vmul.f32 %v3159, %v3314
    %v3528 = vmul.f32 %v3160, %v3306
    %v3529 = vmul.f32 %v3161, %v3310
    %v3530 = vmul.f32 %v3162, %v3314
    %v3531 = vmul.f32 %v3163, %v3318
    %v3532 = vmul.f32 %v3164, %v3322
    %v3533 = vmul.f32 %v3165, %v3326
    %v3534 = vmul.f32 %v3166, %v3318
    %v3535 = vmul.f32 %v3167, %v3322
    %v3536 = vmul.f32 %v3168, %v3326
    %v3537 = vmul.f32 %v3169, %v3330
    %v3538 = vmul.f32 %v3170, %v3334
    %v3539 = vmul.f32 %v3171, %v3338
    %v3540 = vmul.f32 %v3172, %v3330
    %v3541 = vmul.f32 %v3173, %v3334
    %v3542 = vmul.f32 %v3174, %v3338
    %v3543 = vmul.f32 %v3175, %v3342
    %v3544 = vmul.f32 %v3176, %v3346
    %v3545 = vmul.f32 %v3177, %v3350
    %v3546 = vmul.f32 %v3178, %v3342
    %v3547 = vmul.f32 %v3179, %v3346
    %v3548 = vmul.f32 %v3180, %v3350
    %v3549 = vmul.f32 %v3181, %v3354
    %v3550 = vmul.f32 %v3182, %v3358
    %v3551 = vmul.f32 %v3183, %v3362
    %v3552 = vmul.f32 %v3184, %v3354
    %v3553 = vmul.f32 %v3185, %v3358
    %v3554 = vmul.f32 %v3186, %v3362
    %v3555 = vmul.f32 %v3187, %v3366
    %v3556 = vmul.f32 %v3188, %v3370
    %v3557 = vmul.f32 %v3189, %v3374
    %v3558 = vmul.f32 %v3190, %v3366
    %v3559 = vmul.f32 %v3191, %v3370
    %v3560 = vmul.f32 %v3192, %v3374
    %v3561 = vmul.f32 %v3193, %v3378
    %v3562 = vmul.f32 %v3194, %v3382
    %v3563 = vmul.f32 %v3195, %v3386
    %v3564 = vmul.f32 %v3196, %v3378
    %v3565 = vmul.f32 %v3197, %v3382
    %v3566 = vmul.f32 %v3198, %v3386
    %v3567 = vmul.f32 %v3199, %v3390
    %v3568 = vmul.f32 %v3200, %v3394
    %v3569 = vmul.f32 %v3201, %v3398
    %v3570 = vmul.f32 %v3202, %v3390
    %v3571 = vmul.f32 %v3203, %v3394
    %v3572 = vmul.f32 %v3204, %v3398
    %v3573 = vmul.f32 %v3205, %v3402
    %v3574 = vmul.f32 %v3206, %v3406
    %v3575 = vmul.f32 %v3207, %v3410
    %v3576 = vmul.f32 %v3208, %v3402
    %v3577 = vmul.f32 %v3209, %v3406
    %v3578 = vmul.f32 %v3210, %v3410
    %v3579 = vmul.f32 %v3211, %v3414
    %v3580 = vmul.f32 %v3212, %v3418
    %v3581 = vmul.f32 %v3213, %v3422
    %v3582 = vmul.f32 %v3214, %v3414
    %v3583 = vmul.f32 %v3215, %v3418
    %v3584 = vmul.f32 %v3216, %v3422
    %v3585 = vmul.f32 %v3217, %v3426
    %v3586 = vmul.f32 %v3218, %v3430
    %v3587 = vmul.f32 %v3219, %v3434
    %v3588 = vmul.f32 %v3220, %v3426
    %v3589 = vmul.f32 %v3221, %v3430
    %v3590 = vmul.f32 %v3222, %v3434
    %v3591 = vmul.f32 %v3223, %v3438
    %v3592 = vmul.f32 %v3224, %v3442
    %v3593 = vmul.f32 %v3225, %v3446
    %v3594 = vmul.f32 %v3226, %v3438
    %v3595 = vmul.f32 %v3227, %v3442
    %v3596 = vmul.f32 %v3228, %v3446
    %v3597 = vmul.f32 %v3229, %v3450
    %v3598 = vmul.f32 %v3230, %v3454
    %v3599 = vmul.f32 %v3231, %v3458
    %v3600 = vmul.f32 %v3232, %v3450
    %v3601 = vmul.f32 %v3233, %v3454
    %v3602 = vmul.f32 %v3234, %v3458
    %v3603 = vmax.f32 %v3507, %v3513
    %v3604 = vmax.f32 %v3603, %v3519
    %v3605 = vmax.f32 %v3604, %v3525
    %v3606 = vmax.f32 %v3605, %v3531
    %v3607 = vmax.f32 %v3606, %v3537
    %v3608 = vmax.f32 %v3607, %v3543
    %v3609 = vmax.f32 %v3608, %v3549
    %v3610 = vmax.f32 %v3609, %v3555
    %v3611 = vmax.f32 %v3610, %v3561
    %v3612 = vmax.f32 %v3611, %v3567
    %v3613 = vmax.f32 %v3612, %v3573
    %v3614 = vmax.f32 %v3613, %v3579
    %v3615 = vmax.f32 %v3614, %v3585
    %v3616 = vmax.f32 %v3615, %v3591
    %v3617 = vmax.f32 %v3616, %v3597
    %v3618 = vmax.f32 %v3508, %v3514
    %v3619 = vmax.f32 %v3618, %v3520
    %v3620 = vmax.f32 %v3619, %v3526
    %v3621 = vmax.f32 %v3620, %v3532
    %v3622 = vmax.f32 %v3621, %v3538
    %v3623 = vmax.f32 %v3622, %v3544
    %v3624 = vmax.f32 %v3623, %v3550
    %v3625 = vmax.f32 %v3624, %v3556
    %v3626 = vmax.f32 %v3625, %v3562
    %v3627 = vmax.f32 %v3626, %v3568
    %v3628 = vmax.f32 %v3627, %v3574
    %v3629 = vmax.f32 %v3628, %v3580
    %v3630 = vmax.f32 %v3629, %v3586
    %v3631 = vmax.f32 %v3630, %v3592
    %v3632 = vmax.f32 %v3631, %v3598
    %v3633 = vmax.f32 %v3509, %v3515
    %v3634 = vmax.f32 %v3633, %v3521
    %v3635 = vmax.f32 %v3634, %v3527
    %v3636 = vmax.f32 %v3635, %v3533
    %v3637 = vmax.f32 %v3636, %v3539
    %v3638 = vmax.f32 %v3637, %v3545
    %v3639 = vmax.f32 %v3638, %v3551
    %v3640 = vmax.f32 %v3639, %v3557
    %v3641 = vmax.f32 %v3640, %v3563
    %v3642 = vmax.f32 %v3641, %v3569
    %v3643 = vmax.f32 %v3642, %v3575
    %v3644 = vmax.f32 %v3643, %v3581
    %v3645 = vmax.f32 %v3644, %v3587
    %v3646 = vmax.f32 %v3645, %v3593
    %v3647 = vmax.f32 %v3646, %v3599
    %v3648 = vmax.f32 %v3510, %v3516
    %v3649 = vmax.f32 %v3648, %v3522
    %v3650 = vmax.f32 %v3649, %v3528
    %v3651 = vmax.f32 %v3650, %v3534
    %v3652 = vmax.f32 %v3651, %v3540
    %v3653 = vmax.f32 %v3652, %v3546
    %v3654 = vmax.f32 %v3653, %v3552
    %v3655 = vmax.f32 %v3654, %v3558
    %v3656 = vmax.f32 %v3655, %v3564
    %v3657 = vmax.f32 %v3656, %v3570
    %v3658 = vmax.f32 %v3657, %v3576
    %v3659 = vmax.f32 %v3658, %v3582
    %v3660 = vmax.f32 %v3659, %v3588
    %v3661 = vmax.f32 %v3660, %v3594
    %v3662 = vmax.f32 %v3661, %v3600
    %v3663 = vmax.f32 %v3511, %v3517
    %v3664 = vmax.f32 %v3663, %v3523
    %v3665 = vmax.f32 %v3664, %v3529
    %v3666 = vmax.f32 %v3665, %v3535
    %v3667 = vmax.f32 %v3666, %v3541
    %v3668 = vmax.f32 %v3667, %v3547
    %v3669 = vmax.f32 %v3668, %v3553
    %v3670 = vmax.f32 %v3669, %v3559
    %v3671 = vmax.f32 %v3670, %v3565
    %v3672 = vmax.f32 %v3671, %v3571
    %v3673 = vmax.f32 %v3672, %v3577
    %v3674 = vmax.f32 %v3673, %v3583
    %v3675 = vmax.f32 %v3674, %v3589
    %v3676 = vmax.f32 %v3675, %v3595
    %v3677 = vmax.f32 %v3676, %v3601
    %v3678 = vmax.f32 %v3512, %v3518
    %v3679 = vmax.f32 %v3678, %v3524
    %v3680 = vmax.f32 %v3679, %v3530
    %v3681 = vmax.f32 %v3680, %v3536
    %v3682 = vmax.f32 %v3681, %v3542
    %v3683 = vmax.f32 %v3682, %v3548
    %v3684 = vmax.f32 %v3683, %v3554
    %v3685 = vmax.f32 %v3684, %v3560
    %v3686 = vmax.f32 %v3685, %v3566
    %v3687 = vmax.f32 %v3686, %v3572
    %v3688 = vmax.f32 %v3687, %v3578
    %v3689 = vmax.f32 %v3688, %v3584
    %v3690 = vmax.f32 %v3689, %v3590
    %v3691 = vmax.f32 %v3690, %v3596
    %v3692 = vmax.f32 %v3691, %v3602
    %v3693 = vmax.f32 %v3617, 0.0
    %v3694 = vmax.f32 %v3632, 0.0
    %v3695 = vmax.f32 %v3647, 0.0
    %v3696 = vmax.f32 %v3662, 0.0
    %v3697 = vmax.f32 %v3677, 0.0
    %v3698 = vmax.f32 %v3692, 0.0
    %v3699 = vld [vmem:[#allocation5] sm:$0xff]
    %v3700 = vld [vmem:[#allocation5 + $0x8] sm:$0xff]
    %v3701 = vld [vmem:[#allocation5 + $0x10] sm:$0xff]
    %v3702 = vld [vmem:[#allocation5 + $0x18] sm:$0xff]
    %v3703 = vld [vmem:[#allocation5 + $0x20] sm:$0xff]
    %v3704 = vld [vmem:[#allocation5 + $0x28] sm:$0xff]
    %v3705 = vld [vmem:[#allocation5 + $0x30] sm:$0xff]
    %v3706 = vld [vmem:[#allocation5 + $0x38] sm:$0xff]
    %v3707 = vld [vmem:[#allocation5 + $0x40] sm:$0xff]
    %v3708 = vld [vmem:[#allocation5 + $0x48] sm:$0xff]
    %v3709 = vld [vmem:[#allocation5 + $0x50] sm:$0xff]
    %v3710 = vld [vmem:[#allocation5 + $0x58] sm:$0xff]
    %v3711 = vld [vmem:[#allocation5 + $0x60] sm:$0xff]
    %v3712 = vld [vmem:[#allocation5 + $0x68] sm:$0xff]
    %v3713 = vld [vmem:[#allocation5 + $0x70] sm:$0xff]
    %v3714 = vld [vmem:[#allocation5 + $0x78] sm:$0xff]
    %v3715 = vld [vmem:[#allocation5 + $0x80] sm:$0xff]
    %v3716 = vld [vmem:[#allocation5 + $0x88] sm:$0xff]
    %v3717 = vld [vmem:[#allocation5 + $0x90] sm:$0xff]
    %v3718 = vld [vmem:[#allocation5 + $0x98] sm:$0xff]
    %v3719 = vld [vmem:[#allocation5 + $0xa0] sm:$0xff]
    %v3720 = vld [vmem:[#allocation5 + $0xa8] sm:$0xff]
    %v3721 = vld [vmem:[#allocation5 + $0xb0] sm:$0xff]
    %v3722 = vld [vmem:[#allocation5 + $0xb8] sm:$0xff]
    %v3723 = vld [vmem:[#allocation5 + $0xc0] sm:$0xff]
    %v3724 = vld [vmem:[#allocation5 + $0xc8] sm:$0xff]
    %v3725 = vld [vmem:[#allocation5 + $0xd0] sm:$0xff]
    %v3726 = vld [vmem:[#allocation5 + $0xd8] sm:$0xff]
    %v3727 = vld [vmem:[#allocation5 + $0xe0] sm:$0xff]
    %v3728 = vld [vmem:[#allocation5 + $0xe8] sm:$0xff]
    %v3729 = vld [vmem:[#allocation5 + $0xf0] sm:$0xff]
    %v3730 = vld [vmem:[#allocation5 + $0xf8] sm:$0xff]
    %v3731 = vld [vmem:[#allocation5 + $0x100] sm:$0xff]
    %v3732 = vld [vmem:[#allocation5 + $0x108] sm:$0xff]
    %v3733 = vld [vmem:[#allocation5 + $0x110] sm:$0xff]
    %v3734 = vld [vmem:[#allocation5 + $0x118] sm:$0xff]
    %v3735 = vld [vmem:[#allocation5 + $0x120] sm:$0xff]
    %v3736 = vld [vmem:[#allocation5 + $0x128] sm:$0xff]
    %v3737 = vld [vmem:[#allocation5 + $0x130] sm:$0xff]
    %v3738 = vld [vmem:[#allocation5 + $0x138] sm:$0xff]
    %v3739 = vld [vmem:[#allocation5 + $0x140] sm:$0xff]
    %v3740 = vld [vmem:[#allocation5 + $0x148] sm:$0xff]
    %v3741 = vld [vmem:[#allocation5 + $0x150] sm:$0xff]
    %v3742 = vld [vmem:[#allocation5 + $0x158] sm:$0xff]
    %v3743 = vld [vmem:[#allocation5 + $0x160] sm:$0xff]
    %v3744 = vld [vmem:[#allocation5 + $0x168] sm:$0xff]
    %v3745 = vld [vmem:[#allocation5 + $0x170] sm:$0xff]
    %v3746 = vld [vmem:[#allocation5 + $0x178] sm:$0xff]
    %v3747 = vld [vmem:[%s5] sm:$0x1]
    %v3749 = vlaneseq
    %v3750 = vshrl.u32 %v3749, 7
    %v3751 = vsub.s32 0, %v3750
    %v3752 = vrot.slane %v3747, %v3751
    %3754 = vmatprep.subr.mxu0 0.0
    %3755 = vmatpush1.msra.mxu0 %v3714
    %3756 = vmatprep.subr.mxu0 0.0
    %3757 = vmatpush1.msra.mxu0 %v3713
    %3758 = vmatprep.subr.mxu0 0.0
    %3759 = vmatpush1.msra.mxu0 %v3712
    %3760 = vmatprep.subr.mxu0 0.0
    %3761 = vmatpush1.msra.mxu0 %v3711
    %3762 = vmatprep.subr.mxu0 0.0
    %3763 = vmatpush1.msra.mxu0 %v3710
    %3764 = vmatprep.subr.mxu0 0.0
    %3765 = vmatpush1.msra.mxu0 %v3709
    %3766 = vmatprep.subr.mxu0 0.0
    %3767 = vmatpush1.msra.mxu0 %v3708
    %3768 = vmatprep.subr.mxu0 0.0
    %3769 = vmatpush1.msra.mxu0 %v3707
    %3770 = vmatprep.subr.mxu0 0.0
    %3771 = vmatpush1.msra.mxu0 %v3706
    %3772 = vmatprep.subr.mxu0 0.0
    %3773 = vmatpush1.msra.mxu0 %v3705
    %3774 = vmatprep.subr.mxu0 0.0
    %3775 = vmatpush1.msra.mxu0 %v3704
    %3776 = vmatprep.subr.mxu0 0.0
    %3777 = vmatpush1.msra.mxu0 %v3703
    %3778 = vmatprep.subr.mxu0 0.0
    %3779 = vmatpush1.msra.mxu0 %v3702
    %3780 = vmatprep.subr.mxu0 0.0
    %3781 = vmatpush1.msra.mxu0 %v3701
    %3782 = vmatprep.subr.mxu0 0.0
    %3783 = vmatpush1.msra.mxu0 %v3700
    %3784 = vmatprep.subr.mxu0 0.0
    %3785 = vmatpush1.msra.mxu0 %v3699
    %3786 = vmatprep.subr.mxu0 0.0
    %3787 = vmatpush2.msra.mxu0 %v3730
    %3788 = vmatprep.subr.mxu0 0.0
    %3789 = vmatpush2.msra.mxu0 %v3729
    %3790 = vmatprep.subr.mxu0 0.0
    %3791 = vmatpush2.msra.mxu0 %v3728
    %3792 = vmatprep.subr.mxu0 0.0
    %3793 = vmatpush2.msra.mxu0 %v3727
    %3794 = vmatprep.subr.mxu0 0.0
    %3795 = vmatpush2.msra.mxu0 %v3726
    %3796 = vmatprep.subr.mxu0 0.0
    %3797 = vmatpush2.msra.mxu0 %v3725
    %3798 = vmatprep.subr.mxu0 0.0
    %3799 = vmatpush2.msra.mxu0 %v3724
    %3800 = vmatprep.subr.mxu0 0.0
    %3801 = vmatpush2.msra.mxu0 %v3723
    %3802 = vmatprep.subr.mxu0 0.0
    %3803 = vmatpush2.msra.mxu0 %v3722
    %3804 = vmatprep.subr.mxu0 0.0
    %3805 = vmatpush2.msra.mxu0 %v3721
    %3806 = vmatprep.subr.mxu0 0.0
    %3807 = vmatpush2.msra.mxu0 %v3720
    %3808 = vmatprep.subr.mxu0 0.0
    %3809 = vmatpush2.msra.mxu0 %v3719
    %3810 = vmatprep.subr.mxu0 0.0
    %3811 = vmatpush2.msra.mxu0 %v3718
    %3812 = vmatprep.subr.mxu0 0.0
    %3813 = vmatpush2.msra.mxu0 %v3717
    %3814 = vmatprep.subr.mxu0 0.0
    %3815 = vmatpush2.msra.mxu0 %v3716
    %3816 = vmatprep.subr.mxu0 0.0
    %3817 = vmatpush2.msra.mxu0 %v3715
    %3818 = vmatprep.mubr.f32.mxu0 %v3694
    %3819 = vmatmul.mubr.f32.gmra.mxu0 %v3693
    %v3820 = vpop.f32.mrf.mxu0
    %v3821 = vadd.f32 %v3752, %v3820
    %v3822 = vpop.f32.mrf.mxu0
    %3823 = vmatprep.mubr.f32.mxu0 %v3697
    %3824 = vmatmul.mubr.f32.gmra.mxu0 %v3696
    %v3825 = vpop.f32.mrf.mxu0
    %v3826 = vadd.f32 %v3752, %v3825
    %v3827 = vpop.f32.mrf.mxu0
    %3828 = vdwg.mxu0
    %3829 = vmatprep.subr.mxu0 0.0
    %3830 = vmatpush1.msra.mxu0 %v3746
    %3831 = vmatprep.subr.mxu0 0.0
    %3832 = vmatpush1.msra.mxu0 %v3745
    %3833 = vmatprep.subr.mxu0 0.0
    %3834 = vmatpush1.msra.mxu0 %v3744
    %3835 = vmatprep.subr.mxu0 0.0
    %3836 = vmatpush1.msra.mxu0 %v3743
    %3837 = vmatprep.subr.mxu0 0.0
    %3838 = vmatpush1.msra.mxu0 %v3742
    %3839 = vmatprep.subr.mxu0 0.0
    %3840 = vmatpush1.msra.mxu0 %v3741
    %3841 = vmatprep.subr.mxu0 0.0
    %3842 = vmatpush1.msra.mxu0 %v3740
    %3843 = vmatprep.subr.mxu0 0.0
    %3844 = vmatpush1.msra.mxu0 %v3739
    %3845 = vmatprep.subr.mxu0 0.0
    %3846 = vmatpush1.msra.mxu0 %v3738
    %3847 = vmatprep.subr.mxu0 0.0
    %3848 = vmatpush1.msra.mxu0 %v3737
    %3849 = vmatprep.subr.mxu0 0.0
    %3850 = vmatpush1.msra.mxu0 %v3736
    %3851 = vmatprep.subr.mxu0 0.0
    %3852 = vmatpush1.msra.mxu0 %v3735
    %3853 = vmatprep.subr.mxu0 0.0
    %3854 = vmatpush1.msra.mxu0 %v3734
    %3855 = vmatprep.subr.mxu0 0.0
    %3856 = vmatpush1.msra.mxu0 %v3733
    %3857 = vmatprep.subr.mxu0 0.0
    %3858 = vmatpush1.msra.mxu0 %v3732
    %3859 = vmatprep.subr.mxu0 0.0
    %3860 = vmatpush1.msra.mxu0 %v3731
    %3861 = vmatprep.subr.mxu0 0.0
    %3862 = vmatpush2.msra.mxu0 0.0
    %3863 = vmatprep.subr.mxu0 0.0
    %3864 = vmatpush2.msra.mxu0 0.0
    %3865 = vmatprep.subr.mxu0 0.0
    %3866 = vmatpush2.msra.mxu0 0.0
    %3867 = vmatprep.subr.mxu0 0.0
    %3868 = vmatpush2.msra.mxu0 0.0
    %3869 = vmatprep.subr.mxu0 0.0
    %3870 = vmatpush2.msra.mxu0 0.0
    %3871 = vmatprep.subr.mxu0 0.0
    %3872 = vmatpush2.msra.mxu0 0.0
    %3873 = vmatprep.subr.mxu0 0.0
    %3874 = vmatpush2.msra.mxu0 0.0
    %3875 = vmatprep.subr.mxu0 0.0
    %3876 = vmatpush2.msra.mxu0 0.0
    %3877 = vmatprep.subr.mxu0 0.0
    %3878 = vmatpush2.msra.mxu0 0.0
    %3879 = vmatprep.subr.mxu0 0.0
    %3880 = vmatpush2.msra.mxu0 0.0
    %3881 = vmatprep.subr.mxu0 0.0
    %3882 = vmatpush2.msra.mxu0 0.0
    %3883 = vmatprep.subr.mxu0 0.0
    %3884 = vmatpush2.msra.mxu0 0.0
    %3885 = vmatprep.subr.mxu0 0.0
    %3886 = vmatpush2.msra.mxu0 0.0
    %3887 = vmatprep.subr.mxu0 0.0
    %3888 = vmatpush2.msra.mxu0 0.0
    %3889 = vmatprep.subr.mxu0 0.0
    %3890 = vmatpush2.msra.mxu0 0.0
    %3891 = vmatprep.subr.mxu0 0.0
    %3892 = vmatpush2.msra.mxu0 0.0
    %3893 = vmatprep.mubr.f32.mxu0 0.0
    %3894 = vmatmul.mubr.f32.gmra.mxu0 %v3695
    %v3895 = vpop.f32.mrf.mxu0
    %v3896 = vadd.f32 %v3821, %v3895
    %v3897 = vpop.f32.mrf.mxu0
    %3898 = vmatprep.mubr.f32.mxu0 0.0
    %3899 = vmatmul.mubr.f32.gmra.mxu0 %v3698
    %v3900 = vpop.f32.mrf.mxu0
    %v3901 = vadd.f32 %v3826, %v3900
    %v3902 = vpop.f32.mrf.mxu0
    %3903 = vdwg.mxu0
    %v3904 = vmax.f32 %v3896, 0.0
    %v3905 = vmax.f32 %v3901, 0.0
    %v3906 = vld [vmem:[%s6] sm:$0xff]
    %v3907 = vld [vmem:[%s6 + $0x8] sm:$0xff]
    %v3908 = vld [vmem:[%s6 + $0x10] sm:$0xff]
    %v3909 = vld [vmem:[%s6 + $0x18] sm:$0xff]
    %v3910 = vld [vmem:[%s6 + $0x20] sm:$0xff]
    %v3911 = vld [vmem:[%s6 + $0x28] sm:$0xff]
    %v3912 = vld [vmem:[%s6 + $0x30] sm:$0xff]
    %v3913 = vld [vmem:[%s6 + $0x38] sm:$0xff]
    %v3914 = vld [vmem:[%s6 + $0x40] sm:$0xff]
    %v3915 = vld [vmem:[%s6 + $0x48] sm:$0xff]
    %v3916 = vld [vmem:[%s6 + $0x50] sm:$0xff]
    %v3917 = vld [vmem:[%s6 + $0x58] sm:$0xff]
    %v3918 = vld [vmem:[%s6 + $0x60] sm:$0xff]
    %v3919 = vld [vmem:[%s6 + $0x68] sm:$0xff]
    %v3920 = vld [vmem:[%s6 + $0x70] sm:$0xff]
    %v3921 = vld [vmem:[%s6 + $0x78] sm:$0xff]
    %v3922 = vld [vmem:[%s7] sm:$0x1]
    %v3924 = vlaneseq
    %v3925 = vshrl.u32 %v3924, 7
    %v3926 = vsub.s32 0, %v3925
    %v3927 = vrot.slane %v3922, %v3926
    %3929 = vmatprep.subr.mxu0 0.0
    %3930 = vmatpush1.msra.mxu0 %v3921
    %3931 = vmatprep.subr.mxu0 0.0
    %3932 = vmatpush1.msra.mxu0 %v3920
    %3933 = vmatprep.subr.mxu0 0.0
    %3934 = vmatpush1.msra.mxu0 %v3919
    %3935 = vmatprep.subr.mxu0 0.0
    %3936 = vmatpush1.msra.mxu0 %v3918
    %3937 = vmatprep.subr.mxu0 0.0
    %3938 = vmatpush1.msra.mxu0 %v3917
    %3939 = vmatprep.subr.mxu0 0.0
    %3940 = vmatpush1.msra.mxu0 %v3916
    %3941 = vmatprep.subr.mxu0 0.0
    %3942 = vmatpush1.msra.mxu0 %v3915
    %3943 = vmatprep.subr.mxu0 0.0
    %3944 = vmatpush1.msra.mxu0 %v3914
    %3945 = vmatprep.subr.mxu0 0.0
    %3946 = vmatpush1.msra.mxu0 %v3913
    %3947 = vmatprep.subr.mxu0 0.0
    %3948 = vmatpush1.msra.mxu0 %v3912
    %3949 = vmatprep.subr.mxu0 0.0
    %3950 = vmatpush1.msra.mxu0 %v3911
    %3951 = vmatprep.subr.mxu0 0.0
    %3952 = vmatpush1.msra.mxu0 %v3910
    %3953 = vmatprep.subr.mxu0 0.0
    %3954 = vmatpush1.msra.mxu0 %v3909
    %3955 = vmatprep.subr.mxu0 0.0
    %3956 = vmatpush1.msra.mxu0 %v3908
    %3957 = vmatprep.subr.mxu0 0.0
    %3958 = vmatpush1.msra.mxu0 %v3907
    %3959 = vmatprep.subr.mxu0 0.0
    %3960 = vmatpush1.msra.mxu0 %v3906
    %3961 = vmatprep.subr.mxu0 0.0
    %3962 = vmatpush2.msra.mxu0 0.0
    %3963 = vmatprep.subr.mxu0 0.0
    %3964 = vmatpush2.msra.mxu0 0.0
    %3965 = vmatprep.subr.mxu0 0.0
    %3966 = vmatpush2.msra.mxu0 0.0
    %3967 = vmatprep.subr.mxu0 0.0
    %3968 = vmatpush2.msra.mxu0 0.0
    %3969 = vmatprep.subr.mxu0 0.0
    %3970 = vmatpush2.msra.mxu0 0.0
    %3971 = vmatprep.subr.mxu0 0.0
    %3972 = vmatpush2.msra.mxu0 0.0
    %3973 = vmatprep.subr.mxu0 0.0
    %3974 = vmatpush2.msra.mxu0 0.0
    %3975 = vmatprep.subr.mxu0 0.0
    %3976 = vmatpush2.msra.mxu0 0.0
    %3977 = vmatprep.subr.mxu0 0.0
    %3978 = vmatpush2.msra.mxu0 0.0
    %3979 = vmatprep.subr.mxu0 0.0
    %3980 = vmatpush2.msra.mxu0 0.0
    %3981 = vmatprep.subr.mxu0 0.0
    %3982 = vmatpush2.msra.mxu0 0.0
    %3983 = vmatprep.subr.mxu0 0.0
    %3984 = vmatpush2.msra.mxu0 0.0
    %3985 = vmatprep.subr.mxu0 0.0
    %3986 = vmatpush2.msra.mxu0 0.0
    %3987 = vmatprep.subr.mxu0 0.0
    %3988 = vmatpush2.msra.mxu0 0.0
    %3989 = vmatprep.subr.mxu0 0.0
    %3990 = vmatpush2.msra.mxu0 0.0
    %3991 = vmatprep.subr.mxu0 0.0
    %3992 = vmatpush2.msra.mxu0 0.0
    %3993 = vmatprep.mubr.f32.mxu0 0.0
    %3994 = vmatmul.mubr.f32.gmra.mxu0 %v3904
    %v3995 = vpop.f32.mrf.mxu0
    %v3996 = vadd.f32 %v3927, %v3995
    %v3997 = vpop.f32.mrf.mxu0
    %3998 = vmatprep.mubr.f32.mxu0 0.0
    %3999 = vmatmul.mubr.f32.gmra.mxu0 %v3905
    %v4000 = vpop.f32.mrf.mxu0
    %v4001 = vadd.f32 %v3927, %v4000
    %v4002 = vpop.f32.mrf.mxu0
    %4003 = vdwg.mxu0
    %4004 = vst [vmem:[#allocation7] sm:$0xff] %v3996
    %4005 = vst [vmem:[#allocation7 + $0x8] sm:$0xff] %v4001
    // Predicated region
    $region42: #{tpu_custom_call.1} parent=1 // pred_check
      _
    $region43: #{tpu_custom_call.1} parent=1 // pred_check_branch
      %4007 = sbr.rel (0) target = $region45
    $region44: #{tpu_custom_call.1} parent=1 // pred_region
      %s4009 = ssub.s32 256, 256
      %4010 = vsyncadd [#allocation4], %s4009
      %s4011 = sshll.u32 [#allocation7], 4
      %s4012 = int_to_ptr.vmem [resolvable:$true] %s4011
      %4017 = dma.vmem_to_hbm [thread:$0]  %s4012, 256, %s8, [#allocation4], 128, 128, 8
    $region45: #{tpu_custom_call.1} parent=1 // pred_fallthru
      _
    // Predicated region
    $region46: #{tpu_custom_call.1} parent=1 // pred_check
      _
    $region47: #{tpu_custom_call.1} parent=1 // pred_check_branch
      %4019 = sbr.rel (0) target = $region49
    $region48: #{tpu_custom_call.1} parent=1 // pred_region
      %4020 = dma.done [#allocation4], 256
    $region49: #{tpu_custom_call.1} parent=1 // pred_fallthru
      _
    %4021 = vsyncpa [#allocation3], 1
    %4022 = vsyncpa [#allocation6], 1
    %4023 = vsyncpa [#allocation4], 1

</llo_original>
